<compile_context>
chip_gen: v5e
topology: v5e:2x2
jax: 0.10.0
libtpu: 0.0.40
codegen_flags: <defaults>
</compile_context>

<pallas_src>
import functools

import jax
import jax.numpy as jnp
from jax.experimental import pallas as pl
from jax.experimental.pallas import tpu as pltpu


def transformer_layer_kernel(
    x_ref,                                   # (1, N, C) bf16 : full sequence, this batch row
    ln1_w_ref, ln1_b_ref,                    # (1, C) f32
    wq_ref, wkv_ref, wp_ref, bp_ref,         # (C,C), (C,2C) bf16 ; wp (C,C) or (H,d,C) bf16 ; (1,C) f32
    ln2_w_ref, ln2_b_ref,                    # (1, C) f32
    w1_ref, b1_ref, w2_ref, b2_ref,          # (C,Hm) bf16, (1,Hm) f32, (Hm,C) bf16, (1,C) f32
    out_ref,                                 # (1, q_tile, C) f32
    xfn_scr,                                 # (N, C) bf16       : cached LayerNorm(x)
    k_scr, v_scr,                            # (num_kv, H, kv_tile, d) bf16 : cached K / V
    *, num_heads, bf16_exp, reshaped_heads,
):
    eps = 1e-5
    c = xfn_scr.shape[1]
    num_kv, _, kv_tile, d = k_scr.shape
    q_tile = out_ref.shape[1]
    scale = float(d) ** -0.5

    ln1_w = ln1_w_ref[...].astype(jnp.float32)
    ln1_b = ln1_b_ref[...].astype(jnp.float32)

    def layer_norm(z, w, b):
        mu = jnp.mean(z, axis=-1, keepdims=True)
        var = jnp.mean((z - mu) ** 2, axis=-1, keepdims=True)
        return (z - mu) * jax.lax.rsqrt(var + eps) * w + b

    # ---- per-batch-row cache: LayerNorm(x) and head-split K/V, computed once (q-tile 0) ------
    @pl.when(pl.program_id(1) == 0)
    def _():
        def precompute(t, carry):
            r0 = pl.multiple_of(t * kv_tile, kv_tile)
            xr = x_ref[0, pl.ds(r0, kv_tile), :].astype(jnp.float32)
            xn = layer_norm(xr, ln1_w, ln1_b).astype(jnp.bfloat16)
            xfn_scr[pl.ds(r0, kv_tile), :] = xn
            kv = jnp.dot(xn, wkv_ref[...], preferred_element_type=jnp.float32)   # (tkv, 2C)
            # Head split done ONCE per batch row (amortised over all q tiles); the attention
            # loop then reads ready-made (H, kv_tile, d) chunks with no per-tile relayout.
            for h in range(num_heads):
                k_scr[t, h] = kv[:, h * d:(h + 1) * d].astype(jnp.bfloat16)
                v_scr[t, h] = kv[:, c + h * d:c + (h + 1) * d].astype(jnp.bfloat16)
            return carry
        jax.lax.fori_loop(0, num_kv, precompute, 0, unroll=num_kv <= 2)

    # ---- query tile (residual rows + cached LN rows sliced from the resident sequence) -------
    row0 = pl.multiple_of(pl.program_id(1) * q_tile, q_tile)
    xq = x_ref[0, pl.ds(row0, q_tile), :].astype(jnp.float32)          # residual rows
    xq_n = xfn_scr[pl.ds(row0, q_tile), :]                             # cached LayerNorm rows
    # to_queries (bias=False); 1/sqrt(d) folded in here: O(tq*C), not O(H*tq*N).
    q = jnp.dot(xq_n, wq_ref[...], preferred_element_type=jnp.float32) * scale
    if reshaped_heads:
        # Single reshape + major-dim transpose (no stack of H lane slices).
        qh = jnp.swapaxes(q.astype(jnp.bfloat16).reshape(q_tile, num_heads, d), 0, 1)
    else:
        # Safety-net path: proven slice/stack head split (per-tile, (tq, C) elements only).
        qb = q.astype(jnp.bfloat16)
        qh = jnp.stack([qb[:, h * d:(h + 1) * d] for h in range(num_heads)], axis=0)

    # ---- online-softmax attention over KV chunks from the scratch cache ----------------------
    m0 = jnp.full((num_heads, q_tile, 1), -jnp.inf, jnp.float32)
    l0 = jnp.zeros((num_heads, q_tile, 1), jnp.float32)
    acc0 = jnp.zeros((num_heads, q_tile, d), jnp.float32)

    def kv_step(t, carry):
        m_i, l_i, acc = carry
        kh = k_scr[t]                                                  # (H, kv_tile, d) bf16
        vh = v_scr[t]
        s = jnp.einsum("hqd,hkd->hqk", qh, kh,
                       preferred_element_type=jnp.float32)             # (H, tq, tkv)
        m_new = jnp.maximum(m_i, jnp.max(s, axis=-1, keepdims=True))
        alpha = jnp.exp(m_i - m_new)
        ps = s - m_new
        if bf16_exp:
            p = jnp.exp(ps.astype(jnp.bfloat16))                       # bf16 EUP (v6e / v7x)
            l_upd = jnp.sum(p, axis=-1, keepdims=True, dtype=jnp.float32)
        else:
            p_f = jnp.exp(ps)                                          # f32 EUP (v5e)
            l_upd = jnp.sum(p_f, axis=-1, keepdims=True)
            p = p_f.astype(jnp.bfloat16)
        l_i = alpha * l_i + l_upd
        acc = alpha * acc + jnp.einsum("hqk,hkd->hqd", p, vh,
                                       preferred_element_type=jnp.float32)
        return m_new, l_i, acc

    m_i, l_i, acc = jax.lax.fori_loop(0, num_kv, kv_step, (m0, l0, acc0),
                                      unroll=num_kv <= 4)

    # Normalisation after p@V; approximate reciprocal runs on the EUP (~1e-3 rel err).
    o_bf = (acc * pl.reciprocal(l_i, approx=True)).astype(jnp.bfloat16)   # (H, tq, d)

    if reshaped_heads:
        # Merge heads with one relayout, project with ONE 2-D MXU matmul: no (H, tq, C) f32
        # temporary and no cross-head VPU reduction.  wp_ref is the full (C, C) weight.
        o_nc = jnp.swapaxes(o_bf, 0, 1).reshape(q_tile, c)                # (tq, C)
        attn = jnp.dot(o_nc, wp_ref[...], preferred_element_type=jnp.float32)
    else:
        # Safety-net path: head-batched projection + head sum.  wp_ref is (H, d, C).
        proj = jnp.einsum("hqd,hdc->hqc", o_bf, wp_ref[...],
                          preferred_element_type=jnp.float32)
        attn = jnp.sum(proj, axis=0)
    attn = attn + bp_ref[...].astype(jnp.float32)

    x1 = xq + attn                                                        # first residual

    ln2_w = ln2_w_ref[...].astype(jnp.float32)
    ln2_b = ln2_b_ref[...].astype(jnp.float32)
    x2n = layer_norm(x1, ln2_w, ln2_b).astype(jnp.bfloat16)

    # MLP fc1 -> relu -> fc2 (dropout = 0 -> identity).
    h1 = jnp.dot(x2n, w1_ref[...], preferred_element_type=jnp.float32) \
        + b1_ref[...].astype(jnp.float32)
    h1 = jnp.maximum(h1, 0.0).astype(jnp.bfloat16)
    h2 = jnp.dot(h1, w2_ref[...], preferred_element_type=jnp.float32) \
        + b2_ref[...].astype(jnp.float32)

    out_ref[0] = (x1 + h2).astype(out_ref.dtype)                          # second residual


def _pick_tile(n, target):
    """Largest multiple of 8 that divides n and is <= target (falls back to n itself)."""
    target = min(target, n)
    if target >= n:
        return n
    t = (target // 8) * 8
    while t >= 8:
        if n % t == 0:
            return t
        t -= 8
    return n


def transformer_layer(x, params, num_heads, *, q_tile=None, kv_tile=None,
                      bf16_exp=True, single_buffer_weights=True, reshaped_heads=True):
    """Forward of TransformerLayer (self-attention, no mask, dropout=0)."""
    B, N, C = x.shape
    Hm = params["w1"].shape[1]
    assert C % num_heads == 0
    d = C // num_heads

    # Scoped VMEM limit from the actual part: 3/4 of physical, capped at 100 MiB
    # (v7x 64 MiB -> 48 MiB; v5e/v6e 128 MiB -> 96 MiB).
    try:
        vmem_cap = int(pltpu.get_tpu_info().vmem_capacity_bytes)
    except Exception:
        vmem_cap = 64 * 1024 * 1024
    vmem_limit = int(min(100 * 1024 * 1024, (vmem_cap * 3) // 4))

    # q tile: bigger on 128-MiB-VMEM parts; always a divisor of N (no padded/OOB rows);
    # ensure B * num_q_tiles >= 2 so both v7x TensorCores get work.
    if q_tile is None:
        q_tile = 512 if vmem_cap >= 100 * 1024 * 1024 else 256
    q_tile = _pick_tile(N, q_tile)
    if B * (N // q_tile) < 2 and N >= 16:
        q_tile = _pick_tile(N, max(8, q_tile // 2))
    num_q_tiles = N // q_tile

    if kv_tile is None:
        kv_tile = 512
    kv_tile = _pick_tile(N, kv_tile)
    num_kv = N // kv_tile

    weight_mode = pl.Buffered(1) if single_buffer_weights else None

    def const_spec(shape):
        nd = len(shape)
        return pl.BlockSpec(shape, lambda b, qi: (0,) * nd, pipeline_mode=weight_mode)

    if reshaped_heads:
        wp_arr, wp_spec = params["wp"], const_spec((C, C))
    else:
        wp_arr, wp_spec = params["wp"].reshape(num_heads, d, C), const_spec((num_heads, d, C))

    flops = int(B * (8 * N * C * C + 4 * N * N * C + 4 * N * C * Hm))
    transcendentals = int(B * num_heads * N * N)
    bytes_accessed = int(2 * x.size + 4 * x.size
                         + sum(int(v.size) * v.dtype.itemsize for v in params.values()))

    kernel = functools.partial(transformer_layer_kernel, num_heads=num_heads,
                               bf16_exp=bf16_exp, reshaped_heads=reshaped_heads)

    return pl.pallas_call(
        kernel,
        out_shape=jax.ShapeDtypeStruct((B, N, C), x.dtype),
        grid=(B, num_q_tiles),
        in_specs=[
            pl.BlockSpec((1, N, C), lambda b, qi: (b, 0, 0)),     # x (bf16): full sequence
            const_spec((1, C)), const_spec((1, C)),               # ln1 w, b
            const_spec((C, C)), const_spec((C, 2 * C)),           # Wq, Wkv (bias=False)
            wp_spec, const_spec((1, C)),                          # Wp, bp
            const_spec((1, C)), const_spec((1, C)),               # ln2 w, b
            const_spec((C, Hm)), const_spec((1, Hm)),             # fc1 w, b
            const_spec((Hm, C)), const_spec((1, C)),              # fc2 w, b
        ],
        out_specs=pl.BlockSpec((1, q_tile, C), lambda b, qi: (b, qi, 0)),
        scratch_shapes=[
            pltpu.VMEM((N, C), jnp.bfloat16),                         # cached LayerNorm(x)
            pltpu.VMEM((num_kv, num_heads, kv_tile, d), jnp.bfloat16),  # cached K (head-major)
            pltpu.VMEM((num_kv, num_heads, kv_tile, d), jnp.bfloat16),  # cached V (head-major)
        ],
        compiler_params=pltpu.CompilerParams(
            # batch axis parallel (megacore); q-tile axis arbitrary (per-batch scratch carry).
            dimension_semantics=("parallel", "arbitrary"),
            vmem_limit_bytes=vmem_limit,
        ),
        cost_estimate=pl.CostEstimate(flops=flops, transcendentals=transcendentals,
                                      bytes_accessed=bytes_accessed),
    )(
        x.astype(jnp.bfloat16),            # bf16 activations: half the HBM / resident VMEM
        params["ln1_w"], params["ln1_b"],
        params["wq"], params["wkv"], wp_arr, params["bp"],
        params["ln2_w"], params["ln2_b"],
        params["w1"], params["b1"], params["w2"], params["b2"],
    )


def reference(x, p, num_heads):
    """Pure-JAX (f32) mirror of PyTorch TransformerLayer.forward (dropout=0, no mask)."""
    def ln(z, w, b):
        mu = z.mean(-1, keepdims=True)
        var = ((z - mu) ** 2).mean(-1, keepdims=True)
        return (z - mu) / jnp.sqrt(var + 1e-5) * w + b

    f32 = lambda a: a.astype(jnp.float32)
    B, N, C = x.shape
    d = C // num_heads
    xn = ln(x, p["ln1_w"], p["ln1_b"])
    q = xn @ f32(p["wq"])
    kv = xn @ f32(p["wkv"])
    k, v = kv[..., :C], kv[..., C:]
    qh = q.reshape(B, N, num_heads, d)
    kh = k.reshape(B, N, num_heads, d)
    vh = v.reshape(B, N, num_heads, d)
    att = jnp.einsum("bnhd,bmhd->bnmh", qh, kh) * (d ** -0.5)
    att = jax.nn.softmax(att, axis=2)
    o = jnp.einsum("bnmh,bmhd->bnhd", att, vh).reshape(B, N, C)
    o = o @ f32(p["wp"]) + p["bp"]
    x1 = x + o
    x2n = ln(x1, p["ln2_w"], p["ln2_b"])
    m = jax.nn.relu(x2n @ f32(p["w1"]) + p["b1"]) @ f32(p["w2"]) + p["b2"]
    return x1 + m


def make_params(key, C, num_heads, mlp_ratio=4.0):
    H = int(C * mlp_ratio)
    ks = jax.random.split(key, 8)
    s = 0.02
    bf = jnp.bfloat16
    return {
        "ln1_w": jnp.ones((1, C), jnp.float32),
        "ln1_b": jnp.zeros((1, C), jnp.float32),
        "wq":    (s * jax.random.normal(ks[0], (C, C), jnp.float32)).astype(bf),
        "wkv":   (s * jax.random.normal(ks[1], (C, 2 * C), jnp.float32)).astype(bf),
        "wp":    (s * jax.random.normal(ks[2], (C, C), jnp.float32)).astype(bf),
        "bp":    s * jax.random.normal(ks[3], (1, C), jnp.float32),
        "ln2_w": jnp.ones((1, C), jnp.float32),
        "ln2_b": jnp.zeros((1, C), jnp.float32),
        "w1":    (s * jax.random.normal(ks[4], (C, H), jnp.float32)).astype(bf),
        "b1":    s * jax.random.normal(ks[5], (1, H), jnp.float32),
        "w2":    (s * jax.random.normal(ks[6], (H, C), jnp.float32)).astype(bf),
        "b2":    s * jax.random.normal(ks[7], (1, C), jnp.float32),
    }


if __name__ == "__main__":
    # dim_self = dim_ref = 32, num_heads = 4 (head_dim 8), mlp hidden = 128, seq = 16, batch = 2
    B, N, C, num_heads = 2, 16, 32, 4
    key = jax.random.PRNGKey(0)
    kx, kp = jax.random.split(key)
    x = jax.random.normal(kx, (B, N, C), jnp.float32)
    params = make_params(kp, C, num_heads)

    # Small tiles so this single run exercises the whole design: per-batch KV cache in scratch
    # (2 q tiles reuse it), the 2-chunk online-softmax loop, and single-buffered weights.
    tile_kwargs = dict(q_tile=8, kv_tile=8)
    try:
        out = jax.block_until_ready(transformer_layer(x, params, num_heads, **tile_kwargs))
    except Exception:
        # Safety net: if pl.Buffered(1) / the reshape-based head merge / bf16 exp are rejected
        # by this jax/TPU combination, retry the proven conservative variant (same math).
        out = jax.block_until_ready(
            transformer_layer(x, params, num_heads, single_buffer_weights=False,
                              reshaped_heads=False, bf16_exp=False, **tile_kwargs))

    ref = reference(x, params, num_heads)
    assert out.shape == (B, N, C)
    err = float(jnp.max(jnp.abs(out - ref)))
    # bf16 activations / matmul operands / exp, f32 accumulation -> bf16-level tolerance.
    assert err < 2.5e-2, err
    print("KERNEL_OK")
</pallas_src>

<mosaic_0001>
module attributes {stable_mosaic.version = 11 : i64} {
  func.func @transformer_layer_kernel(%arg0: i32, %arg1: i32, %arg2: memref<1x16x32xbf16, #tpu.memory_space<vmem>>, %arg3: memref<1x32xf32, #tpu.memory_space<vmem>>, %arg4: memref<1x32xf32, #tpu.memory_space<vmem>>, %arg5: memref<32x32xbf16, #tpu.memory_space<vmem>>, %arg6: memref<32x64xbf16, #tpu.memory_space<vmem>>, %arg7: memref<32x32xbf16, #tpu.memory_space<vmem>>, %arg8: memref<1x32xf32, #tpu.memory_space<vmem>>, %arg9: memref<1x32xf32, #tpu.memory_space<vmem>>, %arg10: memref<1x32xf32, #tpu.memory_space<vmem>>, %arg11: memref<32x128xbf16, #tpu.memory_space<vmem>>, %arg12: memref<1x128xf32, #tpu.memory_space<vmem>>, %arg13: memref<128x32xbf16, #tpu.memory_space<vmem>>, %arg14: memref<1x32xf32, #tpu.memory_space<vmem>>, %arg15: memref<1x8x32xf32, #tpu.memory_space<vmem>>, %arg16: memref<16x32xbf16, #tpu.memory_space<vmem>>, %arg17: memref<2x4x8x8xbf16, #tpu.memory_space<vmem>>, %arg18: memref<2x4x8x8xbf16, #tpu.memory_space<vmem>>) attributes {dimension_semantics = [#tpu.dimension_semantics<parallel>, #tpu.dimension_semantics<arbitrary>], iteration_bounds = array<i64: 2, 2>, scalar_prefetch = 0 : i64, scratch_operands = 3 : i64, tpu.core_type = #tpu.core_type<tc>, window_params = [{transform_indices = @transform_0, window_bounds = array<i64: 1, 16, 32>}, {pipeline_mode = #tpu.pipeline_mode<synchronous>, transform_indices = @transform_1, window_bounds = array<i64: 1, 32>}, {pipeline_mode = #tpu.pipeline_mode<synchronous>, transform_indices = @transform_2, window_bounds = array<i64: 1, 32>}, {pipeline_mode = #tpu.pipeline_mode<synchronous>, transform_indices = @transform_3, window_bounds = array<i64: 32, 32>}, {pipeline_mode = #tpu.pipeline_mode<synchronous>, transform_indices = @transform_4, window_bounds = array<i64: 32, 64>}, {pipeline_mode = #tpu.pipeline_mode<synchronous>, transform_indices = @transform_5, window_bounds = array<i64: 32, 32>}, {pipeline_mode = #tpu.pipeline_mode<synchronous>, transform_indices = @transform_6, window_bounds = array<i64: 1, 32>}, {pipeline_mode = #tpu.pipeline_mode<synchronous>, transform_indices = @transform_7, window_bounds = array<i64: 1, 32>}, {pipeline_mode = #tpu.pipeline_mode<synchronous>, transform_indices = @transform_8, window_bounds = array<i64: 1, 32>}, {pipeline_mode = #tpu.pipeline_mode<synchronous>, transform_indices = @transform_9, window_bounds = array<i64: 32, 128>}, {pipeline_mode = #tpu.pipeline_mode<synchronous>, transform_indices = @transform_10, window_bounds = array<i64: 1, 128>}, {pipeline_mode = #tpu.pipeline_mode<synchronous>, transform_indices = @transform_11, window_bounds = array<i64: 128, 32>}, {pipeline_mode = #tpu.pipeline_mode<synchronous>, transform_indices = @transform_12, window_bounds = array<i64: 1, 32>}, {transform_indices = @transform_13, window_bounds = array<i64: 1, 8, 32>}]} {
    %c0 = arith.constant 0 : index
    %c0_0 = arith.constant 0 : index
    %0 = vector.load %arg3[%c0, %c0_0] : memref<1x32xf32, #tpu.memory_space<vmem>>, vector<1x32xf32>
    %c0_1 = arith.constant 0 : index
    %c0_2 = arith.constant 0 : index
    %1 = vector.load %arg4[%c0_1, %c0_2] : memref<1x32xf32, #tpu.memory_space<vmem>>, vector<1x32xf32>
    %c0_i32 = arith.constant 0 : i32
    %2 = arith.cmpi eq, %arg1, %c0_i32 : i32
    %3 = arith.extui %2 : i1 to i32
    %c0_i32_3 = arith.constant 0 : i32
    %4 = arith.cmpi ne, %3, %c0_i32_3 : i32
    scf.if %4 {
      %c0_i32_62 = arith.constant 0 : i32
      %c8_i32_63 = arith.constant 8 : i32
      %127 = arith.muli %c0_i32_62, %c8_i32_63 : i32
      %128 = tpu.assume_multiple %127, 8 : i32
      %c0_64 = arith.constant 0 : index
      %129 = arith.index_cast %128 : i32 to index
      %c0_65 = arith.constant 0 : index
      %130 = vector.load %arg2[%c0_64, %129, %c0_65] : memref<1x16x32xbf16, #tpu.memory_space<vmem>>, vector<1x8x32xbf16>
      %131 = vector.shape_cast %130 : vector<1x8x32xbf16> to vector<8x32xbf16>
      %132 = arith.extf %131 : vector<8x32xbf16> to vector<8x32xf32>
      %cst_66 = arith.constant dense<0.000000e+00> : vector<8xf32>
      %133 = vector.multi_reduction <add>, %132, %cst_66 [1] : vector<8x32xf32> to vector<8xf32>
      %134 = vector.shape_cast %133 : vector<8xf32> to vector<8x1xf32>
      %cst_67 = arith.constant 3.200000e+01 : f32
      %135 = vector.broadcast %cst_67 : f32 to vector<8x1xf32>
      %136 = arith.divf %134, %135 : vector<8x1xf32>
      %137 = vector.broadcast %136 : vector<8x1xf32> to vector<8x32xf32>
      %138 = arith.subf %132, %137 : vector<8x32xf32>
      %139 = arith.mulf %138, %138 : vector<8x32xf32>
      %cst_68 = arith.constant dense<0.000000e+00> : vector<8xf32>
      %140 = vector.multi_reduction <add>, %139, %cst_68 [1] : vector<8x32xf32> to vector<8xf32>
      %141 = vector.shape_cast %140 : vector<8xf32> to vector<8x1xf32>
      %cst_69 = arith.constant 3.200000e+01 : f32
      %142 = vector.broadcast %cst_69 : f32 to vector<8x1xf32>
      %143 = arith.divf %141, %142 : vector<8x1xf32>
      %144 = vector.broadcast %136 : vector<8x1xf32> to vector<8x32xf32>
      %145 = arith.subf %132, %144 : vector<8x32xf32>
      %cst_70 = arith.constant 9.99999974E-6 : f32
      %146 = vector.broadcast %cst_70 : f32 to vector<8x1xf32>
      %147 = arith.addf %143, %146 : vector<8x1xf32>
      %148 = math.rsqrt %147 : vector<8x1xf32>
      %149 = vector.broadcast %148 : vector<8x1xf32> to vector<8x32xf32>
      %150 = arith.mulf %145, %149 : vector<8x32xf32>
      %151 = vector.broadcast %0 : vector<1x32xf32> to vector<8x32xf32>
      %152 = arith.mulf %150, %151 : vector<8x32xf32>
      %153 = vector.broadcast %1 : vector<1x32xf32> to vector<8x32xf32>
      %154 = arith.addf %152, %153 : vector<8x32xf32>
      %155 = arith.truncf %154 : vector<8x32xf32> to vector<8x32xbf16>
      %156 = arith.index_cast %128 : i32 to index
      %c0_71 = arith.constant 0 : index
      %157 = vector.load %arg16[%156, %c0_71] : memref<16x32xbf16, #tpu.memory_space<vmem>>, vector<8x32xbf16>
      tpu.vector_store %arg16[%156, %c0_71], %155 {strides = array<i32>} : memref<16x32xbf16, #tpu.memory_space<vmem>>, vector<8x32xbf16>,
      %c0_72 = arith.constant 0 : index
      %c0_73 = arith.constant 0 : index
      %158 = vector.load %arg6[%c0_72, %c0_73] : memref<32x64xbf16, #tpu.memory_space<vmem>>, vector<32x64xbf16>
      %cst_74 = arith.constant dense<0.000000e+00> : vector<8x64xf32>
      %159 = tpu.matmul %155, %158, %cst_74 {dimension_numbers = #tpu.dot_dimension_numbers<[1], [0], [0], [1], [0, 0, 1, 1], [], []>} : vector<8x32xbf16>, vector<32x64xbf16>, vector<8x64xf32> -> vector<8x64xf32>
      %160 = vector.extract_strided_slice %159 {offsets = [0, 0], sizes = [8, 8], strides = [1, 1]} : vector<8x64xf32> to vector<8x8xf32>
      %161 = arith.truncf %160 : vector<8x8xf32> to vector<8x8xbf16>
      %162 = arith.index_cast %c0_i32_62 : i32 to index
      %c0_75 = arith.constant 0 : index
      %c0_76 = arith.constant 0 : index
      %c0_77 = arith.constant 0 : index
      %163 = vector.load %arg17[%162, %c0_75, %c0_76, %c0_77] : memref<2x4x8x8xbf16, #tpu.memory_space<vmem>>, vector<1x1x8x8xbf16>
      %164 = vector.shape_cast %163 : vector<1x1x8x8xbf16> to vector<8x8xbf16>
      %165 = vector.shape_cast %161 : vector<8x8xbf16> to vector<1x1x8x8xbf16>
      tpu.vector_store %arg17[%162, %c0_75, %c0_76, %c0_77], %165 {strides = array<i32>} : memref<2x4x8x8xbf16, #tpu.memory_space<vmem>>, vector<1x1x8x8xbf16>,
      %166 = vector.extract_strided_slice %159 {offsets = [0, 32], sizes = [8, 8], strides = [1, 1]} : vector<8x64xf32> to vector<8x8xf32>
      %167 = arith.truncf %166 : vector<8x8xf32> to vector<8x8xbf16>
      %168 = arith.index_cast %c0_i32_62 : i32 to index
      %c0_78 = arith.constant 0 : index
      %c0_79 = arith.constant 0 : index
      %c0_80 = arith.constant 0 : index
      %169 = vector.load %arg18[%168, %c0_78, %c0_79, %c0_80] : memref<2x4x8x8xbf16, #tpu.memory_space<vmem>>, vector<1x1x8x8xbf16>
      %170 = vector.shape_cast %169 : vector<1x1x8x8xbf16> to vector<8x8xbf16>
      %171 = vector.shape_cast %167 : vector<8x8xbf16> to vector<1x1x8x8xbf16>
      tpu.vector_store %arg18[%168, %c0_78, %c0_79, %c0_80], %171 {strides = array<i32>} : memref<2x4x8x8xbf16, #tpu.memory_space<vmem>>, vector<1x1x8x8xbf16>,
      %172 = vector.extract_strided_slice %159 {offsets = [0, 8], sizes = [8, 8], strides = [1, 1]} : vector<8x64xf32> to vector<8x8xf32>
      %173 = arith.truncf %172 : vector<8x8xf32> to vector<8x8xbf16>
      %174 = arith.index_cast %c0_i32_62 : i32 to index
      %c1 = arith.constant 1 : index
      %c0_81 = arith.constant 0 : index
      %c0_82 = arith.constant 0 : index
      %175 = vector.load %arg17[%174, %c1, %c0_81, %c0_82] : memref<2x4x8x8xbf16, #tpu.memory_space<vmem>>, vector<1x1x8x8xbf16>
      %176 = vector.shape_cast %175 : vector<1x1x8x8xbf16> to vector<8x8xbf16>
      %177 = vector.shape_cast %173 : vector<8x8xbf16> to vector<1x1x8x8xbf16>
      tpu.vector_store %arg17[%174, %c1, %c0_81, %c0_82], %177 {strides = array<i32>} : memref<2x4x8x8xbf16, #tpu.memory_space<vmem>>, vector<1x1x8x8xbf16>,
      %178 = vector.extract_strided_slice %159 {offsets = [0, 40], sizes = [8, 8], strides = [1, 1]} : vector<8x64xf32> to vector<8x8xf32>
      %179 = arith.truncf %178 : vector<8x8xf32> to vector<8x8xbf16>
      %180 = arith.index_cast %c0_i32_62 : i32 to index
      %c1_83 = arith.constant 1 : index
      %c0_84 = arith.constant 0 : index
      %c0_85 = arith.constant 0 : index
      %181 = vector.load %arg18[%180, %c1_83, %c0_84, %c0_85] : memref<2x4x8x8xbf16, #tpu.memory_space<vmem>>, vector<1x1x8x8xbf16>
      %182 = vector.shape_cast %181 : vector<1x1x8x8xbf16> to vector<8x8xbf16>
      %183 = vector.shape_cast %179 : vector<8x8xbf16> to vector<1x1x8x8xbf16>
      tpu.vector_store %arg18[%180, %c1_83, %c0_84, %c0_85], %183 {strides = array<i32>} : memref<2x4x8x8xbf16, #tpu.memory_space<vmem>>, vector<1x1x8x8xbf16>,
      %184 = vector.extract_strided_slice %159 {offsets = [0, 16], sizes = [8, 8], strides = [1, 1]} : vector<8x64xf32> to vector<8x8xf32>
      %185 = arith.truncf %184 : vector<8x8xf32> to vector<8x8xbf16>
      %186 = arith.index_cast %c0_i32_62 : i32 to index
      %c2 = arith.constant 2 : index
      %c0_86 = arith.constant 0 : index
      %c0_87 = arith.constant 0 : index
      %187 = vector.load %arg17[%186, %c2, %c0_86, %c0_87] : memref<2x4x8x8xbf16, #tpu.memory_space<vmem>>, vector<1x1x8x8xbf16>
      %188 = vector.shape_cast %187 : vector<1x1x8x8xbf16> to vector<8x8xbf16>
      %189 = vector.shape_cast %185 : vector<8x8xbf16> to vector<1x1x8x8xbf16>
      tpu.vector_store %arg17[%186, %c2, %c0_86, %c0_87], %189 {strides = array<i32>} : memref<2x4x8x8xbf16, #tpu.memory_space<vmem>>, vector<1x1x8x8xbf16>,
      %190 = vector.extract_strided_slice %159 {offsets = [0, 48], sizes = [8, 8], strides = [1, 1]} : vector<8x64xf32> to vector<8x8xf32>
      %191 = arith.truncf %190 : vector<8x8xf32> to vector<8x8xbf16>
      %192 = arith.index_cast %c0_i32_62 : i32 to index
      %c2_88 = arith.constant 2 : index
      %c0_89 = arith.constant 0 : index
      %c0_90 = arith.constant 0 : index
      %193 = vector.load %arg18[%192, %c2_88, %c0_89, %c0_90] : memref<2x4x8x8xbf16, #tpu.memory_space<vmem>>, vector<1x1x8x8xbf16>
      %194 = vector.shape_cast %193 : vector<1x1x8x8xbf16> to vector<8x8xbf16>
      %195 = vector.shape_cast %191 : vector<8x8xbf16> to vector<1x1x8x8xbf16>
      tpu.vector_store %arg18[%192, %c2_88, %c0_89, %c0_90], %195 {strides = array<i32>} : memref<2x4x8x8xbf16, #tpu.memory_space<vmem>>, vector<1x1x8x8xbf16>,
      %196 = vector.extract_strided_slice %159 {offsets = [0, 24], sizes = [8, 8], strides = [1, 1]} : vector<8x64xf32> to vector<8x8xf32>
      %197 = arith.truncf %196 : vector<8x8xf32> to vector<8x8xbf16>
      %198 = arith.index_cast %c0_i32_62 : i32 to index
      %c3 = arith.constant 3 : index
      %c0_91 = arith.constant 0 : index
      %c0_92 = arith.constant 0 : index
      %199 = vector.load %arg17[%198, %c3, %c0_91, %c0_92] : memref<2x4x8x8xbf16, #tpu.memory_space<vmem>>, vector<1x1x8x8xbf16>
      %200 = vector.shape_cast %199 : vector<1x1x8x8xbf16> to vector<8x8xbf16>
      %201 = vector.shape_cast %197 : vector<8x8xbf16> to vector<1x1x8x8xbf16>
      tpu.vector_store %arg17[%198, %c3, %c0_91, %c0_92], %201 {strides = array<i32>} : memref<2x4x8x8xbf16, #tpu.memory_space<vmem>>, vector<1x1x8x8xbf16>,
      %202 = vector.extract_strided_slice %159 {offsets = [0, 56], sizes = [8, 8], strides = [1, 1]} : vector<8x64xf32> to vector<8x8xf32>
      %203 = arith.truncf %202 : vector<8x8xf32> to vector<8x8xbf16>
      %204 = arith.index_cast %c0_i32_62 : i32 to index
      %c3_93 = arith.constant 3 : index
      %c0_94 = arith.constant 0 : index
      %c0_95 = arith.constant 0 : index
      %205 = vector.load %arg18[%204, %c3_93, %c0_94, %c0_95] : memref<2x4x8x8xbf16, #tpu.memory_space<vmem>>, vector<1x1x8x8xbf16>
      %206 = vector.shape_cast %205 : vector<1x1x8x8xbf16> to vector<8x8xbf16>
      %207 = vector.shape_cast %203 : vector<8x8xbf16> to vector<1x1x8x8xbf16>
      tpu.vector_store %arg18[%204, %c3_93, %c0_94, %c0_95], %207 {strides = array<i32>} : memref<2x4x8x8xbf16, #tpu.memory_space<vmem>>, vector<1x1x8x8xbf16>,
      %c1_i32_96 = arith.constant 1 : i32
      %c8_i32_97 = arith.constant 8 : i32
      %208 = arith.muli %c1_i32_96, %c8_i32_97 : i32
      %209 = tpu.assume_multiple %208, 8 : i32
      %c0_98 = arith.constant 0 : index
      %210 = arith.index_cast %209 : i32 to index
      %c0_99 = arith.constant 0 : index
      %211 = vector.load %arg2[%c0_98, %210, %c0_99] : memref<1x16x32xbf16, #tpu.memory_space<vmem>>, vector<1x8x32xbf16>
      %212 = vector.shape_cast %211 : vector<1x8x32xbf16> to vector<8x32xbf16>
      %213 = arith.extf %212 : vector<8x32xbf16> to vector<8x32xf32>
      %cst_100 = arith.constant dense<0.000000e+00> : vector<8xf32>
      %214 = vector.multi_reduction <add>, %213, %cst_100 [1] : vector<8x32xf32> to vector<8xf32>
      %215 = vector.shape_cast %214 : vector<8xf32> to vector<8x1xf32>
      %cst_101 = arith.constant 3.200000e+01 : f32
      %216 = vector.broadcast %cst_101 : f32 to vector<8x1xf32>
      %217 = arith.divf %215, %216 : vector<8x1xf32>
      %218 = vector.broadcast %217 : vector<8x1xf32> to vector<8x32xf32>
      %219 = arith.subf %213, %218 : vector<8x32xf32>
      %220 = arith.mulf %219, %219 : vector<8x32xf32>
      %cst_102 = arith.constant dense<0.000000e+00> : vector<8xf32>
      %221 = vector.multi_reduction <add>, %220, %cst_102 [1] : vector<8x32xf32> to vector<8xf32>
      %222 = vector.shape_cast %221 : vector<8xf32> to vector<8x1xf32>
      %cst_103 = arith.constant 3.200000e+01 : f32
      %223 = vector.broadcast %cst_103 : f32 to vector<8x1xf32>
      %224 = arith.divf %222, %223 : vector<8x1xf32>
      %225 = vector.broadcast %217 : vector<8x1xf32> to vector<8x32xf32>
      %226 = arith.subf %213, %225 : vector<8x32xf32>
      %cst_104 = arith.constant 9.99999974E-6 : f32
      %227 = vector.broadcast %cst_104 : f32 to vector<8x1xf32>
      %228 = arith.addf %224, %227 : vector<8x1xf32>
      %229 = math.rsqrt %228 : vector<8x1xf32>
      %230 = vector.broadcast %229 : vector<8x1xf32> to vector<8x32xf32>
      %231 = arith.mulf %226, %230 : vector<8x32xf32>
      %232 = vector.broadcast %0 : vector<1x32xf32> to vector<8x32xf32>
      %233 = arith.mulf %231, %232 : vector<8x32xf32>
      %234 = vector.broadcast %1 : vector<1x32xf32> to vector<8x32xf32>
      %235 = arith.addf %233, %234 : vector<8x32xf32>
      %236 = arith.truncf %235 : vector<8x32xf32> to vector<8x32xbf16>
      %237 = arith.index_cast %209 : i32 to index
      %c0_105 = arith.constant 0 : index
      %238 = vector.load %arg16[%237, %c0_105] : memref<16x32xbf16, #tpu.memory_space<vmem>>, vector<8x32xbf16>
      tpu.vector_store %arg16[%237, %c0_105], %236 {strides = array<i32>} : memref<16x32xbf16, #tpu.memory_space<vmem>>, vector<8x32xbf16>,
      %c0_106 = arith.constant 0 : index
      %c0_107 = arith.constant 0 : index
      %239 = vector.load %arg6[%c0_106, %c0_107] : memref<32x64xbf16, #tpu.memory_space<vmem>>, vector<32x64xbf16>
      %cst_108 = arith.constant dense<0.000000e+00> : vector<8x64xf32>
      %240 = tpu.matmul %236, %239, %cst_108 {dimension_numbers = #tpu.dot_dimension_numbers<[1], [0], [0], [1], [0, 0, 1, 1], [], []>} : vector<8x32xbf16>, vector<32x64xbf16>, vector<8x64xf32> -> vector<8x64xf32>
      %241 = vector.extract_strided_slice %240 {offsets = [0, 0], sizes = [8, 8], strides = [1, 1]} : vector<8x64xf32> to vector<8x8xf32>
      %242 = arith.truncf %241 : vector<8x8xf32> to vector<8x8xbf16>
      %243 = arith.index_cast %c1_i32_96 : i32 to index
      %c0_109 = arith.constant 0 : index
      %c0_110 = arith.constant 0 : index
      %c0_111 = arith.constant 0 : index
      %244 = vector.load %arg17[%243, %c0_109, %c0_110, %c0_111] : memref<2x4x8x8xbf16, #tpu.memory_space<vmem>>, vector<1x1x8x8xbf16>
      %245 = vector.shape_cast %244 : vector<1x1x8x8xbf16> to vector<8x8xbf16>
      %246 = vector.shape_cast %242 : vector<8x8xbf16> to vector<1x1x8x8xbf16>
      tpu.vector_store %arg17[%243, %c0_109, %c0_110, %c0_111], %246 {strides = array<i32>} : memref<2x4x8x8xbf16, #tpu.memory_space<vmem>>, vector<1x1x8x8xbf16>,
      %247 = vector.extract_strided_slice %240 {offsets = [0, 32], sizes = [8, 8], strides = [1, 1]} : vector<8x64xf32> to vector<8x8xf32>
      %248 = arith.truncf %247 : vector<8x8xf32> to vector<8x8xbf16>
      %249 = arith.index_cast %c1_i32_96 : i32 to index
      %c0_112 = arith.constant 0 : index
      %c0_113 = arith.constant 0 : index
      %c0_114 = arith.constant 0 : index
      %250 = vector.load %arg18[%249, %c0_112, %c0_113, %c0_114] : memref<2x4x8x8xbf16, #tpu.memory_space<vmem>>, vector<1x1x8x8xbf16>
      %251 = vector.shape_cast %250 : vector<1x1x8x8xbf16> to vector<8x8xbf16>
      %252 = vector.shape_cast %248 : vector<8x8xbf16> to vector<1x1x8x8xbf16>
      tpu.vector_store %arg18[%249, %c0_112, %c0_113, %c0_114], %252 {strides = array<i32>} : memref<2x4x8x8xbf16, #tpu.memory_space<vmem>>, vector<1x1x8x8xbf16>,
      %253 = vector.extract_strided_slice %240 {offsets = [0, 8], sizes = [8, 8], strides = [1, 1]} : vector<8x64xf32> to vector<8x8xf32>
      %254 = arith.truncf %253 : vector<8x8xf32> to vector<8x8xbf16>
      %255 = arith.index_cast %c1_i32_96 : i32 to index
      %c1_115 = arith.constant 1 : index
      %c0_116 = arith.constant 0 : index
      %c0_117 = arith.constant 0 : index
      %256 = vector.load %arg17[%255, %c1_115, %c0_116, %c0_117] : memref<2x4x8x8xbf16, #tpu.memory_space<vmem>>, vector<1x1x8x8xbf16>
      %257 = vector.shape_cast %256 : vector<1x1x8x8xbf16> to vector<8x8xbf16>
      %258 = vector.shape_cast %254 : vector<8x8xbf16> to vector<1x1x8x8xbf16>
      tpu.vector_store %arg17[%255, %c1_115, %c0_116, %c0_117], %258 {strides = array<i32>} : memref<2x4x8x8xbf16, #tpu.memory_space<vmem>>, vector<1x1x8x8xbf16>,
      %259 = vector.extract_strided_slice %240 {offsets = [0, 40], sizes = [8, 8], strides = [1, 1]} : vector<8x64xf32> to vector<8x8xf32>
      %260 = arith.truncf %259 : vector<8x8xf32> to vector<8x8xbf16>
      %261 = arith.index_cast %c1_i32_96 : i32 to index
      %c1_118 = arith.constant 1 : index
      %c0_119 = arith.constant 0 : index
      %c0_120 = arith.constant 0 : index
      %262 = vector.load %arg18[%261, %c1_118, %c0_119, %c0_120] : memref<2x4x8x8xbf16, #tpu.memory_space<vmem>>, vector<1x1x8x8xbf16>
      %263 = vector.shape_cast %262 : vector<1x1x8x8xbf16> to vector<8x8xbf16>
      %264 = vector.shape_cast %260 : vector<8x8xbf16> to vector<1x1x8x8xbf16>
      tpu.vector_store %arg18[%261, %c1_118, %c0_119, %c0_120], %264 {strides = array<i32>} : memref<2x4x8x8xbf16, #tpu.memory_space<vmem>>, vector<1x1x8x8xbf16>,
      %265 = vector.extract_strided_slice %240 {offsets = [0, 16], sizes = [8, 8], strides = [1, 1]} : vector<8x64xf32> to vector<8x8xf32>
      %266 = arith.truncf %265 : vector<8x8xf32> to vector<8x8xbf16>
      %267 = arith.index_cast %c1_i32_96 : i32 to index
      %c2_121 = arith.constant 2 : index
      %c0_122 = arith.constant 0 : index
      %c0_123 = arith.constant 0 : index
      %268 = vector.load %arg17[%267, %c2_121, %c0_122, %c0_123] : memref<2x4x8x8xbf16, #tpu.memory_space<vmem>>, vector<1x1x8x8xbf16>
      %269 = vector.shape_cast %268 : vector<1x1x8x8xbf16> to vector<8x8xbf16>
      %270 = vector.shape_cast %266 : vector<8x8xbf16> to vector<1x1x8x8xbf16>
      tpu.vector_store %arg17[%267, %c2_121, %c0_122, %c0_123], %270 {strides = array<i32>} : memref<2x4x8x8xbf16, #tpu.memory_space<vmem>>, vector<1x1x8x8xbf16>,
      %271 = vector.extract_strided_slice %240 {offsets = [0, 48], sizes = [8, 8], strides = [1, 1]} : vector<8x64xf32> to vector<8x8xf32>
      %272 = arith.truncf %271 : vector<8x8xf32> to vector<8x8xbf16>
      %273 = arith.index_cast %c1_i32_96 : i32 to index
      %c2_124 = arith.constant 2 : index
      %c0_125 = arith.constant 0 : index
      %c0_126 = arith.constant 0 : index
      %274 = vector.load %arg18[%273, %c2_124, %c0_125, %c0_126] : memref<2x4x8x8xbf16, #tpu.memory_space<vmem>>, vector<1x1x8x8xbf16>
      %275 = vector.shape_cast %274 : vector<1x1x8x8xbf16> to vector<8x8xbf16>
      %276 = vector.shape_cast %272 : vector<8x8xbf16> to vector<1x1x8x8xbf16>
      tpu.vector_store %arg18[%273, %c2_124, %c0_125, %c0_126], %276 {strides = array<i32>} : memref<2x4x8x8xbf16, #tpu.memory_space<vmem>>, vector<1x1x8x8xbf16>,
      %277 = vector.extract_strided_slice %240 {offsets = [0, 24], sizes = [8, 8], strides = [1, 1]} : vector<8x64xf32> to vector<8x8xf32>
      %278 = arith.truncf %277 : vector<8x8xf32> to vector<8x8xbf16>
      %279 = arith.index_cast %c1_i32_96 : i32 to index
      %c3_127 = arith.constant 3 : index
      %c0_128 = arith.constant 0 : index
      %c0_129 = arith.constant 0 : index
      %280 = vector.load %arg17[%279, %c3_127, %c0_128, %c0_129] : memref<2x4x8x8xbf16, #tpu.memory_space<vmem>>, vector<1x1x8x8xbf16>
      %281 = vector.shape_cast %280 : vector<1x1x8x8xbf16> to vector<8x8xbf16>
      %282 = vector.shape_cast %278 : vector<8x8xbf16> to vector<1x1x8x8xbf16>
      tpu.vector_store %arg17[%279, %c3_127, %c0_128, %c0_129], %282 {strides = array<i32>} : memref<2x4x8x8xbf16, #tpu.memory_space<vmem>>, vector<1x1x8x8xbf16>,
      %283 = vector.extract_strided_slice %240 {offsets = [0, 56], sizes = [8, 8], strides = [1, 1]} : vector<8x64xf32> to vector<8x8xf32>
      %284 = arith.truncf %283 : vector<8x8xf32> to vector<8x8xbf16>
      %285 = arith.index_cast %c1_i32_96 : i32 to index
      %c3_130 = arith.constant 3 : index
      %c0_131 = arith.constant 0 : index
      %c0_132 = arith.constant 0 : index
      %286 = vector.load %arg18[%285, %c3_130, %c0_131, %c0_132] : memref<2x4x8x8xbf16, #tpu.memory_space<vmem>>, vector<1x1x8x8xbf16>
      %287 = vector.shape_cast %286 : vector<1x1x8x8xbf16> to vector<8x8xbf16>
      %288 = vector.shape_cast %284 : vector<8x8xbf16> to vector<1x1x8x8xbf16>
      tpu.vector_store %arg18[%285, %c3_130, %c0_131, %c0_132], %288 {strides = array<i32>} : memref<2x4x8x8xbf16, #tpu.memory_space<vmem>>, vector<1x1x8x8xbf16>,
      %c2_i32_133 = arith.constant 2 : i32
    } else {
    }
    %c8_i32 = arith.constant 8 : i32
    %5 = arith.muli %arg1, %c8_i32 : i32
    %6 = tpu.assume_multiple %5, 8 : i32
    %c0_4 = arith.constant 0 : index
    %7 = arith.index_cast %6 : i32 to index
    %c0_5 = arith.constant 0 : index
    %8 = vector.load %arg2[%c0_4, %7, %c0_5] : memref<1x16x32xbf16, #tpu.memory_space<vmem>>, vector<1x8x32xbf16>
    %9 = vector.shape_cast %8 : vector<1x8x32xbf16> to vector<8x32xbf16>
    %10 = arith.extf %9 : vector<8x32xbf16> to vector<8x32xf32>
    %11 = arith.index_cast %6 : i32 to index
    %c0_6 = arith.constant 0 : index
    %12 = vector.load %arg16[%11, %c0_6] : memref<16x32xbf16, #tpu.memory_space<vmem>>, vector<8x32xbf16>
    %c0_7 = arith.constant 0 : index
    %c0_8 = arith.constant 0 : index
    %13 = vector.load %arg5[%c0_7, %c0_8] : memref<32x32xbf16, #tpu.memory_space<vmem>>, vector<32x32xbf16>
    %cst = arith.constant dense<0.000000e+00> : vector<8x32xf32>
    %14 = tpu.matmul %12, %13, %cst {dimension_numbers = #tpu.dot_dimension_numbers<[1], [0], [0], [1], [0, 0, 1, 1], [], []>} : vector<8x32xbf16>, vector<32x32xbf16>, vector<8x32xf32> -> vector<8x32xf32>
    %cst_9 = arith.constant 0.353553385 : f32
    %15 = vector.broadcast %cst_9 : f32 to vector<8x32xf32>
    %16 = arith.mulf %14, %15 : vector<8x32xf32>
    %17 = arith.truncf %16 : vector<8x32xf32> to vector<8x32xbf16>
    %18 = vector.shape_cast %17 : vector<8x32xbf16> to vector<8x4x8xbf16>
    %19 = tpu.transpose %18, [1, 0, 2] : vector<8x4x8xbf16> -> vector<4x8x8xbf16>
    %cst_10 = arith.constant 0xFF800000 : f32
    %20 = vector.broadcast %cst_10 : f32 to vector<4x8x1xf32>
    %cst_11 = arith.constant 0.000000e+00 : f32
    %21 = vector.broadcast %cst_11 : f32 to vector<4x8x1xf32>
    %cst_12 = arith.constant 0.000000e+00 : f32
    %22 = vector.broadcast %cst_12 : f32 to vector<4x8x8xf32>
    %c0_i32_13 = arith.constant 0 : i32
    %23 = arith.index_cast %c0_i32_13 : i32 to index
    %c0_14 = arith.constant 0 : index
    %c0_15 = arith.constant 0 : index
    %c0_16 = arith.constant 0 : index
    %24 = vector.load %arg17[%23, %c0_14, %c0_15, %c0_16] : memref<2x4x8x8xbf16, #tpu.memory_space<vmem>>, vector<1x4x8x8xbf16>
    %25 = vector.shape_cast %24 : vector<1x4x8x8xbf16> to vector<4x8x8xbf16>
    %26 = arith.index_cast %c0_i32_13 : i32 to index
    %c0_17 = arith.constant 0 : index
    %c0_18 = arith.constant 0 : index
    %c0_19 = arith.constant 0 : index
    %27 = vector.load %arg18[%26, %c0_17, %c0_18, %c0_19] : memref<2x4x8x8xbf16, #tpu.memory_space<vmem>>, vector<1x4x8x8xbf16>
    %28 = vector.shape_cast %27 : vector<1x4x8x8xbf16> to vector<4x8x8xbf16>
    "tpu.trace_start"() <{level = 10 : i32, message = "hqd,hkd->hqk"}> : () -> ()
    %cst_20 = arith.constant dense<0.000000e+00> : vector<4x8x8xf32>
    %29 = tpu.matmul %19, %25, %cst_20 {dimension_numbers = #tpu.dot_dimension_numbers<[2], [2], [1], [1], [0, 0, 0, 1, 1, 1], [0], [0]>} : vector<4x8x8xbf16>, vector<4x8x8xbf16>, vector<4x8x8xf32> -> vector<4x8x8xf32>
    "tpu.trace_stop"() : () -> ()
    %cst_21 = arith.constant dense<0xFF800000> : vector<4x8xf32>
    %30 = vector.multi_reduction <maximumf>, %29, %cst_21 [2] : vector<4x8x8xf32> to vector<4x8xf32>
    %31 = vector.shape_cast %30 : vector<4x8xf32> to vector<4x8x1xf32>
    %32 = arith.maximumf %20, %31 : vector<4x8x1xf32>
    %33 = arith.subf %20, %32 : vector<4x8x1xf32>
    %34 = math.exp %33 : vector<4x8x1xf32>
    %35 = vector.broadcast %32 : vector<4x8x1xf32> to vector<4x8x8xf32>
    %36 = arith.subf %29, %35 : vector<4x8x8xf32>
    %37 = arith.truncf %36 : vector<4x8x8xf32> to vector<4x8x8xbf16>
    %38 = math.exp %37 : vector<4x8x8xbf16>
    %39 = arith.extf %38 : vector<4x8x8xbf16> to vector<4x8x8xf32>
    %cst_22 = arith.constant dense<0.000000e+00> : vector<4x8xf32>
    %40 = vector.multi_reduction <add>, %39, %cst_22 [2] : vector<4x8x8xf32> to vector<4x8xf32>
    %41 = vector.shape_cast %40 : vector<4x8xf32> to vector<4x8x1xf32>
    %42 = arith.mulf %34, %21 : vector<4x8x1xf32>
    %43 = arith.addf %42, %41 : vector<4x8x1xf32>
    %44 = vector.broadcast %34 : vector<4x8x1xf32> to vector<4x8x8xf32>
    %45 = arith.mulf %44, %22 : vector<4x8x8xf32>
    "tpu.trace_start"() <{level = 10 : i32, message = "hqk,hkd->hqd"}> : () -> ()
    %cst_23 = arith.constant dense<0.000000e+00> : vector<4x8x8xf32>
    %46 = tpu.matmul %38, %28, %cst_23 {dimension_numbers = #tpu.dot_dimension_numbers<[2], [1], [1], [2], [0, 0, 0, 1, 1, 2], [0], [0]>} : vector<4x8x8xbf16>, vector<4x8x8xbf16>, vector<4x8x8xf32> -> vector<4x8x8xf32>
    "tpu.trace_stop"() : () -> ()
    %47 = arith.addf %45, %46 : vector<4x8x8xf32>
    %c1_i32 = arith.constant 1 : i32
    %48 = arith.index_cast %c1_i32 : i32 to index
    %c0_24 = arith.constant 0 : index
    %c0_25 = arith.constant 0 : index
    %c0_26 = arith.constant 0 : index
    %49 = vector.load %arg17[%48, %c0_24, %c0_25, %c0_26] : memref<2x4x8x8xbf16, #tpu.memory_space<vmem>>, vector<1x4x8x8xbf16>
    %50 = vector.shape_cast %49 : vector<1x4x8x8xbf16> to vector<4x8x8xbf16>
    %51 = arith.index_cast %c1_i32 : i32 to index
    %c0_27 = arith.constant 0 : index
    %c0_28 = arith.constant 0 : index
    %c0_29 = arith.constant 0 : index
    %52 = vector.load %arg18[%51, %c0_27, %c0_28, %c0_29] : memref<2x4x8x8xbf16, #tpu.memory_space<vmem>>, vector<1x4x8x8xbf16>
    %53 = vector.shape_cast %52 : vector<1x4x8x8xbf16> to vector<4x8x8xbf16>
    "tpu.trace_start"() <{level = 10 : i32, message = "hqd,hkd->hqk"}> : () -> ()
    %cst_30 = arith.constant dense<0.000000e+00> : vector<4x8x8xf32>
    %54 = tpu.matmul %19, %50, %cst_30 {dimension_numbers = #tpu.dot_dimension_numbers<[2], [2], [1], [1], [0, 0, 0, 1, 1, 1], [0], [0]>} : vector<4x8x8xbf16>, vector<4x8x8xbf16>, vector<4x8x8xf32> -> vector<4x8x8xf32>
    "tpu.trace_stop"() : () -> ()
    %cst_31 = arith.constant dense<0xFF800000> : vector<4x8xf32>
    %55 = vector.multi_reduction <maximumf>, %54, %cst_31 [2] : vector<4x8x8xf32> to vector<4x8xf32>
    %56 = vector.shape_cast %55 : vector<4x8xf32> to vector<4x8x1xf32>
    %57 = arith.maximumf %32, %56 : vector<4x8x1xf32>
    %58 = arith.subf %32, %57 : vector<4x8x1xf32>
    %59 = math.exp %58 : vector<4x8x1xf32>
    %60 = vector.broadcast %57 : vector<4x8x1xf32> to vector<4x8x8xf32>
    %61 = arith.subf %54, %60 : vector<4x8x8xf32>
    %62 = arith.truncf %61 : vector<4x8x8xf32> to vector<4x8x8xbf16>
    %63 = math.exp %62 : vector<4x8x8xbf16>
    %64 = arith.extf %63 : vector<4x8x8xbf16> to vector<4x8x8xf32>
    %cst_32 = arith.constant dense<0.000000e+00> : vector<4x8xf32>
    %65 = vector.multi_reduction <add>, %64, %cst_32 [2] : vector<4x8x8xf32> to vector<4x8xf32>
    %66 = vector.shape_cast %65 : vector<4x8xf32> to vector<4x8x1xf32>
    %67 = arith.mulf %59, %43 : vector<4x8x1xf32>
    %68 = arith.addf %67, %66 : vector<4x8x1xf32>
    %69 = vector.broadcast %59 : vector<4x8x1xf32> to vector<4x8x8xf32>
    %70 = arith.mulf %69, %47 : vector<4x8x8xf32>
    "tpu.trace_start"() <{level = 10 : i32, message = "hqk,hkd->hqd"}> : () -> ()
    %cst_33 = arith.constant dense<0.000000e+00> : vector<4x8x8xf32>
    %71 = tpu.matmul %63, %53, %cst_33 {dimension_numbers = #tpu.dot_dimension_numbers<[2], [1], [1], [2], [0, 0, 0, 1, 1, 2], [0], [0]>} : vector<4x8x8xbf16>, vector<4x8x8xbf16>, vector<4x8x8xf32> -> vector<4x8x8xf32>
    "tpu.trace_stop"() : () -> ()
    %72 = arith.addf %70, %71 : vector<4x8x8xf32>
    %c2_i32 = arith.constant 2 : i32
    %73 = tpu.reciprocal %68 {approx = true} : vector<4x8x1xf32> -> vector<4x8x1xf32>
    %74 = vector.broadcast %73 : vector<4x8x1xf32> to vector<4x8x8xf32>
    %75 = arith.mulf %72, %74 : vector<4x8x8xf32>
    %76 = arith.truncf %75 : vector<4x8x8xf32> to vector<4x8x8xbf16>
    %77 = tpu.transpose %76, [1, 0, 2] : vector<4x8x8xbf16> -> vector<8x4x8xbf16>
    %78 = vector.shape_cast %77 : vector<8x4x8xbf16> to vector<8x32xbf16>
    %c0_34 = arith.constant 0 : index
    %c0_35 = arith.constant 0 : index
    %79 = vector.load %arg7[%c0_34, %c0_35] : memref<32x32xbf16, #tpu.memory_space<vmem>>, vector<32x32xbf16>
    %cst_36 = arith.constant dense<0.000000e+00> : vector<8x32xf32>
    %80 = tpu.matmul %78, %79, %cst_36 {dimension_numbers = #tpu.dot_dimension_numbers<[1], [0], [0], [1], [0, 0, 1, 1], [], []>} : vector<8x32xbf16>, vector<32x32xbf16>, vector<8x32xf32> -> vector<8x32xf32>
    %c0_37 = arith.constant 0 : index
    %c0_38 = arith.constant 0 : index
    %81 = vector.load %arg8[%c0_37, %c0_38] : memref<1x32xf32, #tpu.memory_space<vmem>>, vector<1x32xf32>
    %82 = vector.broadcast %81 : vector<1x32xf32> to vector<8x32xf32>
    %83 = arith.addf %80, %82 : vector<8x32xf32>
    %84 = arith.addf %10, %83 : vector<8x32xf32>
    %c0_39 = arith.constant 0 : index
    %c0_40 = arith.constant 0 : index
    %85 = vector.load %arg9[%c0_39, %c0_40] : memref<1x32xf32, #tpu.memory_space<vmem>>, vector<1x32xf32>
    %c0_41 = arith.constant 0 : index
    %c0_42 = arith.constant 0 : index
    %86 = vector.load %arg10[%c0_41, %c0_42] : memref<1x32xf32, #tpu.memory_space<vmem>>, vector<1x32xf32>
    %cst_43 = arith.constant dense<0.000000e+00> : vector<8xf32>
    %87 = vector.multi_reduction <add>, %84, %cst_43 [1] : vector<8x32xf32> to vector<8xf32>
    %88 = vector.shape_cast %87 : vector<8xf32> to vector<8x1xf32>
    %cst_44 = arith.constant 3.200000e+01 : f32
    %89 = vector.broadcast %cst_44 : f32 to vector<8x1xf32>
    %90 = arith.divf %88, %89 : vector<8x1xf32>
    %91 = vector.broadcast %90 : vector<8x1xf32> to vector<8x32xf32>
    %92 = arith.subf %84, %91 : vector<8x32xf32>
    %93 = arith.mulf %92, %92 : vector<8x32xf32>
    %cst_45 = arith.constant dense<0.000000e+00> : vector<8xf32>
    %94 = vector.multi_reduction <add>, %93, %cst_45 [1] : vector<8x32xf32> to vector<8xf32>
    %95 = vector.shape_cast %94 : vector<8xf32> to vector<8x1xf32>
    %cst_46 = arith.constant 3.200000e+01 : f32
    %96 = vector.broadcast %cst_46 : f32 to vector<8x1xf32>
    %97 = arith.divf %95, %96 : vector<8x1xf32>
    %98 = vector.broadcast %90 : vector<8x1xf32> to vector<8x32xf32>
    %99 = arith.subf %84, %98 : vector<8x32xf32>
    %cst_47 = arith.constant 9.99999974E-6 : f32
    %100 = vector.broadcast %cst_47 : f32 to vector<8x1xf32>
    %101 = arith.addf %97, %100 : vector<8x1xf32>
    %102 = math.rsqrt %101 : vector<8x1xf32>
    %103 = vector.broadcast %102 : vector<8x1xf32> to vector<8x32xf32>
    %104 = arith.mulf %99, %103 : vector<8x32xf32>
    %105 = vector.broadcast %85 : vector<1x32xf32> to vector<8x32xf32>
    %106 = arith.mulf %104, %105 : vector<8x32xf32>
    %107 = vector.broadcast %86 : vector<1x32xf32> to vector<8x32xf32>
    %108 = arith.addf %106, %107 : vector<8x32xf32>
    %109 = arith.truncf %108 : vector<8x32xf32> to vector<8x32xbf16>
    %c0_48 = arith.constant 0 : index
    %c0_49 = arith.constant 0 : index
    %110 = vector.load %arg11[%c0_48, %c0_49] : memref<32x128xbf16, #tpu.memory_space<vmem>>, vector<32x128xbf16>
    %cst_50 = arith.constant dense<0.000000e+00> : vector<8x128xf32>
    %111 = tpu.matmul %109, %110, %cst_50 {dimension_numbers = #tpu.dot_dimension_numbers<[1], [0], [0], [1], [0, 0, 1, 1], [], []>} : vector<8x32xbf16>, vector<32x128xbf16>, vector<8x128xf32> -> vector<8x128xf32>
    %c0_51 = arith.constant 0 : index
    %c0_52 = arith.constant 0 : index
    %112 = vector.load %arg12[%c0_51, %c0_52] : memref<1x128xf32, #tpu.memory_space<vmem>>, vector<1x128xf32>
    %113 = vector.broadcast %112 : vector<1x128xf32> to vector<8x128xf32>
    %114 = arith.addf %111, %113 : vector<8x128xf32>
    %cst_53 = arith.constant 0.000000e+00 : f32
    %115 = vector.broadcast %cst_53 : f32 to vector<8x128xf32>
    %116 = arith.maximumf %114, %115 : vector<8x128xf32>
    %117 = arith.truncf %116 : vector<8x128xf32> to vector<8x128xbf16>
    %c0_54 = arith.constant 0 : index
    %c0_55 = arith.constant 0 : index
    %118 = vector.load %arg13[%c0_54, %c0_55] : memref<128x32xbf16, #tpu.memory_space<vmem>>, vector<128x32xbf16>
    %cst_56 = arith.constant dense<0.000000e+00> : vector<8x32xf32>
    %119 = tpu.matmul %117, %118, %cst_56 {dimension_numbers = #tpu.dot_dimension_numbers<[1], [0], [0], [1], [0, 0, 1, 1], [], []>} : vector<8x128xbf16>, vector<128x32xbf16>, vector<8x32xf32> -> vector<8x32xf32>
    %c0_57 = arith.constant 0 : index
    %c0_58 = arith.constant 0 : index
    %120 = vector.load %arg14[%c0_57, %c0_58] : memref<1x32xf32, #tpu.memory_space<vmem>>, vector<1x32xf32>
    %121 = vector.broadcast %120 : vector<1x32xf32> to vector<8x32xf32>
    %122 = arith.addf %119, %121 : vector<8x32xf32>
    %123 = arith.addf %84, %122 : vector<8x32xf32>
    %c0_59 = arith.constant 0 : index
    %c0_60 = arith.constant 0 : index
    %c0_61 = arith.constant 0 : index
    %124 = vector.load %arg15[%c0_59, %c0_60, %c0_61] : memref<1x8x32xf32, #tpu.memory_space<vmem>>, vector<1x8x32xf32>
    %125 = vector.shape_cast %124 : vector<1x8x32xf32> to vector<8x32xf32>
    %126 = vector.shape_cast %123 : vector<8x32xf32> to vector<1x8x32xf32>
    tpu.vector_store %arg15[%c0_59, %c0_60, %c0_61], %126 {strides = array<i32>} : memref<1x8x32xf32, #tpu.memory_space<vmem>>, vector<1x8x32xf32>,
    return
  }
  func.func @transform_0(%arg0: i32, %arg1: i32) -> (i32, i32, i32) {
    %c0_i32 = arith.constant 0 : i32
    %c0_i32_0 = arith.constant 0 : i32
    %c0_i32_1 = arith.constant 0 : i32
    return %arg0, %c0_i32, %c0_i32_0 : i32, i32, i32
  }
  func.func @transform_1(%arg0: i32, %arg1: i32) -> (i32, i32) {
    %c0_i32 = arith.constant 0 : i32
    %c0_i32_0 = arith.constant 0 : i32
    %c0_i32_1 = arith.constant 0 : i32
    return %c0_i32, %c0_i32_0 : i32, i32
  }
  func.func @transform_2(%arg0: i32, %arg1: i32) -> (i32, i32) {
    %c0_i32 = arith.constant 0 : i32
    %c0_i32_0 = arith.constant 0 : i32
    %c0_i32_1 = arith.constant 0 : i32
    return %c0_i32, %c0_i32_0 : i32, i32
  }
  func.func @transform_3(%arg0: i32, %arg1: i32) -> (i32, i32) {
    %c0_i32 = arith.constant 0 : i32
    %c0_i32_0 = arith.constant 0 : i32
    %c0_i32_1 = arith.constant 0 : i32
    return %c0_i32, %c0_i32_0 : i32, i32
  }
  func.func @transform_4(%arg0: i32, %arg1: i32) -> (i32, i32) {
    %c0_i32 = arith.constant 0 : i32
    %c0_i32_0 = arith.constant 0 : i32
    %c0_i32_1 = arith.constant 0 : i32
    return %c0_i32, %c0_i32_0 : i32, i32
  }
  func.func @transform_5(%arg0: i32, %arg1: i32) -> (i32, i32) {
    %c0_i32 = arith.constant 0 : i32
    %c0_i32_0 = arith.constant 0 : i32
    %c0_i32_1 = arith.constant 0 : i32
    return %c0_i32, %c0_i32_0 : i32, i32
  }
  func.func @transform_6(%arg0: i32, %arg1: i32) -> (i32, i32) {
    %c0_i32 = arith.constant 0 : i32
    %c0_i32_0 = arith.constant 0 : i32
    %c0_i32_1 = arith.constant 0 : i32
    return %c0_i32, %c0_i32_0 : i32, i32
  }
  func.func @transform_7(%arg0: i32, %arg1: i32) -> (i32, i32) {
    %c0_i32 = arith.constant 0 : i32
    %c0_i32_0 = arith.constant 0 : i32
    %c0_i32_1 = arith.constant 0 : i32
    return %c0_i32, %c0_i32_0 : i32, i32
  }
  func.func @transform_8(%arg0: i32, %arg1: i32) -> (i32, i32) {
    %c0_i32 = arith.constant 0 : i32
    %c0_i32_0 = arith.constant 0 : i32
    %c0_i32_1 = arith.constant 0 : i32
    return %c0_i32, %c0_i32_0 : i32, i32
  }
  func.func @transform_9(%arg0: i32, %arg1: i32) -> (i32, i32) {
    %c0_i32 = arith.constant 0 : i32
    %c0_i32_0 = arith.constant 0 : i32
    %c0_i32_1 = arith.constant 0 : i32
    return %c0_i32, %c0_i32_0 : i32, i32
  }
  func.func @transform_10(%arg0: i32, %arg1: i32) -> (i32, i32) {
    %c0_i32 = arith.constant 0 : i32
    %c0_i32_0 = arith.constant 0 : i32
    %c0_i32_1 = arith.constant 0 : i32
    return %c0_i32, %c0_i32_0 : i32, i32
  }
  func.func @transform_11(%arg0: i32, %arg1: i32) -> (i32, i32) {
    %c0_i32 = arith.constant 0 : i32
    %c0_i32_0 = arith.constant 0 : i32
    %c0_i32_1 = arith.constant 0 : i32
    return %c0_i32, %c0_i32_0 : i32, i32
  }
  func.func @transform_12(%arg0: i32, %arg1: i32) -> (i32, i32) {
    %c0_i32 = arith.constant 0 : i32
    %c0_i32_0 = arith.constant 0 : i32
    %c0_i32_1 = arith.constant 0 : i32
    return %c0_i32, %c0_i32_0 : i32, i32
  }
  func.func @transform_13(%arg0: i32, %arg1: i32) -> (i32, i32, i32) {
    %c0_i32 = arith.constant 0 : i32
    %c0_i32_0 = arith.constant 0 : i32
    return %arg0, %arg1, %c0_i32 : i32, i32, i32
  }
}

module attributes {stable_mosaic.version = 11 : i64} {
  func.func @transformer_layer_kernel(%arg0: i32, %arg1: i32, %arg2: memref<1x16x32xbf16, #tpu.memory_space<vmem>>, %arg3: memref<1x32xf32, #tpu.memory_space<vmem>>, %arg4: memref<1x32xf32, #tpu.memory_space<vmem>>, %arg5: memref<32x32xbf16, #tpu.memory_space<vmem>>, %arg6: memref<32x64xbf16, #tpu.memory_space<vmem>>, %arg7: memref<4x8x32xbf16, #tpu.memory_space<vmem>>, %arg8: memref<1x32xf32, #tpu.memory_space<vmem>>, %arg9: memref<1x32xf32, #tpu.memory_space<vmem>>, %arg10: memref<1x32xf32, #tpu.memory_space<vmem>>, %arg11: memref<32x128xbf16, #tpu.memory_space<vmem>>, %arg12: memref<1x128xf32, #tpu.memory_space<vmem>>, %arg13: memref<128x32xbf16, #tpu.memory_space<vmem>>, %arg14: memref<1x32xf32, #tpu.memory_space<vmem>>, %arg15: memref<1x8x32xf32, #tpu.memory_space<vmem>>, %arg16: memref<16x32xbf16, #tpu.memory_space<vmem>>, %arg17: memref<2x4x8x8xbf16, #tpu.memory_space<vmem>>, %arg18: memref<2x4x8x8xbf16, #tpu.memory_space<vmem>>) attributes {dimension_semantics = [#tpu.dimension_semantics<parallel>, #tpu.dimension_semantics<arbitrary>], iteration_bounds = array<i64: 2, 2>, scalar_prefetch = 0 : i64, scratch_operands = 3 : i64, tpu.core_type = #tpu.core_type<tc>, window_params = [{transform_indices = @transform_0, window_bounds = array<i64: 1, 16, 32>}, {pipeline_mode = #tpu.pipeline_mode<synchronous>, transform_indices = @transform_1, window_bounds = array<i64: 1, 32>}, {pipeline_mode = #tpu.pipeline_mode<synchronous>, transform_indices = @transform_2, window_bounds = array<i64: 1, 32>}, {pipeline_mode = #tpu.pipeline_mode<synchronous>, transform_indices = @transform_3, window_bounds = array<i64: 32, 32>}, {pipeline_mode = #tpu.pipeline_mode<synchronous>, transform_indices = @transform_4, window_bounds = array<i64: 32, 64>}, {pipeline_mode = #tpu.pipeline_mode<synchronous>, transform_indices = @transform_5, window_bounds = array<i64: 4, 8, 32>}, {pipeline_mode = #tpu.pipeline_mode<synchronous>, transform_indices = @transform_6, window_bounds = array<i64: 1, 32>}, {pipeline_mode = #tpu.pipeline_mode<synchronous>, transform_indices = @transform_7, window_bounds = array<i64: 1, 32>}, {pipeline_mode = #tpu.pipeline_mode<synchronous>, transform_indices = @transform_8, window_bounds = array<i64: 1, 32>}, {pipeline_mode = #tpu.pipeline_mode<synchronous>, transform_indices = @transform_9, window_bounds = array<i64: 32, 128>}, {pipeline_mode = #tpu.pipeline_mode<synchronous>, transform_indices = @transform_10, window_bounds = array<i64: 1, 128>}, {pipeline_mode = #tpu.pipeline_mode<synchronous>, transform_indices = @transform_11, window_bounds = array<i64: 128, 32>}, {pipeline_mode = #tpu.pipeline_mode<synchronous>, transform_indices = @transform_12, window_bounds = array<i64: 1, 32>}, {transform_indices = @transform_13, window_bounds = array<i64: 1, 8, 32>}]} {
    %c0 = arith.constant 0 : index
    %c0_0 = arith.constant 0 : index
    %0 = vector.load %arg3[%c0, %c0_0] : memref<1x32xf32, #tpu.memory_space<vmem>>, vector<1x32xf32>
    %c0_1 = arith.constant 0 : index
    %c0_2 = arith.constant 0 : index
    %1 = vector.load %arg4[%c0_1, %c0_2] : memref<1x32xf32, #tpu.memory_space<vmem>>, vector<1x32xf32>
    %c0_i32 = arith.constant 0 : i32
    %2 = arith.cmpi eq, %arg1, %c0_i32 : i32
    %3 = arith.extui %2 : i1 to i32
    %c0_i32_3 = arith.constant 0 : i32
    %4 = arith.cmpi ne, %3, %c0_i32_3 : i32
    scf.if %4 {
      %c0_i32_64 = arith.constant 0 : i32
      %c8_i32_65 = arith.constant 8 : i32
      %131 = arith.muli %c0_i32_64, %c8_i32_65 : i32
      %132 = tpu.assume_multiple %131, 8 : i32
      %c0_66 = arith.constant 0 : index
      %133 = arith.index_cast %132 : i32 to index
      %c0_67 = arith.constant 0 : index
      %134 = vector.load %arg2[%c0_66, %133, %c0_67] : memref<1x16x32xbf16, #tpu.memory_space<vmem>>, vector<1x8x32xbf16>
      %135 = vector.shape_cast %134 : vector<1x8x32xbf16> to vector<8x32xbf16>
      %136 = arith.extf %135 : vector<8x32xbf16> to vector<8x32xf32>
      %cst_68 = arith.constant dense<0.000000e+00> : vector<8xf32>
      %137 = vector.multi_reduction <add>, %136, %cst_68 [1] : vector<8x32xf32> to vector<8xf32>
      %138 = vector.shape_cast %137 : vector<8xf32> to vector<8x1xf32>
      %cst_69 = arith.constant 3.200000e+01 : f32
      %139 = vector.broadcast %cst_69 : f32 to vector<8x1xf32>
      %140 = arith.divf %138, %139 : vector<8x1xf32>
      %141 = vector.broadcast %140 : vector<8x1xf32> to vector<8x32xf32>
      %142 = arith.subf %136, %141 : vector<8x32xf32>
      %143 = arith.mulf %142, %142 : vector<8x32xf32>
      %cst_70 = arith.constant dense<0.000000e+00> : vector<8xf32>
      %144 = vector.multi_reduction <add>, %143, %cst_70 [1] : vector<8x32xf32> to vector<8xf32>
      %145 = vector.shape_cast %144 : vector<8xf32> to vector<8x1xf32>
      %cst_71 = arith.constant 3.200000e+01 : f32
      %146 = vector.broadcast %cst_71 : f32 to vector<8x1xf32>
      %147 = arith.divf %145, %146 : vector<8x1xf32>
      %148 = vector.broadcast %140 : vector<8x1xf32> to vector<8x32xf32>
      %149 = arith.subf %136, %148 : vector<8x32xf32>
      %cst_72 = arith.constant 9.99999974E-6 : f32
      %150 = vector.broadcast %cst_72 : f32 to vector<8x1xf32>
      %151 = arith.addf %147, %150 : vector<8x1xf32>
      %152 = math.rsqrt %151 : vector<8x1xf32>
      %153 = vector.broadcast %152 : vector<8x1xf32> to vector<8x32xf32>
      %154 = arith.mulf %149, %153 : vector<8x32xf32>
      %155 = vector.broadcast %0 : vector<1x32xf32> to vector<8x32xf32>
      %156 = arith.mulf %154, %155 : vector<8x32xf32>
      %157 = vector.broadcast %1 : vector<1x32xf32> to vector<8x32xf32>
      %158 = arith.addf %156, %157 : vector<8x32xf32>
      %159 = arith.truncf %158 : vector<8x32xf32> to vector<8x32xbf16>
      %160 = arith.index_cast %132 : i32 to index
      %c0_73 = arith.constant 0 : index
      %161 = vector.load %arg16[%160, %c0_73] : memref<16x32xbf16, #tpu.memory_space<vmem>>, vector<8x32xbf16>
      tpu.vector_store %arg16[%160, %c0_73], %159 {strides = array<i32>} : memref<16x32xbf16, #tpu.memory_space<vmem>>, vector<8x32xbf16>,
      %c0_74 = arith.constant 0 : index
      %c0_75 = arith.constant 0 : index
      %162 = vector.load %arg6[%c0_74, %c0_75] : memref<32x64xbf16, #tpu.memory_space<vmem>>, vector<32x64xbf16>
      %cst_76 = arith.constant dense<0.000000e+00> : vector<8x64xf32>
      %163 = tpu.matmul %159, %162, %cst_76 {dimension_numbers = #tpu.dot_dimension_numbers<[1], [0], [0], [1], [0, 0, 1, 1], [], []>} : vector<8x32xbf16>, vector<32x64xbf16>, vector<8x64xf32> -> vector<8x64xf32>
      %164 = vector.extract_strided_slice %163 {offsets = [0, 0], sizes = [8, 8], strides = [1, 1]} : vector<8x64xf32> to vector<8x8xf32>
      %165 = arith.truncf %164 : vector<8x8xf32> to vector<8x8xbf16>
      %166 = arith.index_cast %c0_i32_64 : i32 to index
      %c0_77 = arith.constant 0 : index
      %c0_78 = arith.constant 0 : index
      %c0_79 = arith.constant 0 : index
      %167 = vector.load %arg17[%166, %c0_77, %c0_78, %c0_79] : memref<2x4x8x8xbf16, #tpu.memory_space<vmem>>, vector<1x1x8x8xbf16>
      %168 = vector.shape_cast %167 : vector<1x1x8x8xbf16> to vector<8x8xbf16>
      %169 = vector.shape_cast %165 : vector<8x8xbf16> to vector<1x1x8x8xbf16>
      tpu.vector_store %arg17[%166, %c0_77, %c0_78, %c0_79], %169 {strides = array<i32>} : memref<2x4x8x8xbf16, #tpu.memory_space<vmem>>, vector<1x1x8x8xbf16>,
      %170 = vector.extract_strided_slice %163 {offsets = [0, 32], sizes = [8, 8], strides = [1, 1]} : vector<8x64xf32> to vector<8x8xf32>
      %171 = arith.truncf %170 : vector<8x8xf32> to vector<8x8xbf16>
      %172 = arith.index_cast %c0_i32_64 : i32 to index
      %c0_80 = arith.constant 0 : index
      %c0_81 = arith.constant 0 : index
      %c0_82 = arith.constant 0 : index
      %173 = vector.load %arg18[%172, %c0_80, %c0_81, %c0_82] : memref<2x4x8x8xbf16, #tpu.memory_space<vmem>>, vector<1x1x8x8xbf16>
      %174 = vector.shape_cast %173 : vector<1x1x8x8xbf16> to vector<8x8xbf16>
      %175 = vector.shape_cast %171 : vector<8x8xbf16> to vector<1x1x8x8xbf16>
      tpu.vector_store %arg18[%172, %c0_80, %c0_81, %c0_82], %175 {strides = array<i32>} : memref<2x4x8x8xbf16, #tpu.memory_space<vmem>>, vector<1x1x8x8xbf16>,
      %176 = vector.extract_strided_slice %163 {offsets = [0, 8], sizes = [8, 8], strides = [1, 1]} : vector<8x64xf32> to vector<8x8xf32>
      %177 = arith.truncf %176 : vector<8x8xf32> to vector<8x8xbf16>
      %178 = arith.index_cast %c0_i32_64 : i32 to index
      %c1 = arith.constant 1 : index
      %c0_83 = arith.constant 0 : index
      %c0_84 = arith.constant 0 : index
      %179 = vector.load %arg17[%178, %c1, %c0_83, %c0_84] : memref<2x4x8x8xbf16, #tpu.memory_space<vmem>>, vector<1x1x8x8xbf16>
      %180 = vector.shape_cast %179 : vector<1x1x8x8xbf16> to vector<8x8xbf16>
      %181 = vector.shape_cast %177 : vector<8x8xbf16> to vector<1x1x8x8xbf16>
      tpu.vector_store %arg17[%178, %c1, %c0_83, %c0_84], %181 {strides = array<i32>} : memref<2x4x8x8xbf16, #tpu.memory_space<vmem>>, vector<1x1x8x8xbf16>,
      %182 = vector.extract_strided_slice %163 {offsets = [0, 40], sizes = [8, 8], strides = [1, 1]} : vector<8x64xf32> to vector<8x8xf32>
      %183 = arith.truncf %182 : vector<8x8xf32> to vector<8x8xbf16>
      %184 = arith.index_cast %c0_i32_64 : i32 to index
      %c1_85 = arith.constant 1 : index
      %c0_86 = arith.constant 0 : index
      %c0_87 = arith.constant 0 : index
      %185 = vector.load %arg18[%184, %c1_85, %c0_86, %c0_87] : memref<2x4x8x8xbf16, #tpu.memory_space<vmem>>, vector<1x1x8x8xbf16>
      %186 = vector.shape_cast %185 : vector<1x1x8x8xbf16> to vector<8x8xbf16>
      %187 = vector.shape_cast %183 : vector<8x8xbf16> to vector<1x1x8x8xbf16>
      tpu.vector_store %arg18[%184, %c1_85, %c0_86, %c0_87], %187 {strides = array<i32>} : memref<2x4x8x8xbf16, #tpu.memory_space<vmem>>, vector<1x1x8x8xbf16>,
      %188 = vector.extract_strided_slice %163 {offsets = [0, 16], sizes = [8, 8], strides = [1, 1]} : vector<8x64xf32> to vector<8x8xf32>
      %189 = arith.truncf %188 : vector<8x8xf32> to vector<8x8xbf16>
      %190 = arith.index_cast %c0_i32_64 : i32 to index
      %c2 = arith.constant 2 : index
      %c0_88 = arith.constant 0 : index
      %c0_89 = arith.constant 0 : index
      %191 = vector.load %arg17[%190, %c2, %c0_88, %c0_89] : memref<2x4x8x8xbf16, #tpu.memory_space<vmem>>, vector<1x1x8x8xbf16>
      %192 = vector.shape_cast %191 : vector<1x1x8x8xbf16> to vector<8x8xbf16>
      %193 = vector.shape_cast %189 : vector<8x8xbf16> to vector<1x1x8x8xbf16>
      tpu.vector_store %arg17[%190, %c2, %c0_88, %c0_89], %193 {strides = array<i32>} : memref<2x4x8x8xbf16, #tpu.memory_space<vmem>>, vector<1x1x8x8xbf16>,
      %194 = vector.extract_strided_slice %163 {offsets = [0, 48], sizes = [8, 8], strides = [1, 1]} : vector<8x64xf32> to vector<8x8xf32>
      %195 = arith.truncf %194 : vector<8x8xf32> to vector<8x8xbf16>
      %196 = arith.index_cast %c0_i32_64 : i32 to index
      %c2_90 = arith.constant 2 : index
      %c0_91 = arith.constant 0 : index
      %c0_92 = arith.constant 0 : index
      %197 = vector.load %arg18[%196, %c2_90, %c0_91, %c0_92] : memref<2x4x8x8xbf16, #tpu.memory_space<vmem>>, vector<1x1x8x8xbf16>
      %198 = vector.shape_cast %197 : vector<1x1x8x8xbf16> to vector<8x8xbf16>
      %199 = vector.shape_cast %195 : vector<8x8xbf16> to vector<1x1x8x8xbf16>
      tpu.vector_store %arg18[%196, %c2_90, %c0_91, %c0_92], %199 {strides = array<i32>} : memref<2x4x8x8xbf16, #tpu.memory_space<vmem>>, vector<1x1x8x8xbf16>,
      %200 = vector.extract_strided_slice %163 {offsets = [0, 24], sizes = [8, 8], strides = [1, 1]} : vector<8x64xf32> to vector<8x8xf32>
      %201 = arith.truncf %200 : vector<8x8xf32> to vector<8x8xbf16>
      %202 = arith.index_cast %c0_i32_64 : i32 to index
      %c3 = arith.constant 3 : index
      %c0_93 = arith.constant 0 : index
      %c0_94 = arith.constant 0 : index
      %203 = vector.load %arg17[%202, %c3, %c0_93, %c0_94] : memref<2x4x8x8xbf16, #tpu.memory_space<vmem>>, vector<1x1x8x8xbf16>
      %204 = vector.shape_cast %203 : vector<1x1x8x8xbf16> to vector<8x8xbf16>
      %205 = vector.shape_cast %201 : vector<8x8xbf16> to vector<1x1x8x8xbf16>
      tpu.vector_store %arg17[%202, %c3, %c0_93, %c0_94], %205 {strides = array<i32>} : memref<2x4x8x8xbf16, #tpu.memory_space<vmem>>, vector<1x1x8x8xbf16>,
      %206 = vector.extract_strided_slice %163 {offsets = [0, 56], sizes = [8, 8], strides = [1, 1]} : vector<8x64xf32> to vector<8x8xf32>
      %207 = arith.truncf %206 : vector<8x8xf32> to vector<8x8xbf16>
      %208 = arith.index_cast %c0_i32_64 : i32 to index
      %c3_95 = arith.constant 3 : index
      %c0_96 = arith.constant 0 : index
      %c0_97 = arith.constant 0 : index
      %209 = vector.load %arg18[%208, %c3_95, %c0_96, %c0_97] : memref<2x4x8x8xbf16, #tpu.memory_space<vmem>>, vector<1x1x8x8xbf16>
      %210 = vector.shape_cast %209 : vector<1x1x8x8xbf16> to vector<8x8xbf16>
      %211 = vector.shape_cast %207 : vector<8x8xbf16> to vector<1x1x8x8xbf16>
      tpu.vector_store %arg18[%208, %c3_95, %c0_96, %c0_97], %211 {strides = array<i32>} : memref<2x4x8x8xbf16, #tpu.memory_space<vmem>>, vector<1x1x8x8xbf16>,
      %c1_i32_98 = arith.constant 1 : i32
      %c8_i32_99 = arith.constant 8 : i32
      %212 = arith.muli %c1_i32_98, %c8_i32_99 : i32
      %213 = tpu.assume_multiple %212, 8 : i32
      %c0_100 = arith.constant 0 : index
      %214 = arith.index_cast %213 : i32 to index
      %c0_101 = arith.constant 0 : index
      %215 = vector.load %arg2[%c0_100, %214, %c0_101] : memref<1x16x32xbf16, #tpu.memory_space<vmem>>, vector<1x8x32xbf16>
      %216 = vector.shape_cast %215 : vector<1x8x32xbf16> to vector<8x32xbf16>
      %217 = arith.extf %216 : vector<8x32xbf16> to vector<8x32xf32>
      %cst_102 = arith.constant dense<0.000000e+00> : vector<8xf32>
      %218 = vector.multi_reduction <add>, %217, %cst_102 [1] : vector<8x32xf32> to vector<8xf32>
      %219 = vector.shape_cast %218 : vector<8xf32> to vector<8x1xf32>
      %cst_103 = arith.constant 3.200000e+01 : f32
      %220 = vector.broadcast %cst_103 : f32 to vector<8x1xf32>
      %221 = arith.divf %219, %220 : vector<8x1xf32>
      %222 = vector.broadcast %221 : vector<8x1xf32> to vector<8x32xf32>
      %223 = arith.subf %217, %222 : vector<8x32xf32>
      %224 = arith.mulf %223, %223 : vector<8x32xf32>
      %cst_104 = arith.constant dense<0.000000e+00> : vector<8xf32>
      %225 = vector.multi_reduction <add>, %224, %cst_104 [1] : vector<8x32xf32> to vector<8xf32>
      %226 = vector.shape_cast %225 : vector<8xf32> to vector<8x1xf32>
      %cst_105 = arith.constant 3.200000e+01 : f32
      %227 = vector.broadcast %cst_105 : f32 to vector<8x1xf32>
      %228 = arith.divf %226, %227 : vector<8x1xf32>
      %229 = vector.broadcast %221 : vector<8x1xf32> to vector<8x32xf32>
      %230 = arith.subf %217, %229 : vector<8x32xf32>
      %cst_106 = arith.constant 9.99999974E-6 : f32
      %231 = vector.broadcast %cst_106 : f32 to vector<8x1xf32>
      %232 = arith.addf %228, %231 : vector<8x1xf32>
      %233 = math.rsqrt %232 : vector<8x1xf32>
      %234 = vector.broadcast %233 : vector<8x1xf32> to vector<8x32xf32>
      %235 = arith.mulf %230, %234 : vector<8x32xf32>
      %236 = vector.broadcast %0 : vector<1x32xf32> to vector<8x32xf32>
      %237 = arith.mulf %235, %236 : vector<8x32xf32>
      %238 = vector.broadcast %1 : vector<1x32xf32> to vector<8x32xf32>
      %239 = arith.addf %237, %238 : vector<8x32xf32>
      %240 = arith.truncf %239 : vector<8x32xf32> to vector<8x32xbf16>
      %241 = arith.index_cast %213 : i32 to index
      %c0_107 = arith.constant 0 : index
      %242 = vector.load %arg16[%241, %c0_107] : memref<16x32xbf16, #tpu.memory_space<vmem>>, vector<8x32xbf16>
      tpu.vector_store %arg16[%241, %c0_107], %240 {strides = array<i32>} : memref<16x32xbf16, #tpu.memory_space<vmem>>, vector<8x32xbf16>,
      %c0_108 = arith.constant 0 : index
      %c0_109 = arith.constant 0 : index
      %243 = vector.load %arg6[%c0_108, %c0_109] : memref<32x64xbf16, #tpu.memory_space<vmem>>, vector<32x64xbf16>
      %cst_110 = arith.constant dense<0.000000e+00> : vector<8x64xf32>
      %244 = tpu.matmul %240, %243, %cst_110 {dimension_numbers = #tpu.dot_dimension_numbers<[1], [0], [0], [1], [0, 0, 1, 1], [], []>} : vector<8x32xbf16>, vector<32x64xbf16>, vector<8x64xf32> -> vector<8x64xf32>
      %245 = vector.extract_strided_slice %244 {offsets = [0, 0], sizes = [8, 8], strides = [1, 1]} : vector<8x64xf32> to vector<8x8xf32>
      %246 = arith.truncf %245 : vector<8x8xf32> to vector<8x8xbf16>
      %247 = arith.index_cast %c1_i32_98 : i32 to index
      %c0_111 = arith.constant 0 : index
      %c0_112 = arith.constant 0 : index
      %c0_113 = arith.constant 0 : index
      %248 = vector.load %arg17[%247, %c0_111, %c0_112, %c0_113] : memref<2x4x8x8xbf16, #tpu.memory_space<vmem>>, vector<1x1x8x8xbf16>
      %249 = vector.shape_cast %248 : vector<1x1x8x8xbf16> to vector<8x8xbf16>
      %250 = vector.shape_cast %246 : vector<8x8xbf16> to vector<1x1x8x8xbf16>
      tpu.vector_store %arg17[%247, %c0_111, %c0_112, %c0_113], %250 {strides = array<i32>} : memref<2x4x8x8xbf16, #tpu.memory_space<vmem>>, vector<1x1x8x8xbf16>,
      %251 = vector.extract_strided_slice %244 {offsets = [0, 32], sizes = [8, 8], strides = [1, 1]} : vector<8x64xf32> to vector<8x8xf32>
      %252 = arith.truncf %251 : vector<8x8xf32> to vector<8x8xbf16>
      %253 = arith.index_cast %c1_i32_98 : i32 to index
      %c0_114 = arith.constant 0 : index
      %c0_115 = arith.constant 0 : index
      %c0_116 = arith.constant 0 : index
      %254 = vector.load %arg18[%253, %c0_114, %c0_115, %c0_116] : memref<2x4x8x8xbf16, #tpu.memory_space<vmem>>, vector<1x1x8x8xbf16>
      %255 = vector.shape_cast %254 : vector<1x1x8x8xbf16> to vector<8x8xbf16>
      %256 = vector.shape_cast %252 : vector<8x8xbf16> to vector<1x1x8x8xbf16>
      tpu.vector_store %arg18[%253, %c0_114, %c0_115, %c0_116], %256 {strides = array<i32>} : memref<2x4x8x8xbf16, #tpu.memory_space<vmem>>, vector<1x1x8x8xbf16>,
      %257 = vector.extract_strided_slice %244 {offsets = [0, 8], sizes = [8, 8], strides = [1, 1]} : vector<8x64xf32> to vector<8x8xf32>
      %258 = arith.truncf %257 : vector<8x8xf32> to vector<8x8xbf16>
      %259 = arith.index_cast %c1_i32_98 : i32 to index
      %c1_117 = arith.constant 1 : index
      %c0_118 = arith.constant 0 : index
      %c0_119 = arith.constant 0 : index
      %260 = vector.load %arg17[%259, %c1_117, %c0_118, %c0_119] : memref<2x4x8x8xbf16, #tpu.memory_space<vmem>>, vector<1x1x8x8xbf16>
      %261 = vector.shape_cast %260 : vector<1x1x8x8xbf16> to vector<8x8xbf16>
      %262 = vector.shape_cast %258 : vector<8x8xbf16> to vector<1x1x8x8xbf16>
      tpu.vector_store %arg17[%259, %c1_117, %c0_118, %c0_119], %262 {strides = array<i32>} : memref<2x4x8x8xbf16, #tpu.memory_space<vmem>>, vector<1x1x8x8xbf16>,
      %263 = vector.extract_strided_slice %244 {offsets = [0, 40], sizes = [8, 8], strides = [1, 1]} : vector<8x64xf32> to vector<8x8xf32>
      %264 = arith.truncf %263 : vector<8x8xf32> to vector<8x8xbf16>
      %265 = arith.index_cast %c1_i32_98 : i32 to index
      %c1_120 = arith.constant 1 : index
      %c0_121 = arith.constant 0 : index
      %c0_122 = arith.constant 0 : index
      %266 = vector.load %arg18[%265, %c1_120, %c0_121, %c0_122] : memref<2x4x8x8xbf16, #tpu.memory_space<vmem>>, vector<1x1x8x8xbf16>
      %267 = vector.shape_cast %266 : vector<1x1x8x8xbf16> to vector<8x8xbf16>
      %268 = vector.shape_cast %264 : vector<8x8xbf16> to vector<1x1x8x8xbf16>
      tpu.vector_store %arg18[%265, %c1_120, %c0_121, %c0_122], %268 {strides = array<i32>} : memref<2x4x8x8xbf16, #tpu.memory_space<vmem>>, vector<1x1x8x8xbf16>,
      %269 = vector.extract_strided_slice %244 {offsets = [0, 16], sizes = [8, 8], strides = [1, 1]} : vector<8x64xf32> to vector<8x8xf32>
      %270 = arith.truncf %269 : vector<8x8xf32> to vector<8x8xbf16>
      %271 = arith.index_cast %c1_i32_98 : i32 to index
      %c2_123 = arith.constant 2 : index
      %c0_124 = arith.constant 0 : index
      %c0_125 = arith.constant 0 : index
      %272 = vector.load %arg17[%271, %c2_123, %c0_124, %c0_125] : memref<2x4x8x8xbf16, #tpu.memory_space<vmem>>, vector<1x1x8x8xbf16>
      %273 = vector.shape_cast %272 : vector<1x1x8x8xbf16> to vector<8x8xbf16>
      %274 = vector.shape_cast %270 : vector<8x8xbf16> to vector<1x1x8x8xbf16>
      tpu.vector_store %arg17[%271, %c2_123, %c0_124, %c0_125], %274 {strides = array<i32>} : memref<2x4x8x8xbf16, #tpu.memory_space<vmem>>, vector<1x1x8x8xbf16>,
      %275 = vector.extract_strided_slice %244 {offsets = [0, 48], sizes = [8, 8], strides = [1, 1]} : vector<8x64xf32> to vector<8x8xf32>
      %276 = arith.truncf %275 : vector<8x8xf32> to vector<8x8xbf16>
      %277 = arith.index_cast %c1_i32_98 : i32 to index
      %c2_126 = arith.constant 2 : index
      %c0_127 = arith.constant 0 : index
      %c0_128 = arith.constant 0 : index
      %278 = vector.load %arg18[%277, %c2_126, %c0_127, %c0_128] : memref<2x4x8x8xbf16, #tpu.memory_space<vmem>>, vector<1x1x8x8xbf16>
      %279 = vector.shape_cast %278 : vector<1x1x8x8xbf16> to vector<8x8xbf16>
      %280 = vector.shape_cast %276 : vector<8x8xbf16> to vector<1x1x8x8xbf16>
      tpu.vector_store %arg18[%277, %c2_126, %c0_127, %c0_128], %280 {strides = array<i32>} : memref<2x4x8x8xbf16, #tpu.memory_space<vmem>>, vector<1x1x8x8xbf16>,
      %281 = vector.extract_strided_slice %244 {offsets = [0, 24], sizes = [8, 8], strides = [1, 1]} : vector<8x64xf32> to vector<8x8xf32>
      %282 = arith.truncf %281 : vector<8x8xf32> to vector<8x8xbf16>
      %283 = arith.index_cast %c1_i32_98 : i32 to index
      %c3_129 = arith.constant 3 : index
      %c0_130 = arith.constant 0 : index
      %c0_131 = arith.constant 0 : index
      %284 = vector.load %arg17[%283, %c3_129, %c0_130, %c0_131] : memref<2x4x8x8xbf16, #tpu.memory_space<vmem>>, vector<1x1x8x8xbf16>
      %285 = vector.shape_cast %284 : vector<1x1x8x8xbf16> to vector<8x8xbf16>
      %286 = vector.shape_cast %282 : vector<8x8xbf16> to vector<1x1x8x8xbf16>
      tpu.vector_store %arg17[%283, %c3_129, %c0_130, %c0_131], %286 {strides = array<i32>} : memref<2x4x8x8xbf16, #tpu.memory_space<vmem>>, vector<1x1x8x8xbf16>,
      %287 = vector.extract_strided_slice %244 {offsets = [0, 56], sizes = [8, 8], strides = [1, 1]} : vector<8x64xf32> to vector<8x8xf32>
      %288 = arith.truncf %287 : vector<8x8xf32> to vector<8x8xbf16>
      %289 = arith.index_cast %c1_i32_98 : i32 to index
      %c3_132 = arith.constant 3 : index
      %c0_133 = arith.constant 0 : index
      %c0_134 = arith.constant 0 : index
      %290 = vector.load %arg18[%289, %c3_132, %c0_133, %c0_134] : memref<2x4x8x8xbf16, #tpu.memory_space<vmem>>, vector<1x1x8x8xbf16>
      %291 = vector.shape_cast %290 : vector<1x1x8x8xbf16> to vector<8x8xbf16>
      %292 = vector.shape_cast %288 : vector<8x8xbf16> to vector<1x1x8x8xbf16>
      tpu.vector_store %arg18[%289, %c3_132, %c0_133, %c0_134], %292 {strides = array<i32>} : memref<2x4x8x8xbf16, #tpu.memory_space<vmem>>, vector<1x1x8x8xbf16>,
      %c2_i32_135 = arith.constant 2 : i32
    } else {
    }
    %c8_i32 = arith.constant 8 : i32
    %5 = arith.muli %arg1, %c8_i32 : i32
    %6 = tpu.assume_multiple %5, 8 : i32
    %c0_4 = arith.constant 0 : index
    %7 = arith.index_cast %6 : i32 to index
    %c0_5 = arith.constant 0 : index
    %8 = vector.load %arg2[%c0_4, %7, %c0_5] : memref<1x16x32xbf16, #tpu.memory_space<vmem>>, vector<1x8x32xbf16>
    %9 = vector.shape_cast %8 : vector<1x8x32xbf16> to vector<8x32xbf16>
    %10 = arith.extf %9 : vector<8x32xbf16> to vector<8x32xf32>
    %11 = arith.index_cast %6 : i32 to index
    %c0_6 = arith.constant 0 : index
    %12 = vector.load %arg16[%11, %c0_6] : memref<16x32xbf16, #tpu.memory_space<vmem>>, vector<8x32xbf16>
    %c0_7 = arith.constant 0 : index
    %c0_8 = arith.constant 0 : index
    %13 = vector.load %arg5[%c0_7, %c0_8] : memref<32x32xbf16, #tpu.memory_space<vmem>>, vector<32x32xbf16>
    %cst = arith.constant dense<0.000000e+00> : vector<8x32xf32>
    %14 = tpu.matmul %12, %13, %cst {dimension_numbers = #tpu.dot_dimension_numbers<[1], [0], [0], [1], [0, 0, 1, 1], [], []>} : vector<8x32xbf16>, vector<32x32xbf16>, vector<8x32xf32> -> vector<8x32xf32>
    %cst_9 = arith.constant 0.353553385 : f32
    %15 = vector.broadcast %cst_9 : f32 to vector<8x32xf32>
    %16 = arith.mulf %14, %15 : vector<8x32xf32>
    %17 = arith.truncf %16 : vector<8x32xf32> to vector<8x32xbf16>
    %18 = vector.extract_strided_slice %17 {offsets = [0, 0], sizes = [8, 8], strides = [1, 1]} : vector<8x32xbf16> to vector<8x8xbf16>
    %19 = vector.extract_strided_slice %17 {offsets = [0, 8], sizes = [8, 8], strides = [1, 1]} : vector<8x32xbf16> to vector<8x8xbf16>
    %20 = vector.extract_strided_slice %17 {offsets = [0, 16], sizes = [8, 8], strides = [1, 1]} : vector<8x32xbf16> to vector<8x8xbf16>
    %21 = vector.extract_strided_slice %17 {offsets = [0, 24], sizes = [8, 8], strides = [1, 1]} : vector<8x32xbf16> to vector<8x8xbf16>
    %22 = vector.shape_cast %18 : vector<8x8xbf16> to vector<1x8x8xbf16>
    %23 = vector.shape_cast %19 : vector<8x8xbf16> to vector<1x8x8xbf16>
    %24 = vector.shape_cast %20 : vector<8x8xbf16> to vector<1x8x8xbf16>
    %25 = vector.shape_cast %21 : vector<8x8xbf16> to vector<1x8x8xbf16>
    %26 = tpu.concatenate %22, %23, %24, %25 in 0 : vector<1x8x8xbf16>, vector<1x8x8xbf16>, vector<1x8x8xbf16>, vector<1x8x8xbf16> -> vector<4x8x8xbf16>
    %cst_10 = arith.constant 0xFF800000 : f32
    %27 = vector.broadcast %cst_10 : f32 to vector<4x8x1xf32>
    %cst_11 = arith.constant 0.000000e+00 : f32
    %28 = vector.broadcast %cst_11 : f32 to vector<4x8x1xf32>
    %cst_12 = arith.constant 0.000000e+00 : f32
    %29 = vector.broadcast %cst_12 : f32 to vector<4x8x8xf32>
    %c0_i32_13 = arith.constant 0 : i32
    %30 = arith.index_cast %c0_i32_13 : i32 to index
    %c0_14 = arith.constant 0 : index
    %c0_15 = arith.constant 0 : index
    %c0_16 = arith.constant 0 : index
    %31 = vector.load %arg17[%30, %c0_14, %c0_15, %c0_16] : memref<2x4x8x8xbf16, #tpu.memory_space<vmem>>, vector<1x4x8x8xbf16>
    %32 = vector.shape_cast %31 : vector<1x4x8x8xbf16> to vector<4x8x8xbf16>
    %33 = arith.index_cast %c0_i32_13 : i32 to index
    %c0_17 = arith.constant 0 : index
    %c0_18 = arith.constant 0 : index
    %c0_19 = arith.constant 0 : index
    %34 = vector.load %arg18[%33, %c0_17, %c0_18, %c0_19] : memref<2x4x8x8xbf16, #tpu.memory_space<vmem>>, vector<1x4x8x8xbf16>
    %35 = vector.shape_cast %34 : vector<1x4x8x8xbf16> to vector<4x8x8xbf16>
    "tpu.trace_start"() <{level = 10 : i32, message = "hqd,hkd->hqk"}> : () -> ()
    %cst_20 = arith.constant dense<0.000000e+00> : vector<4x8x8xf32>
    %36 = tpu.matmul %26, %32, %cst_20 {dimension_numbers = #tpu.dot_dimension_numbers<[2], [2], [1], [1], [0, 0, 0, 1, 1, 1], [0], [0]>} : vector<4x8x8xbf16>, vector<4x8x8xbf16>, vector<4x8x8xf32> -> vector<4x8x8xf32>
    "tpu.trace_stop"() : () -> ()
    %cst_21 = arith.constant dense<0xFF800000> : vector<4x8xf32>
    %37 = vector.multi_reduction <maximumf>, %36, %cst_21 [2] : vector<4x8x8xf32> to vector<4x8xf32>
    %38 = vector.shape_cast %37 : vector<4x8xf32> to vector<4x8x1xf32>
    %39 = arith.maximumf %27, %38 : vector<4x8x1xf32>
    %40 = arith.subf %27, %39 : vector<4x8x1xf32>
    %41 = math.exp %40 : vector<4x8x1xf32>
    %42 = vector.broadcast %39 : vector<4x8x1xf32> to vector<4x8x8xf32>
    %43 = arith.subf %36, %42 : vector<4x8x8xf32>
    %44 = math.exp %43 : vector<4x8x8xf32>
    %cst_22 = arith.constant dense<0.000000e+00> : vector<4x8xf32>
    %45 = vector.multi_reduction <add>, %44, %cst_22 [2] : vector<4x8x8xf32> to vector<4x8xf32>
    %46 = vector.shape_cast %45 : vector<4x8xf32> to vector<4x8x1xf32>
    %47 = arith.truncf %44 : vector<4x8x8xf32> to vector<4x8x8xbf16>
    %48 = arith.mulf %41, %28 : vector<4x8x1xf32>
    %49 = arith.addf %48, %46 : vector<4x8x1xf32>
    %50 = vector.broadcast %41 : vector<4x8x1xf32> to vector<4x8x8xf32>
    %51 = arith.mulf %50, %29 : vector<4x8x8xf32>
    "tpu.trace_start"() <{level = 10 : i32, message = "hqk,hkd->hqd"}> : () -> ()
    %cst_23 = arith.constant dense<0.000000e+00> : vector<4x8x8xf32>
    %52 = tpu.matmul %47, %35, %cst_23 {dimension_numbers = #tpu.dot_dimension_numbers<[2], [1], [1], [2], [0, 0, 0, 1, 1, 2], [0], [0]>} : vector<4x8x8xbf16>, vector<4x8x8xbf16>, vector<4x8x8xf32> -> vector<4x8x8xf32>
    "tpu.trace_stop"() : () -> ()
    %53 = arith.addf %51, %52 : vector<4x8x8xf32>
    %c1_i32 = arith.constant 1 : i32
    %54 = arith.index_cast %c1_i32 : i32 to index
    %c0_24 = arith.constant 0 : index
    %c0_25 = arith.constant 0 : index
    %c0_26 = arith.constant 0 : index
    %55 = vector.load %arg17[%54, %c0_24, %c0_25, %c0_26] : memref<2x4x8x8xbf16, #tpu.memory_space<vmem>>, vector<1x4x8x8xbf16>
    %56 = vector.shape_cast %55 : vector<1x4x8x8xbf16> to vector<4x8x8xbf16>
    %57 = arith.index_cast %c1_i32 : i32 to index
    %c0_27 = arith.constant 0 : index
    %c0_28 = arith.constant 0 : index
    %c0_29 = arith.constant 0 : index
    %58 = vector.load %arg18[%57, %c0_27, %c0_28, %c0_29] : memref<2x4x8x8xbf16, #tpu.memory_space<vmem>>, vector<1x4x8x8xbf16>
    %59 = vector.shape_cast %58 : vector<1x4x8x8xbf16> to vector<4x8x8xbf16>
    "tpu.trace_start"() <{level = 10 : i32, message = "hqd,hkd->hqk"}> : () -> ()
    %cst_30 = arith.constant dense<0.000000e+00> : vector<4x8x8xf32>
    %60 = tpu.matmul %26, %56, %cst_30 {dimension_numbers = #tpu.dot_dimension_numbers<[2], [2], [1], [1], [0, 0, 0, 1, 1, 1], [0], [0]>} : vector<4x8x8xbf16>, vector<4x8x8xbf16>, vector<4x8x8xf32> -> vector<4x8x8xf32>
    "tpu.trace_stop"() : () -> ()
    %cst_31 = arith.constant dense<0xFF800000> : vector<4x8xf32>
    %61 = vector.multi_reduction <maximumf>, %60, %cst_31 [2] : vector<4x8x8xf32> to vector<4x8xf32>
    %62 = vector.shape_cast %61 : vector<4x8xf32> to vector<4x8x1xf32>
    %63 = arith.maximumf %39, %62 : vector<4x8x1xf32>
    %64 = arith.subf %39, %63 : vector<4x8x1xf32>
    %65 = math.exp %64 : vector<4x8x1xf32>
    %66 = vector.broadcast %63 : vector<4x8x1xf32> to vector<4x8x8xf32>
    %67 = arith.subf %60, %66 : vector<4x8x8xf32>
    %68 = math.exp %67 : vector<4x8x8xf32>
    %cst_32 = arith.constant dense<0.000000e+00> : vector<4x8xf32>
    %69 = vector.multi_reduction <add>, %68, %cst_32 [2] : vector<4x8x8xf32> to vector<4x8xf32>
    %70 = vector.shape_cast %69 : vector<4x8xf32> to vector<4x8x1xf32>
    %71 = arith.truncf %68 : vector<4x8x8xf32> to vector<4x8x8xbf16>
    %72 = arith.mulf %65, %49 : vector<4x8x1xf32>
    %73 = arith.addf %72, %70 : vector<4x8x1xf32>
    %74 = vector.broadcast %65 : vector<4x8x1xf32> to vector<4x8x8xf32>
    %75 = arith.mulf %74, %53 : vector<4x8x8xf32>
    "tpu.trace_start"() <{level = 10 : i32, message = "hqk,hkd->hqd"}> : () -> ()
    %cst_33 = arith.constant dense<0.000000e+00> : vector<4x8x8xf32>
    %76 = tpu.matmul %71, %59, %cst_33 {dimension_numbers = #tpu.dot_dimension_numbers<[2], [1], [1], [2], [0, 0, 0, 1, 1, 2], [0], [0]>} : vector<4x8x8xbf16>, vector<4x8x8xbf16>, vector<4x8x8xf32> -> vector<4x8x8xf32>
    "tpu.trace_stop"() : () -> ()
    %77 = arith.addf %75, %76 : vector<4x8x8xf32>
    %c2_i32 = arith.constant 2 : i32
    %78 = tpu.reciprocal %73 {approx = true} : vector<4x8x1xf32> -> vector<4x8x1xf32>
    %79 = vector.broadcast %78 : vector<4x8x1xf32> to vector<4x8x8xf32>
    %80 = arith.mulf %77, %79 : vector<4x8x8xf32>
    %81 = arith.truncf %80 : vector<4x8x8xf32> to vector<4x8x8xbf16>
    %c0_34 = arith.constant 0 : index
    %c0_35 = arith.constant 0 : index
    %c0_36 = arith.constant 0 : index
    %82 = vector.load %arg7[%c0_34, %c0_35, %c0_36] : memref<4x8x32xbf16, #tpu.memory_space<vmem>>, vector<4x8x32xbf16>
    "tpu.trace_start"() <{level = 10 : i32, message = "hqd,hdc->hqc"}> : () -> ()
    %cst_37 = arith.constant dense<0.000000e+00> : vector<4x8x32xf32>
    %83 = tpu.matmul %81, %82, %cst_37 {dimension_numbers = #tpu.dot_dimension_numbers<[2], [1], [1], [2], [0, 0, 0, 1, 1, 2], [0], [0]>} : vector<4x8x8xbf16>, vector<4x8x32xbf16>, vector<4x8x32xf32> -> vector<4x8x32xf32>
    "tpu.trace_stop"() : () -> ()
    %cst_38 = arith.constant dense<0.000000e+00> : vector<8x32xf32>
    %84 = vector.multi_reduction <add>, %83, %cst_38 [0] : vector<4x8x32xf32> to vector<8x32xf32>
    %c0_39 = arith.constant 0 : index
    %c0_40 = arith.constant 0 : index
    %85 = vector.load %arg8[%c0_39, %c0_40] : memref<1x32xf32, #tpu.memory_space<vmem>>, vector<1x32xf32>
    %86 = vector.broadcast %85 : vector<1x32xf32> to vector<8x32xf32>
    %87 = arith.addf %84, %86 : vector<8x32xf32>
    %88 = arith.addf %10, %87 : vector<8x32xf32>
    %c0_41 = arith.constant 0 : index
    %c0_42 = arith.constant 0 : index
    %89 = vector.load %arg9[%c0_41, %c0_42] : memref<1x32xf32, #tpu.memory_space<vmem>>, vector<1x32xf32>
    %c0_43 = arith.constant 0 : index
    %c0_44 = arith.constant 0 : index
    %90 = vector.load %arg10[%c0_43, %c0_44] : memref<1x32xf32, #tpu.memory_space<vmem>>, vector<1x32xf32>
    %cst_45 = arith.constant dense<0.000000e+00> : vector<8xf32>
    %91 = vector.multi_reduction <add>, %88, %cst_45 [1] : vector<8x32xf32> to vector<8xf32>
    %92 = vector.shape_cast %91 : vector<8xf32> to vector<8x1xf32>
    %cst_46 = arith.constant 3.200000e+01 : f32
    %93 = vector.broadcast %cst_46 : f32 to vector<8x1xf32>
    %94 = arith.divf %92, %93 : vector<8x1xf32>
    %95 = vector.broadcast %94 : vector<8x1xf32> to vector<8x32xf32>
    %96 = arith.subf %88, %95 : vector<8x32xf32>
    %97 = arith.mulf %96, %96 : vector<8x32xf32>
    %cst_47 = arith.constant dense<0.000000e+00> : vector<8xf32>
    %98 = vector.multi_reduction <add>, %97, %cst_47 [1] : vector<8x32xf32> to vector<8xf32>
    %99 = vector.shape_cast %98 : vector<8xf32> to vector<8x1xf32>
    %cst_48 = arith.constant 3.200000e+01 : f32
    %100 = vector.broadcast %cst_48 : f32 to vector<8x1xf32>
    %101 = arith.divf %99, %100 : vector<8x1xf32>
    %102 = vector.broadcast %94 : vector<8x1xf32> to vector<8x32xf32>
    %103 = arith.subf %88, %102 : vector<8x32xf32>
    %cst_49 = arith.constant 9.99999974E-6 : f32
    %104 = vector.broadcast %cst_49 : f32 to vector<8x1xf32>
    %105 = arith.addf %101, %104 : vector<8x1xf32>
    %106 = math.rsqrt %105 : vector<8x1xf32>
    %107 = vector.broadcast %106 : vector<8x1xf32> to vector<8x32xf32>
    %108 = arith.mulf %103, %107 : vector<8x32xf32>
    %109 = vector.broadcast %89 : vector<1x32xf32> to vector<8x32xf32>
    %110 = arith.mulf %108, %109 : vector<8x32xf32>
    %111 = vector.broadcast %90 : vector<1x32xf32> to vector<8x32xf32>
    %112 = arith.addf %110, %111 : vector<8x32xf32>
    %113 = arith.truncf %112 : vector<8x32xf32> to vector<8x32xbf16>
    %c0_50 = arith.constant 0 : index
    %c0_51 = arith.constant 0 : index
    %114 = vector.load %arg11[%c0_50, %c0_51] : memref<32x128xbf16, #tpu.memory_space<vmem>>, vector<32x128xbf16>
    %cst_52 = arith.constant dense<0.000000e+00> : vector<8x128xf32>
    %115 = tpu.matmul %113, %114, %cst_52 {dimension_numbers = #tpu.dot_dimension_numbers<[1], [0], [0], [1], [0, 0, 1, 1], [], []>} : vector<8x32xbf16>, vector<32x128xbf16>, vector<8x128xf32> -> vector<8x128xf32>
    %c0_53 = arith.constant 0 : index
    %c0_54 = arith.constant 0 : index
    %116 = vector.load %arg12[%c0_53, %c0_54] : memref<1x128xf32, #tpu.memory_space<vmem>>, vector<1x128xf32>
    %117 = vector.broadcast %116 : vector<1x128xf32> to vector<8x128xf32>
    %118 = arith.addf %115, %117 : vector<8x128xf32>
    %cst_55 = arith.constant 0.000000e+00 : f32
    %119 = vector.broadcast %cst_55 : f32 to vector<8x128xf32>
    %120 = arith.maximumf %118, %119 : vector<8x128xf32>
    %121 = arith.truncf %120 : vector<8x128xf32> to vector<8x128xbf16>
    %c0_56 = arith.constant 0 : index
    %c0_57 = arith.constant 0 : index
    %122 = vector.load %arg13[%c0_56, %c0_57] : memref<128x32xbf16, #tpu.memory_space<vmem>>, vector<128x32xbf16>
    %cst_58 = arith.constant dense<0.000000e+00> : vector<8x32xf32>
    %123 = tpu.matmul %121, %122, %cst_58 {dimension_numbers = #tpu.dot_dimension_numbers<[1], [0], [0], [1], [0, 0, 1, 1], [], []>} : vector<8x128xbf16>, vector<128x32xbf16>, vector<8x32xf32> -> vector<8x32xf32>
    %c0_59 = arith.constant 0 : index
    %c0_60 = arith.constant 0 : index
    %124 = vector.load %arg14[%c0_59, %c0_60] : memref<1x32xf32, #tpu.memory_space<vmem>>, vector<1x32xf32>
    %125 = vector.broadcast %124 : vector<1x32xf32> to vector<8x32xf32>
    %126 = arith.addf %123, %125 : vector<8x32xf32>
    %127 = arith.addf %88, %126 : vector<8x32xf32>
    %c0_61 = arith.constant 0 : index
    %c0_62 = arith.constant 0 : index
    %c0_63 = arith.constant 0 : index
    %128 = vector.load %arg15[%c0_61, %c0_62, %c0_63] : memref<1x8x32xf32, #tpu.memory_space<vmem>>, vector<1x8x32xf32>
    %129 = vector.shape_cast %128 : vector<1x8x32xf32> to vector<8x32xf32>
    %130 = vector.shape_cast %127 : vector<8x32xf32> to vector<1x8x32xf32>
    tpu.vector_store %arg15[%c0_61, %c0_62, %c0_63], %130 {strides = array<i32>} : memref<1x8x32xf32, #tpu.memory_space<vmem>>, vector<1x8x32xf32>,
    return
  }
  func.func @transform_0(%arg0: i32, %arg1: i32) -> (i32, i32, i32) {
    %c0_i32 = arith.constant 0 : i32
    %c0_i32_0 = arith.constant 0 : i32
    %c0_i32_1 = arith.constant 0 : i32
    return %arg0, %c0_i32, %c0_i32_0 : i32, i32, i32
  }
  func.func @transform_1(%arg0: i32, %arg1: i32) -> (i32, i32) {
    %c0_i32 = arith.constant 0 : i32
    %c0_i32_0 = arith.constant 0 : i32
    %c0_i32_1 = arith.constant 0 : i32
    return %c0_i32, %c0_i32_0 : i32, i32
  }
  func.func @transform_2(%arg0: i32, %arg1: i32) -> (i32, i32) {
    %c0_i32 = arith.constant 0 : i32
    %c0_i32_0 = arith.constant 0 : i32
    %c0_i32_1 = arith.constant 0 : i32
    return %c0_i32, %c0_i32_0 : i32, i32
  }
  func.func @transform_3(%arg0: i32, %arg1: i32) -> (i32, i32) {
    %c0_i32 = arith.constant 0 : i32
    %c0_i32_0 = arith.constant 0 : i32
    %c0_i32_1 = arith.constant 0 : i32
    return %c0_i32, %c0_i32_0 : i32, i32
  }
  func.func @transform_4(%arg0: i32, %arg1: i32) -> (i32, i32) {
    %c0_i32 = arith.constant 0 : i32
    %c0_i32_0 = arith.constant 0 : i32
    %c0_i32_1 = arith.constant 0 : i32
    return %c0_i32, %c0_i32_0 : i32, i32
  }
  func.func @transform_5(%arg0: i32, %arg1: i32) -> (i32, i32, i32) {
    %c0_i32 = arith.constant 0 : i32
    %c0_i32_0 = arith.constant 0 : i32
    %c0_i32_1 = arith.constant 0 : i32
    %c0_i32_2 = arith.constant 0 : i32
    return %c0_i32, %c0_i32_0, %c0_i32_1 : i32, i32, i32
  }
  func.func @transform_6(%arg0: i32, %arg1: i32) -> (i32, i32) {
    %c0_i32 = arith.constant 0 : i32
    %c0_i32_0 = arith.constant 0 : i32
    %c0_i32_1 = arith.constant 0 : i32
    return %c0_i32, %c0_i32_0 : i32, i32
  }
  func.func @transform_7(%arg0: i32, %arg1: i32) -> (i32, i32) {
    %c0_i32 = arith.constant 0 : i32
    %c0_i32_0 = arith.constant 0 : i32
    %c0_i32_1 = arith.constant 0 : i32
    return %c0_i32, %c0_i32_0 : i32, i32
  }
  func.func @transform_8(%arg0: i32, %arg1: i32) -> (i32, i32) {
    %c0_i32 = arith.constant 0 : i32
    %c0_i32_0 = arith.constant 0 : i32
    %c0_i32_1 = arith.constant 0 : i32
    return %c0_i32, %c0_i32_0 : i32, i32
  }
  func.func @transform_9(%arg0: i32, %arg1: i32) -> (i32, i32) {
    %c0_i32 = arith.constant 0 : i32
    %c0_i32_0 = arith.constant 0 : i32
    %c0_i32_1 = arith.constant 0 : i32
    return %c0_i32, %c0_i32_0 : i32, i32
  }
  func.func @transform_10(%arg0: i32, %arg1: i32) -> (i32, i32) {
    %c0_i32 = arith.constant 0 : i32
    %c0_i32_0 = arith.constant 0 : i32
    %c0_i32_1 = arith.constant 0 : i32
    return %c0_i32, %c0_i32_0 : i32, i32
  }
  func.func @transform_11(%arg0: i32, %arg1: i32) -> (i32, i32) {
    %c0_i32 = arith.constant 0 : i32
    %c0_i32_0 = arith.constant 0 : i32
    %c0_i32_1 = arith.constant 0 : i32
    return %c0_i32, %c0_i32_0 : i32, i32
  }
  func.func @transform_12(%arg0: i32, %arg1: i32) -> (i32, i32) {
    %c0_i32 = arith.constant 0 : i32
    %c0_i32_0 = arith.constant 0 : i32
    %c0_i32_1 = arith.constant 0 : i32
    return %c0_i32, %c0_i32_0 : i32, i32
  }
  func.func @transform_13(%arg0: i32, %arg1: i32) -> (i32, i32, i32) {
    %c0_i32 = arith.constant 0 : i32
    %c0_i32_0 = arith.constant 0 : i32
    return %arg0, %arg1, %c0_i32 : i32, i32, i32
  }
}

</mosaic_0001>

<llo_original>
// kernel: tpu_custom_call.1
$region0: #{tpu_custom_call.1}
  #allocation0 [shape = 'u32[]', space=smem, size = 0x4, offset = 0x4, fixed_abs, tag = 'smem constant byte address 0x4 - core index']
  #allocation1 [shape = 'u32[72,128]{1,0:T(1,128)}', space=vmem, size = 0x9000, scoped, tag = 'internal scratch']
  #allocation2 [shape = 'bf16[16,32]{1,0:T(8,128)(2,1)}', space=vmem, size = 0x1000, scoped, tag = 'scratch operand']
  #allocation3 [shape = 'bf16[2,4,8,8]{3,2,1,0:T(8,128)(2,1)}', space=vmem, size = 0x4000, scoped, tag = 'scratch operand']
  #allocation4 [shape = 'bf16[2,4,8,8]{3,2,1,0:T(8,128)(2,1)}', space=vmem, size = 0x4000, scoped, tag = 'scratch operand']
  %s0 = inlined_call_operand.vmem [shape: bf16[2,16,32], index: 0, kind: input, shape index: {}]
  %s1 = inlined_call_operand.hbm [shape: f32[1,32], index: 1, kind: input, shape index: {}]
  %s2 = inlined_call_operand.vmem [shape: f32[1,32], index: 2, kind: input, shape index: {}]
  %s3 = inlined_call_operand.vmem [shape: bf16[32,32], index: 3, kind: input, shape index: {}]
  %s4 = inlined_call_operand.vmem [shape: bf16[32,64], index: 4, kind: input, shape index: {}]
  %s5 = inlined_call_operand.vmem [shape: bf16[32,32], index: 5, kind: input, shape index: {}]
  %s6 = inlined_call_operand.vmem [shape: f32[1,32], index: 6, kind: input, shape index: {}]
  %s7 = inlined_call_operand.vmem [shape: f32[1,32], index: 7, kind: input, shape index: {}]
  %s8 = inlined_call_operand.vmem [shape: f32[1,32], index: 8, kind: input, shape index: {}]
  %s9 = inlined_call_operand.vmem [shape: bf16[32,128], index: 9, kind: input, shape index: {}]
  %s10 = inlined_call_operand.vmem [shape: f32[1,128], index: 10, kind: input, shape index: {}]
  %s11 = inlined_call_operand.vmem [shape: bf16[128,32], index: 11, kind: input, shape index: {}]
  %s12 = inlined_call_operand.vmem [shape: f32[1,32], index: 12, kind: input, shape index: {}]
  %s13 = inlined_call_operand.hbm [shape: f32[2,16,32], index: 13, kind: output, shape index: {}]
  %s14 = sld [smem:[#allocation0]]
  $region93: #{tpu_custom_call.1} parent=0
    _
  %s16 = ssub.s32 1, %s14
  %s17 = scalar_select 0, %s16, %s14
  $region1: #{tpu_custom_call.1} parent=0
    #allocation5 [shape = 'u8[512]{0}', space=vmem, size = 0x400, scoped, tag = 'input window, operand 1, single buffered']
    #allocation6 [shape = 's32[2]{0}', space=sflag, size = 0x8, scoped, tag = 'scoped memory for tpu_custom_call.1']
    #allocation7 [shape = 's32[2]{0}', space=sflag, size = 0x8, scoped, tag = 'scoped memory for tpu_custom_call.1']
    #allocation8 [shape = 'u8[8192]{0}', space=vmem, size = 0x2000, scoped, tag = 'output window, operand 0']
    %18 = vsyncpa [#allocation6], 0
    %19 = vsyncpa [#allocation7], 0
    %s20 = scalar_lea.sflag [#allocation7], 1
    %21 = vsyncpa %s20, 0
    loop: start=0, step=1, limit=6
    $region2: #{tpu_custom_call.1} parent=1 // loop_pre_header
      _
    $region3: #{tpu_custom_call.1} parent=1 // loop_header
      %s23 = sphi 0, %s27
      %p24 = scmp.ge.s32.totalorder %s23, 6
      %s30 = sphi 0, %s42
      %s31 = sphi 0, %s38
      %s32 = sphi 0, %s30
      %s33 = sphi 0, %s31
      %s34 = sphi 0, %s32
      %s35 = sphi 0, %s33
      %s45 = sphi 0, %s47
      %s48 = sphi 0, %s45
      %s49 = sphi 0, %s48
      %s65 = sphi 0, %s49
      %s69 = sphi 0, %s69
      %s71 = sphi 0, %s69
      %s72 = sphi 0, %s71
      %s86 = sphi 0, %s72
      %s90 = sphi 0, %s90
      %s92 = sphi 0, %s90
      %s93 = sphi 0, %s92
      %s107 = sphi 0, %s93
      %s111 = sphi 0, %s111
      %s113 = sphi 0, %s111
      %s114 = sphi 0, %s113
      %s128 = sphi 0, %s114
      %s132 = sphi 0, %s132
      %s134 = sphi 0, %s132
      %s135 = sphi 0, %s134
      %s149 = sphi 0, %s135
      %s153 = sphi 0, %s153
      %s155 = sphi 0, %s153
      %s156 = sphi 0, %s155
      %s170 = sphi 0, %s156
      %s174 = sphi 0, %s174
      %s176 = sphi 0, %s174
      %s177 = sphi 0, %s176
      %s191 = sphi 0, %s177
      %s195 = sphi 0, %s195
      %s197 = sphi 0, %s195
      %s198 = sphi 0, %s197
      %s212 = sphi 0, %s198
      %s216 = sphi 0, %s216
      %s218 = sphi 0, %s216
      %s219 = sphi 0, %s218
      %s233 = sphi 0, %s219
      %s237 = sphi 0, %s237
      %s239 = sphi 0, %s237
      %s240 = sphi 0, %s239
      %s254 = sphi 0, %s240
      %s258 = sphi 0, %s258
      %s260 = sphi 0, %s258
      %s261 = sphi 0, %s260
      %s275 = sphi 0, %s261
      %s279 = sphi 0, %s279
      %s281 = sphi 0, %s279
      %s282 = sphi 0, %s281
      %s296 = sphi 0, %s282
      %s300 = sphi 0, %s300
      %s302 = sphi 0, %s300
      %s303 = sphi 0, %s302
      %s317 = sphi 0, %s303
      %s325 = sphi 0, %s327
      %s328 = sphi 0, %s325
      %s329 = sphi 0, %s328
      %s345 = sphi 0, %s329
    $region4: #{tpu_custom_call.1} parent=1 // loop_header_branch
      %26 = sbr.rel (%p24) target = $region8
    $region5: #{tpu_custom_call.1} parent=1 // loop_body
      %s28 = ssub.s32 %s23, 1
      %s29 = ssub.s32 %s23, 2
      %s36 = sadd.s32 1, %s31
      %p37 = scmp.ge.s32.totalorder %s36, 2
      %s38 = scalar_select %p37, 0, %s36
      %s39 = sadd.s32 1, %s30
      %s40 = scalar_select %p37, %s39, %s30
      %p41 = scmp.ge.s32.totalorder %s40, 2
      %s42 = scalar_select %p41, 0, %s40
      %s43 = ssub.s32 %s30, %s42
      %p44 = scmp.eq.s32.totalorder %s43, 0
      %s46 = sadd.s32 %s45, 1
      %s47 = scalar_select %p44, %s45, %s46
      %p50 = pneg %p44
      %p51 = scmp.eq.s32.totalorder %s23, 3
      %p52 = por %p50, %p51
      %p53 = scmp.ne.s32.totalorder %s45, %s48
      %p54 = scmp.eq.s32.totalorder %s23, 0
      %p55 = por %p53, %p54
      %p56 = scmp.ne.s32.totalorder %s45, %s48
      %p57 = scmp.eq.s32.totalorder %s28, 3
      %p58 = por %p56, %p57
      %p59 = scmp.ne.s32.totalorder %s48, %s49
      %p60 = scmp.eq.s32.totalorder %s28, 0
      %p61 = por %p59, %p60
      %p62 = scmp.ne.s32.totalorder %s48, %s49
      %p63 = scmp.eq.s32.totalorder %s29, 3
      %p64 = por %p62, %p63
      %p66 = scmp.ne.s32.totalorder %s49, %s65
      %p67 = scmp.eq.s32.totalorder %s29, 0
      %p68 = por %p66, %p67
      %s70 = sadd.s32 %s69, 1
      %p73 = scmp.eq.s32.totalorder %s23, 3
      %p74 = scmp.ne.s32.totalorder %s69, %s71
      %p75 = scmp.eq.s32.totalorder %s23, 0
      %p76 = por %p74, %p75
      %p77 = scmp.ne.s32.totalorder %s69, %s71
      %p78 = scmp.eq.s32.totalorder %s28, 3
      %p79 = por %p77, %p78
      %p80 = scmp.ne.s32.totalorder %s71, %s72
      %p81 = scmp.eq.s32.totalorder %s28, 0
      %p82 = por %p80, %p81
      %p83 = scmp.ne.s32.totalorder %s71, %s72
      %p84 = scmp.eq.s32.totalorder %s29, 3
      %p85 = por %p83, %p84
      %p87 = scmp.ne.s32.totalorder %s72, %s86
      %p88 = scmp.eq.s32.totalorder %s29, 0
      %p89 = por %p87, %p88
      %s91 = sadd.s32 %s90, 1
      %p94 = scmp.eq.s32.totalorder %s23, 3
      %p95 = scmp.ne.s32.totalorder %s90, %s92
      %p96 = scmp.eq.s32.totalorder %s23, 0
      %p97 = por %p95, %p96
      %p98 = scmp.ne.s32.totalorder %s90, %s92
      %p99 = scmp.eq.s32.totalorder %s28, 3
      %p100 = por %p98, %p99
      %p101 = scmp.ne.s32.totalorder %s92, %s93
      %p102 = scmp.eq.s32.totalorder %s28, 0
      %p103 = por %p101, %p102
      %p104 = scmp.ne.s32.totalorder %s92, %s93
      %p105 = scmp.eq.s32.totalorder %s29, 3
      %p106 = por %p104, %p105
      %p108 = scmp.ne.s32.totalorder %s93, %s107
      %p109 = scmp.eq.s32.totalorder %s29, 0
      %p110 = por %p108, %p109
      %s112 = sadd.s32 %s111, 1
      %p115 = scmp.eq.s32.totalorder %s23, 3
      %p116 = scmp.ne.s32.totalorder %s111, %s113
      %p117 = scmp.eq.s32.totalorder %s23, 0
      %p118 = por %p116, %p117
      %p119 = scmp.ne.s32.totalorder %s111, %s113
      %p120 = scmp.eq.s32.totalorder %s28, 3
      %p121 = por %p119, %p120
      %p122 = scmp.ne.s32.totalorder %s113, %s114
      %p123 = scmp.eq.s32.totalorder %s28, 0
      %p124 = por %p122, %p123
      %p125 = scmp.ne.s32.totalorder %s113, %s114
      %p126 = scmp.eq.s32.totalorder %s29, 3
      %p127 = por %p125, %p126
      %p129 = scmp.ne.s32.totalorder %s114, %s128
      %p130 = scmp.eq.s32.totalorder %s29, 0
      %p131 = por %p129, %p130
      %s133 = sadd.s32 %s132, 1
      %p136 = scmp.eq.s32.totalorder %s23, 3
      %p137 = scmp.ne.s32.totalorder %s132, %s134
      %p138 = scmp.eq.s32.totalorder %s23, 0
      %p139 = por %p137, %p138
      %p140 = scmp.ne.s32.totalorder %s132, %s134
      %p141 = scmp.eq.s32.totalorder %s28, 3
      %p142 = por %p140, %p141
      %p143 = scmp.ne.s32.totalorder %s134, %s135
      %p144 = scmp.eq.s32.totalorder %s28, 0
      %p145 = por %p143, %p144
      %p146 = scmp.ne.s32.totalorder %s134, %s135
      %p147 = scmp.eq.s32.totalorder %s29, 3
      %p148 = por %p146, %p147
      %p150 = scmp.ne.s32.totalorder %s135, %s149
      %p151 = scmp.eq.s32.totalorder %s29, 0
      %p152 = por %p150, %p151
      %s154 = sadd.s32 %s153, 1
      %p157 = scmp.eq.s32.totalorder %s23, 3
      %p158 = scmp.ne.s32.totalorder %s153, %s155
      %p159 = scmp.eq.s32.totalorder %s23, 0
      %p160 = por %p158, %p159
      %p161 = scmp.ne.s32.totalorder %s153, %s155
      %p162 = scmp.eq.s32.totalorder %s28, 3
      %p163 = por %p161, %p162
      %p164 = scmp.ne.s32.totalorder %s155, %s156
      %p165 = scmp.eq.s32.totalorder %s28, 0
      %p166 = por %p164, %p165
      %p167 = scmp.ne.s32.totalorder %s155, %s156
      %p168 = scmp.eq.s32.totalorder %s29, 3
      %p169 = por %p167, %p168
      %p171 = scmp.ne.s32.totalorder %s156, %s170
      %p172 = scmp.eq.s32.totalorder %s29, 0
      %p173 = por %p171, %p172
      %s175 = sadd.s32 %s174, 1
      %p178 = scmp.eq.s32.totalorder %s23, 3
      %p179 = scmp.ne.s32.totalorder %s174, %s176
      %p180 = scmp.eq.s32.totalorder %s23, 0
      %p181 = por %p179, %p180
      %p182 = scmp.ne.s32.totalorder %s174, %s176
      %p183 = scmp.eq.s32.totalorder %s28, 3
      %p184 = por %p182, %p183
      %p185 = scmp.ne.s32.totalorder %s176, %s177
      %p186 = scmp.eq.s32.totalorder %s28, 0
      %p187 = por %p185, %p186
      %p188 = scmp.ne.s32.totalorder %s176, %s177
      %p189 = scmp.eq.s32.totalorder %s29, 3
      %p190 = por %p188, %p189
      %p192 = scmp.ne.s32.totalorder %s177, %s191
      %p193 = scmp.eq.s32.totalorder %s29, 0
      %p194 = por %p192, %p193
      %s196 = sadd.s32 %s195, 1
      %p199 = scmp.eq.s32.totalorder %s23, 3
      %p200 = scmp.ne.s32.totalorder %s195, %s197
      %p201 = scmp.eq.s32.totalorder %s23, 0
      %p202 = por %p200, %p201
      %p203 = scmp.ne.s32.totalorder %s195, %s197
      %p204 = scmp.eq.s32.totalorder %s28, 3
      %p205 = por %p203, %p204
      %p206 = scmp.ne.s32.totalorder %s197, %s198
      %p207 = scmp.eq.s32.totalorder %s28, 0
      %p208 = por %p206, %p207
      %p209 = scmp.ne.s32.totalorder %s197, %s198
      %p210 = scmp.eq.s32.totalorder %s29, 3
      %p211 = por %p209, %p210
      %p213 = scmp.ne.s32.totalorder %s198, %s212
      %p214 = scmp.eq.s32.totalorder %s29, 0
      %p215 = por %p213, %p214
      %s217 = sadd.s32 %s216, 1
      %p220 = scmp.eq.s32.totalorder %s23, 3
      %p221 = scmp.ne.s32.totalorder %s216, %s218
      %p222 = scmp.eq.s32.totalorder %s23, 0
      %p223 = por %p221, %p222
      %p224 = scmp.ne.s32.totalorder %s216, %s218
      %p225 = scmp.eq.s32.totalorder %s28, 3
      %p226 = por %p224, %p225
      %p227 = scmp.ne.s32.totalorder %s218, %s219
      %p228 = scmp.eq.s32.totalorder %s28, 0
      %p229 = por %p227, %p228
      %p230 = scmp.ne.s32.totalorder %s218, %s219
      %p231 = scmp.eq.s32.totalorder %s29, 3
      %p232 = por %p230, %p231
      %p234 = scmp.ne.s32.totalorder %s219, %s233
      %p235 = scmp.eq.s32.totalorder %s29, 0
      %p236 = por %p234, %p235
      %s238 = sadd.s32 %s237, 1
      %p241 = scmp.eq.s32.totalorder %s23, 3
      %p242 = scmp.ne.s32.totalorder %s237, %s239
      %p243 = scmp.eq.s32.totalorder %s23, 0
      %p244 = por %p242, %p243
      %p245 = scmp.ne.s32.totalorder %s237, %s239
      %p246 = scmp.eq.s32.totalorder %s28, 3
      %p247 = por %p245, %p246
      %p248 = scmp.ne.s32.totalorder %s239, %s240
      %p249 = scmp.eq.s32.totalorder %s28, 0
      %p250 = por %p248, %p249
      %p251 = scmp.ne.s32.totalorder %s239, %s240
      %p252 = scmp.eq.s32.totalorder %s29, 3
      %p253 = por %p251, %p252
      %p255 = scmp.ne.s32.totalorder %s240, %s254
      %p256 = scmp.eq.s32.totalorder %s29, 0
      %p257 = por %p255, %p256
      %s259 = sadd.s32 %s258, 1
      %p262 = scmp.eq.s32.totalorder %s23, 3
      %p263 = scmp.ne.s32.totalorder %s258, %s260
      %p264 = scmp.eq.s32.totalorder %s23, 0
      %p265 = por %p263, %p264
      %p266 = scmp.ne.s32.totalorder %s258, %s260
      %p267 = scmp.eq.s32.totalorder %s28, 3
      %p268 = por %p266, %p267
      %p269 = scmp.ne.s32.totalorder %s260, %s261
      %p270 = scmp.eq.s32.totalorder %s28, 0
      %p271 = por %p269, %p270
      %p272 = scmp.ne.s32.totalorder %s260, %s261
      %p273 = scmp.eq.s32.totalorder %s29, 3
      %p274 = por %p272, %p273
      %p276 = scmp.ne.s32.totalorder %s261, %s275
      %p277 = scmp.eq.s32.totalorder %s29, 0
      %p278 = por %p276, %p277
      %s280 = sadd.s32 %s279, 1
      %p283 = scmp.eq.s32.totalorder %s23, 3
      %p284 = scmp.ne.s32.totalorder %s279, %s281
      %p285 = scmp.eq.s32.totalorder %s23, 0
      %p286 = por %p284, %p285
      %p287 = scmp.ne.s32.totalorder %s279, %s281
      %p288 = scmp.eq.s32.totalorder %s28, 3
      %p289 = por %p287, %p288
      %p290 = scmp.ne.s32.totalorder %s281, %s282
      %p291 = scmp.eq.s32.totalorder %s28, 0
      %p292 = por %p290, %p291
      %p293 = scmp.ne.s32.totalorder %s281, %s282
      %p294 = scmp.eq.s32.totalorder %s29, 3
      %p295 = por %p293, %p294
      %p297 = scmp.ne.s32.totalorder %s282, %s296
      %p298 = scmp.eq.s32.totalorder %s29, 0
      %p299 = por %p297, %p298
      %s301 = sadd.s32 %s300, 1
      %p304 = scmp.eq.s32.totalorder %s23, 3
      %p305 = scmp.ne.s32.totalorder %s300, %s302
      %p306 = scmp.eq.s32.totalorder %s23, 0
      %p307 = por %p305, %p306
      %p308 = scmp.ne.s32.totalorder %s300, %s302
      %p309 = scmp.eq.s32.totalorder %s28, 3
      %p310 = por %p308, %p309
      %p311 = scmp.ne.s32.totalorder %s302, %s303
      %p312 = scmp.eq.s32.totalorder %s28, 0
      %p313 = por %p311, %p312
      %p314 = scmp.ne.s32.totalorder %s302, %s303
      %p315 = scmp.eq.s32.totalorder %s29, 3
      %p316 = por %p314, %p315
      %p318 = scmp.ne.s32.totalorder %s303, %s317
      %p319 = scmp.eq.s32.totalorder %s29, 0
      %p320 = por %p318, %p319
      %s321 = ssub.s32 %s30, %s42
      %s322 = ssub.s32 %s31, %s38
      %s323 = sor.u32 %s321, %s322
      %p324 = scmp.eq.s32.totalorder %s323, 0
      %s326 = sadd.s32 %s325, 1
      %s327 = scalar_select %p324, %s325, %s326
      %p330 = pneg %p324
      %p331 = scmp.eq.s32.totalorder %s23, 3
      %p332 = por %p330, %p331
      %p333 = scmp.ne.s32.totalorder %s325, %s328
      %p334 = scmp.eq.s32.totalorder %s23, 0
      %p335 = por %p333, %p334
      %p336 = scmp.ne.s32.totalorder %s325, %s328
      %p337 = scmp.eq.s32.totalorder %s28, 3
      %p338 = por %p336, %p337
      %p339 = scmp.ne.s32.totalorder %s328, %s329
      %p340 = scmp.eq.s32.totalorder %s28, 0
      %p341 = por %p339, %p340
      %p342 = scmp.ne.s32.totalorder %s328, %s329
      %p343 = scmp.eq.s32.totalorder %s29, 3
      %p344 = por %p342, %p343
      %p346 = scmp.ne.s32.totalorder %s329, %s345
      %p347 = scmp.eq.s32.totalorder %s29, 0
      %p348 = por %p346, %p347
      %p349 = scmp.le.s32.totalorder 1, %s23
      %p350 = scmp.lt.s32.totalorder %s23, 5
      %p351 = pnand %p349, %p350
      %p352 = pneg %p351
      // Predicated region
      $region9: #{tpu_custom_call.1} parent=5 // pred_check
        _
      $region10: #{tpu_custom_call.1} parent=5 // pred_check_branch
        %354 = sbr.rel (%p351) target = $region12
      $region11: #{tpu_custom_call.1} parent=5 // pred_region
        %s355 = ssub.s32 %s23, 1
        // Predicated region
        $region13: #{tpu_custom_call.1} parent=11 // pred_check
          %p356 = pneg %p82
        $region14: #{tpu_custom_call.1} parent=11 // pred_check_branch
          %358 = sbr.rel (%p356) target = $region16
        $region15: #{tpu_custom_call.1} parent=11 // pred_region
          %360 = vsyncadd [#allocation6], 0
          %s362 = sshll.u32 %s1, 4
          %s363 = int_to_ptr.hbm [resolvable:$true] %s362
          %s364 = sshll.u32 [#allocation5], 4
          %s365 = int_to_ptr.vmem [resolvable:$true] %s364
          %367 = dma.hbm_to_vmem [thread:$0]  %s363, 16, %s365, [#allocation6]
        $region16: #{tpu_custom_call.1} parent=11 // pred_fallthru
          _
        // Predicated region
        $region17: #{tpu_custom_call.1} parent=11 // pred_check
          %p368 = pneg %p103
        $region18: #{tpu_custom_call.1} parent=11 // pred_check_branch
          %370 = sbr.rel (%p368) target = $region20
        $region19: #{tpu_custom_call.1} parent=11 // pred_region
          _
        $region20: #{tpu_custom_call.1} parent=11 // pred_fallthru
          _
        // Predicated region
        $region21: #{tpu_custom_call.1} parent=11 // pred_check
          %p371 = pneg %p124
        $region22: #{tpu_custom_call.1} parent=11 // pred_check_branch
          %373 = sbr.rel (%p371) target = $region24
        $region23: #{tpu_custom_call.1} parent=11 // pred_region
          _
        $region24: #{tpu_custom_call.1} parent=11 // pred_fallthru
          _
        // Predicated region
        $region25: #{tpu_custom_call.1} parent=11 // pred_check
          %p374 = pneg %p145
        $region26: #{tpu_custom_call.1} parent=11 // pred_check_branch
          %376 = sbr.rel (%p374) target = $region28
        $region27: #{tpu_custom_call.1} parent=11 // pred_region
          _
        $region28: #{tpu_custom_call.1} parent=11 // pred_fallthru
          _
        // Predicated region
        $region29: #{tpu_custom_call.1} parent=11 // pred_check
          %p377 = pneg %p166
        $region30: #{tpu_custom_call.1} parent=11 // pred_check_branch
          %379 = sbr.rel (%p377) target = $region32
        $region31: #{tpu_custom_call.1} parent=11 // pred_region
          _
        $region32: #{tpu_custom_call.1} parent=11 // pred_fallthru
          _
        // Predicated region
        $region33: #{tpu_custom_call.1} parent=11 // pred_check
          %p380 = pneg %p187
        $region34: #{tpu_custom_call.1} parent=11 // pred_check_branch
          %382 = sbr.rel (%p380) target = $region36
        $region35: #{tpu_custom_call.1} parent=11 // pred_region
          _
        $region36: #{tpu_custom_call.1} parent=11 // pred_fallthru
          _
        // Predicated region
        $region37: #{tpu_custom_call.1} parent=11 // pred_check
          %p383 = pneg %p208
        $region38: #{tpu_custom_call.1} parent=11 // pred_check_branch
          %385 = sbr.rel (%p383) target = $region40
        $region39: #{tpu_custom_call.1} parent=11 // pred_region
          _
        $region40: #{tpu_custom_call.1} parent=11 // pred_fallthru
          _
        // Predicated region
        $region41: #{tpu_custom_call.1} parent=11 // pred_check
          %p386 = pneg %p229
        $region42: #{tpu_custom_call.1} parent=11 // pred_check_branch
          %388 = sbr.rel (%p386) target = $region44
        $region43: #{tpu_custom_call.1} parent=11 // pred_region
          _
        $region44: #{tpu_custom_call.1} parent=11 // pred_fallthru
          _
        // Predicated region
        $region45: #{tpu_custom_call.1} parent=11 // pred_check
          %p389 = pneg %p250
        $region46: #{tpu_custom_call.1} parent=11 // pred_check_branch
          %391 = sbr.rel (%p389) target = $region48
        $region47: #{tpu_custom_call.1} parent=11 // pred_region
          _
        $region48: #{tpu_custom_call.1} parent=11 // pred_fallthru
          _
        // Predicated region
        $region49: #{tpu_custom_call.1} parent=11 // pred_check
          %p392 = pneg %p271
        $region50: #{tpu_custom_call.1} parent=11 // pred_check_branch
          %394 = sbr.rel (%p392) target = $region52
        $region51: #{tpu_custom_call.1} parent=11 // pred_region
          _
        $region52: #{tpu_custom_call.1} parent=11 // pred_fallthru
          _
        // Predicated region
        $region53: #{tpu_custom_call.1} parent=11 // pred_check
          %p395 = pneg %p292
        $region54: #{tpu_custom_call.1} parent=11 // pred_check_branch
          %397 = sbr.rel (%p395) target = $region56
        $region55: #{tpu_custom_call.1} parent=11 // pred_region
          _
        $region56: #{tpu_custom_call.1} parent=11 // pred_fallthru
          _
        // Predicated region
        $region57: #{tpu_custom_call.1} parent=11 // pred_check
          %p398 = pneg %p313
        $region58: #{tpu_custom_call.1} parent=11 // pred_check_branch
          %400 = sbr.rel (%p398) target = $region60
        $region59: #{tpu_custom_call.1} parent=11 // pred_region
          _
        $region60: #{tpu_custom_call.1} parent=11 // pred_fallthru
          _
      $region12: #{tpu_custom_call.1} parent=5 // pred_fallthru
        _
      %p401 = scmp.lt.s32.totalorder %s23, 4
      // Predicated region
      $region61: #{tpu_custom_call.1} parent=5 // pred_check
        %p402 = pneg %p401
      $region62: #{tpu_custom_call.1} parent=5 // pred_check_branch
        %404 = sbr.rel (%p402) target = $region64
      $region63: #{tpu_custom_call.1} parent=5 // pred_region
        // Predicated region
        $region65: #{tpu_custom_call.1} parent=63 // pred_check
          %p405 = pneg %p55
        $region66: #{tpu_custom_call.1} parent=63 // pred_check_branch
          %407 = sbr.rel (%p405) target = $region68
        $region67: #{tpu_custom_call.1} parent=63 // pred_region
          %p408 = scmp.lt.s32.totalorder %s30, 1
          %s409 = scalar_select %p408, %s30, 1
          %s410 = smul.addr %s409, 2
          %s411 = smul.addr %s410, 4
          %s412 = scalar_lea.vmem %s0, %s411
        $region68: #{tpu_custom_call.1} parent=63 // pred_fallthru
          _
      $region64: #{tpu_custom_call.1} parent=5 // pred_fallthru
        _
      %p413 = scmp.le.s32.totalorder 1, %s23
      %p414 = scmp.lt.s32.totalorder %s23, 5
      %p415 = pnand %p413, %p414
      %p416 = pneg %p415
      // Predicated region
      $region69: #{tpu_custom_call.1} parent=5 // pred_check
        _
      $region70: #{tpu_custom_call.1} parent=5 // pred_check_branch
        %418 = sbr.rel (%p415) target = $region72
      $region71: #{tpu_custom_call.1} parent=5 // pred_region
        %s419 = ssub.s32 %s23, 1
        // Predicated region
        $region73: #{tpu_custom_call.1} parent=71 // pred_check
          %p420 = pneg %p82
        $region74: #{tpu_custom_call.1} parent=71 // pred_check_branch
          %422 = sbr.rel (%p420) target = $region76
        $region75: #{tpu_custom_call.1} parent=71 // pred_region
          %424 = dma.done [#allocation6], 16
        $region76: #{tpu_custom_call.1} parent=71 // pred_fallthru
          _
        %p425 = scmp.lt.s32.totalorder %s32, 1
        %s426 = scalar_select %p425, %s32, 1
        %s427 = smul.addr %s426, 2
        %s428 = smul.addr %s427, 4
        %s429 = scalar_lea.vmem %s0, %s428
        %p430 = pneg %p61
        %p431 = pneg %p58
        %p432 = pneg %p82
        %p433 = pneg %p79
        %p434 = pneg %p103
        %p435 = pneg %p100
        %p436 = pneg %p124
        %p437 = pneg %p121
        %p438 = pneg %p145
        %p439 = pneg %p142
        %p440 = pneg %p166
        %p441 = pneg %p163
        %p442 = pneg %p187
        %p443 = pneg %p184
        %p444 = pneg %p208
        %p445 = pneg %p205
        %p446 = pneg %p229
        %p447 = pneg %p226
        %p448 = pneg %p250
        %p449 = pneg %p247
        %p450 = pneg %p271
        %p451 = pneg %p268
        %p452 = pneg %p292
        %p453 = pneg %p289
        %p454 = pneg %p313
        %p455 = pneg %p310
        %p456 = pneg %p341
        %p457 = pneg %p338
        %s458 = sand.u32 %s328, 1
        %s459 = scalar_lea.sflag [#allocation7], %s458
        %s460 = sand.u32 %s328, 1
        %s461 = smul.addr %s460, 8
        %s462 = scalar_lea.vmem [#allocation8], %s461
        %p463 = scmp.lt.s32.totalorder %s32, 1
        %s464 = scalar_select %p463, %s32, 1
        %s465 = smul.addr %s464, 2
        %s466 = smul.addr %s465, 4
        %s467 = scalar_lea.vmem %s0, %s466
        %v469 = vld [vmem:[#allocation5] sm:$0x1]
        %v470 = vld [vmem:[%s2] sm:$0x1]
        %p471 = scmp.eq.s32.totalorder %s33, 0
        // Predicated region
        $region77: #{tpu_custom_call.1} parent=71 // pred_check
          %p472 = pneg %p471
        $region78: #{tpu_custom_call.1} parent=71 // pred_check_branch
          %474 = sbr.rel (%p472) target = $region80
        $region79: #{tpu_custom_call.1} parent=71 // pred_region
          %v475 = vld [vmem:[%s467] sm:$0xf]
          %v476 = vunpack.c.l.bf16 %v475
          %vm477 = vcmask 261120
          %v478 = vsel %vm477, %v476, 0.0
          %479 = vadd.xlane.f32.xlu0 %v478
          %v480 = vpop.xlane.xlu0 %479
          %v481 = vrcp.pop 32.0
          %v482 = vmul.f32 32.0, %v481
          %v483 = vsub.f32 1.0, %v482
          %v484 = vmul.f32 %v481, %v483
          %v485 = vadd.f32 %v481, %v484
          %vm486 = vweird.f32 %v481
          %v487 = vsel %vm486, %v481, %v485
          %v488 = vmul.f32 %v480, %v487
          %v489 = vsub.f32 %v476, %v488
          %v490 = vmul.f32 %v489, %v489
          %v491 = vsel %vm477, %v490, 0.0
          %492 = vadd.xlane.f32.xlu0 %v491
          %v493 = vpop.xlane.xlu0 %492
          %v494 = vmul.f32 %v493, %v487
          %v495 = vadd.f32 %v494, 1e-05
          %v496 = vrsqrt.pop %v495
          %v497 = vmul.f32 %v496, %v495
          %v498 = vmul.f32 %v497, %v496
          %v499 = vmul.f32 0.5, %v498
          %v500 = vsub.f32 1.5, %v499
          %v501 = vmul.f32 %v496, %v500
          %vm502 = vweird.f32 %v495
          %vm503 = vweird.f32 %v496
          %vm504 = vmor %vm502, %vm503
          %v505 = vsel %vm504, %v496, %v501
          %v506 = vmul.f32 %v489, %v505
          %v508 = vperm.slane %v469, 0
          %v510 = vmul.f32 %v506, %v508
          %v512 = vperm.slane %v470, 0
          %v514 = vadd.f32 %v510, %v512
          %v515 = vpack.c.bf16 %v514, %v514
          %vm516 = vcmask 257024
          %517 = vst.msk [vmem:[#allocation2] sm:$0xf] %vm516, %v515
          %v518 = vld [vmem:[%s4] sm:$0xf]
          %v519 = vld [vmem:[%s4 + $0x4] sm:$0xf]
          %v520 = vld [vmem:[%s4 + $0x8] sm:$0xf]
          %v521 = vld [vmem:[%s4 + $0xc] sm:$0xf]
          %v526 = vunpack.c.l.b16 %v518
          %v527 = vunpack.c.l.b16 %v519
          %v528 = vunpack.c.l.b16 %v520
          %v529 = vunpack.c.l.b16 %v521
          %v530 = vpack.c.b16 %v527, %v526
          %v531 = vpack.c.b16 %v529, %v528
          %v535 = vsel %vm477, %v515, 0
          %537 = vmatpush.bf16.msra.mxu0 0
          %538 = vmatpush.bf16.msra.mxu0 0
          %539 = vmatpush.bf16.msra.mxu0 0
          %540 = vmatpush.bf16.msra.mxu0 0
          %541 = vmatpush.bf16.msra.mxu0 0
          %542 = vmatpush.bf16.msra.mxu0 0
          %543 = vmatpush.bf16.msra.mxu0 %v531
          %544 = vmatpush.bf16.msra.mxu0 %v530
          %545 = vmatmul.bf16.gmra.mxu0 %v535
          %v546 = vpop.f32.mrf.mxu0
          %v547 = vadd.f32 0.0, %v546
          %v548 = vpop.f32.mrf.mxu0
          %549 = vdwg.mxu0
          %v550 = vpack.c.bf16 %v547, %v547
          %vm551 = vcmask 60416
          %552 = vst.msk [vmem:[#allocation3] sm:$0xf] %vm551, %v550
          %554 = vrot.lane.b32.xlu0 %v550, 96
          %v555 = vpop.permute.xlu0 %554
          %557 = vst.msk [vmem:[#allocation4] sm:$0xf] %vm551, %v555
          %558 = vrot.lane.b32.xlu0 %v550, 120
          %v559 = vpop.permute.xlu0 %558
          %s561 = scalar_lea.vmem [#allocation3], 4
          %562 = vst.msk [vmem:[%s561] sm:$0xf] %vm551, %v559
          %563 = vrot.lane.b32.xlu0 %v550, 88
          %v564 = vpop.permute.xlu0 %563
          %s566 = scalar_lea.vmem [#allocation4], 4
          %567 = vst.msk [vmem:[%s566] sm:$0xf] %vm551, %v564
          %568 = vrot.lane.b32.xlu0 %v550, 112
          %v569 = vpop.permute.xlu0 %568
          %s571 = scalar_lea.vmem [#allocation3], 8
          %572 = vst.msk [vmem:[%s571] sm:$0xf] %vm551, %v569
          %573 = vrot.lane.b32.xlu0 %v550, 80
          %v574 = vpop.permute.xlu0 %573
          %s576 = scalar_lea.vmem [#allocation4], 8
          %577 = vst.msk [vmem:[%s576] sm:$0xf] %vm551, %v574
          %578 = vrot.lane.b32.xlu0 %v550, 104
          %v579 = vpop.permute.xlu0 %578
          %s581 = scalar_lea.vmem [#allocation3], 12
          %582 = vst.msk [vmem:[%s581] sm:$0xf] %vm551, %v579
          %583 = vrot.lane.b32.xlu0 %v550, 72
          %v584 = vpop.permute.xlu0 %583
          %s586 = scalar_lea.vmem [#allocation4], 12
          %587 = vst.msk [vmem:[%s586] sm:$0xf] %vm551, %v584
          %s588 = scalar_lea.vmem %s467, 4
          %v589 = vld [vmem:[%s588] sm:$0xf]
          %v590 = vunpack.c.l.bf16 %v589
          %v591 = vsel %vm477, %v590, 0.0
          %592 = vadd.xlane.f32.xlu0 %v591
          %v593 = vpop.xlane.xlu0 %592
          %v594 = vmul.f32 %v593, %v487
          %v595 = vsub.f32 %v590, %v594
          %v596 = vmul.f32 %v595, %v595
          %v597 = vsel %vm477, %v596, 0.0
          %598 = vadd.xlane.f32.xlu0 %v597
          %v599 = vpop.xlane.xlu0 %598
          %v600 = vmul.f32 %v599, %v487
          %v601 = vadd.f32 %v600, 1e-05
          %v602 = vrsqrt.pop %v601
          %v603 = vmul.f32 %v602, %v601
          %v604 = vmul.f32 %v603, %v602
          %v605 = vmul.f32 0.5, %v604
          %v606 = vsub.f32 1.5, %v605
          %v607 = vmul.f32 %v602, %v606
          %vm608 = vweird.f32 %v601
          %vm609 = vweird.f32 %v602
          %vm610 = vmor %vm608, %vm609
          %v611 = vsel %vm610, %v602, %v607
          %v612 = vmul.f32 %v595, %v611
          %v613 = vmul.f32 %v612, %v508
          %v614 = vadd.f32 %v613, %v512
          %v615 = vpack.c.bf16 %v614, %v614
          %s616 = scalar_lea.vmem [#allocation2], 4
          %617 = vst.msk [vmem:[%s616] sm:$0xf] %vm516, %v615
          %v618 = vld [vmem:[%s4] sm:$0xf]
          %v619 = vld [vmem:[%s4 + $0x4] sm:$0xf]
          %v620 = vld [vmem:[%s4 + $0x8] sm:$0xf]
          %v621 = vld [vmem:[%s4 + $0xc] sm:$0xf]
          %v626 = vunpack.c.l.b16 %v618
          %v627 = vunpack.c.l.b16 %v619
          %v628 = vunpack.c.l.b16 %v620
          %v629 = vunpack.c.l.b16 %v621
          %v630 = vpack.c.b16 %v627, %v626
          %v631 = vpack.c.b16 %v629, %v628
          %v635 = vsel %vm477, %v615, 0
          %637 = vmatpush.bf16.msra.mxu0 0
          %638 = vmatpush.bf16.msra.mxu0 0
          %639 = vmatpush.bf16.msra.mxu0 0
          %640 = vmatpush.bf16.msra.mxu0 0
          %641 = vmatpush.bf16.msra.mxu0 0
          %642 = vmatpush.bf16.msra.mxu0 0
          %643 = vmatpush.bf16.msra.mxu0 %v631
          %644 = vmatpush.bf16.msra.mxu0 %v630
          %645 = vmatmul.bf16.gmra.mxu0 %v635
          %v646 = vpop.f32.mrf.mxu0
          %v647 = vadd.f32 0.0, %v646
          %v648 = vpop.f32.mrf.mxu0
          %649 = vdwg.mxu0
          %v650 = vpack.c.bf16 %v647, %v647
          %s651 = scalar_lea.vmem [#allocation3], 16
          %652 = vst.msk [vmem:[%s651] sm:$0xf] %vm551, %v650
          %654 = vrot.lane.b32.xlu0 %v650, 96
          %v655 = vpop.permute.xlu0 %654
          %s657 = scalar_lea.vmem [#allocation4], 16
          %658 = vst.msk [vmem:[%s657] sm:$0xf] %vm551, %v655
          %659 = vrot.lane.b32.xlu0 %v650, 120
          %v660 = vpop.permute.xlu0 %659
          %s662 = scalar_lea.vmem [#allocation3], 20
          %663 = vst.msk [vmem:[%s662] sm:$0xf] %vm551, %v660
          %664 = vrot.lane.b32.xlu0 %v650, 88
          %v665 = vpop.permute.xlu0 %664
          %s667 = scalar_lea.vmem [#allocation4], 20
          %668 = vst.msk [vmem:[%s667] sm:$0xf] %vm551, %v665
          %669 = vrot.lane.b32.xlu0 %v650, 112
          %v670 = vpop.permute.xlu0 %669
          %s672 = scalar_lea.vmem [#allocation3], 24
          %673 = vst.msk [vmem:[%s672] sm:$0xf] %vm551, %v670
          %674 = vrot.lane.b32.xlu0 %v650, 80
          %v675 = vpop.permute.xlu0 %674
          %s677 = scalar_lea.vmem [#allocation4], 24
          %678 = vst.msk [vmem:[%s677] sm:$0xf] %vm551, %v675
          %679 = vrot.lane.b32.xlu0 %v650, 104
          %v680 = vpop.permute.xlu0 %679
          %s682 = scalar_lea.vmem [#allocation3], 28
          %683 = vst.msk [vmem:[%s682] sm:$0xf] %vm551, %v680
          %684 = vrot.lane.b32.xlu0 %v650, 72
          %v685 = vpop.permute.xlu0 %684
          %s687 = scalar_lea.vmem [#allocation4], 28
          %688 = vst.msk [vmem:[%s687] sm:$0xf] %vm551, %v685
        $region80: #{tpu_custom_call.1} parent=71 // pred_fallthru
          _
        %s689 = smul.u32 %s33, 8
        %s690 = sshra.s32 %s689, 3
        %s691 = sand.u32 %s689, 7
        %s692 = smul.addr %s690, 4
        %s693 = scalar_lea.vmem %s467, %s692
        %v694 = vld [vmem:[%s693] sm:$0xf]
        %v695 = vunpack.c.l.bf16 %v694
        %s696 = smul.addr %s690, 4
        %s697 = scalar_lea.vmem [#allocation2], %s696
        %v698 = vld [vmem:[%s697] sm:$0xf]
        %v699 = vld [vmem:[%s3] sm:$0xf]
        %v700 = vld [vmem:[%s3 + $0x4] sm:$0xf]
        %v701 = vld [vmem:[%s3 + $0x8] sm:$0xf]
        %v702 = vld [vmem:[%s3 + $0xc] sm:$0xf]
        %v707 = vunpack.c.l.b16 %v699
        %v708 = vunpack.c.l.b16 %v700
        %v709 = vunpack.c.l.b16 %v701
        %v710 = vunpack.c.l.b16 %v702
        %v711 = vpack.c.b16 %v708, %v707
        %v712 = vpack.c.b16 %v710, %v709
        %vm715 = vcmask 261120
        %v717 = vsel %vm715, %v698, 0
        %719 = vmatpush.bf16.msra.mxu0 0
        %720 = vmatpush.bf16.msra.mxu0 0
        %721 = vmatpush.bf16.msra.mxu0 0
        %722 = vmatpush.bf16.msra.mxu0 0
        %723 = vmatpush.bf16.msra.mxu0 0
        %724 = vmatpush.bf16.msra.mxu0 0
        %725 = vmatpush.bf16.msra.mxu0 %v712
        %726 = vmatpush.bf16.msra.mxu0 %v711
        %727 = vmatmul.bf16.gmra.mxu0 %v717
        %v728 = vpop.f32.mrf.mxu0
        %v729 = vadd.f32 0.0, %v728
        %v730 = vpop.f32.mrf.mxu0
        %731 = vdwg.mxu0
        %v732 = vmul.f32 %v729, 0.35355338
        %v733 = vpack.c.bf16 %v732, %v732
        %735 = vrot.lane.b32.xlu0 %v733, 120
        %v736 = vpop.permute.xlu0 %735
        %737 = vrot.lane.b32.xlu0 %v733, 112
        %v738 = vpop.permute.xlu0 %737
        %739 = vrot.lane.b32.xlu0 %v733, 104
        %v740 = vpop.permute.xlu0 %739
        %v743 = vpack.i.b16 %v736, %v733
        %v744 = vshrl.u32 %v733, 16
        %v745 = vshrl.u32 %v736, 16
        %v746 = vpack.i.b16 %v745, %v744
        %v749 = vpack.i.b16 %v740, %v738
        %v750 = vshrl.u32 %v738, 16
        %v751 = vshrl.u32 %v740, 16
        %v752 = vpack.i.b16 %v751, %v750
        %v755 = vunpack.c.l.s4 1983009808
        %v756 = vunpack.c.0.s8 %v755
        %v757 = vperm.slane %v743, %v756
        %v760 = vunpack.c.l.s4 1983009808
        %v761 = vunpack.c.0.s8 %v760
        %v762 = vperm.slane %v749, %v761
        %v763 = vrot.slane %v762, 4
        %vm764 = vcmask 1047556
        %v765 = vsel %vm764, %v763, %v757
        %v766 = vrot.slane %v757, 4
        %v767 = vsel %vm764, %v762, %v766
        %v769 = vunpack.c.l.s4 1934713408
        %v770 = vunpack.c.0.s8 %v769
        %v771 = vperm.slane %v765, %v770
        %v773 = vunpack.c.l.s4 1934713408
        %v774 = vunpack.c.0.s8 %v773
        %v775 = vperm.slane %v767, %v774
        %v776 = vrot.slane %v771, 4
        %v777 = vsel %vm764, 0, %v776
        %v778 = vrot.slane %v775, 4
        %v779 = vsel %vm764, 0, %v778
        %v782 = vunpack.c.l.s4 1983009808
        %v783 = vunpack.c.0.s8 %v782
        %v784 = vperm.slane %v746, %v783
        %v787 = vunpack.c.l.s4 1983009808
        %v788 = vunpack.c.0.s8 %v787
        %v789 = vperm.slane %v752, %v788
        %v790 = vrot.slane %v789, 4
        %v791 = vsel %vm764, %v790, %v784
        %v792 = vrot.slane %v784, 4
        %v793 = vsel %vm764, %v789, %v792
        %v795 = vunpack.c.l.s4 1934713408
        %v796 = vunpack.c.0.s8 %v795
        %v797 = vperm.slane %v791, %v796
        %v799 = vunpack.c.l.s4 1934713408
        %v800 = vunpack.c.0.s8 %v799
        %v801 = vperm.slane %v793, %v800
        %v802 = vrot.slane %v797, 4
        %v803 = vsel %vm764, 0, %v802
        %v804 = vrot.slane %v801, 4
        %v805 = vsel %vm764, 0, %v804
        %v806 = vsel %vm764, %v778, %v771
        %v808 = vunpack.c.l.s4 1983009808
        %v809 = vunpack.c.0.s8 %v808
        %v810 = vperm.slane %v806, %v809
        %v811 = vrot.slane %v779, 4
        %v812 = vsel %vm764, %v811, %v777
        %v814 = vunpack.c.l.s4 1983009808
        %v815 = vunpack.c.0.s8 %v814
        %v816 = vperm.slane %v812, %v815
        %v817 = vrot.slane %v816, 4
        %v818 = vsel %vm764, %v817, %v810
        %v820 = vunpack.c.l.s4 1934713408
        %v821 = vunpack.c.0.s8 %v820
        %v822 = vperm.slane %v818, %v821
        %v823 = vrot.slane %v822, 4
        %v824 = vsel %vm764, 0, %v823
        %v825 = vsel %vm764, %v804, %v797
        %v827 = vunpack.c.l.s4 1983009808
        %v828 = vunpack.c.0.s8 %v827
        %v829 = vperm.slane %v825, %v828
        %v830 = vrot.slane %v805, 4
        %v831 = vsel %vm764, %v830, %v803
        %v833 = vunpack.c.l.s4 1983009808
        %v834 = vunpack.c.0.s8 %v833
        %v835 = vperm.slane %v831, %v834
        %v836 = vrot.slane %v835, 4
        %v837 = vsel %vm764, %v836, %v829
        %v839 = vunpack.c.l.s4 1934713408
        %v840 = vunpack.c.0.s8 %v839
        %v841 = vperm.slane %v837, %v840
        %v842 = vrot.slane %v841, 4
        %v843 = vsel %vm764, 0, %v842
        %v846 = vpack.i.b16 %v841, %v822
        %v847 = vshrl.u32 %v822, 16
        %v848 = vshrl.u32 %v841, 16
        %v849 = vpack.i.b16 %v848, %v847
        %v852 = vpack.i.b16 %v843, %v824
        %v853 = vshrl.u32 %v824, 16
        %v854 = vshrl.u32 %v843, 16
        %v855 = vpack.i.b16 %v854, %v853
        %v856 = vld [vmem:[#allocation3] sm:$0xf]
        %v857 = vld [vmem:[#allocation3 + $0x4] sm:$0xf]
        %v858 = vld [vmem:[#allocation3 + $0x8] sm:$0xf]
        %v859 = vld [vmem:[#allocation3 + $0xc] sm:$0xf]
        %v860 = vld [vmem:[#allocation4] sm:$0xf]
        %v861 = vld [vmem:[#allocation4 + $0x4] sm:$0xf]
        %v862 = vld [vmem:[#allocation4 + $0x8] sm:$0xf]
        %v863 = vld [vmem:[#allocation4 + $0xc] sm:$0xf]
        %vm864 = vcmask 64512
        %v866 = vsel %vm864, %v846, 0
        %v869 = vsel %vm864, %v856, 0
        %871 = vmatpush.bf16.xpose.msra.mxu0 0
        %872 = vmatpush.bf16.xpose.msra.mxu0 0
        %873 = vmatpush.bf16.xpose.msra.mxu0 0
        %874 = vmatpush.bf16.xpose.msra.mxu0 0
        %875 = vmatpush.bf16.xpose.msra.mxu0 0
        %876 = vmatpush.bf16.xpose.msra.mxu0 0
        %877 = vmatpush.bf16.xpose.msra.mxu0 0
        %878 = vmatpush.bf16.xpose.msra.mxu0 %v869
        %879 = vmatmul.bf16.gmra.mxu0 %v866
        %v880 = vpop.f32.mrf.mxu0
        %v881 = vadd.f32 0.0, %v880
        %v882 = vpop.f32.mrf.mxu0
        %883 = vdwg.mxu0
        %v885 = vsel %vm864, %v849, 0
        %v888 = vsel %vm864, %v857, 0
        %890 = vmatpush.bf16.xpose.msra.mxu0 0
        %891 = vmatpush.bf16.xpose.msra.mxu0 0
        %892 = vmatpush.bf16.xpose.msra.mxu0 0
        %893 = vmatpush.bf16.xpose.msra.mxu0 0
        %894 = vmatpush.bf16.xpose.msra.mxu0 0
        %895 = vmatpush.bf16.xpose.msra.mxu0 0
        %896 = vmatpush.bf16.xpose.msra.mxu0 0
        %897 = vmatpush.bf16.xpose.msra.mxu0 %v888
        %898 = vmatmul.bf16.gmra.mxu0 %v885
        %v899 = vpop.f32.mrf.mxu0
        %v900 = vadd.f32 0.0, %v899
        %v901 = vpop.f32.mrf.mxu0
        %902 = vdwg.mxu0
        %v904 = vsel %vm864, %v852, 0
        %v907 = vsel %vm864, %v858, 0
        %909 = vmatpush.bf16.xpose.msra.mxu0 0
        %910 = vmatpush.bf16.xpose.msra.mxu0 0
        %911 = vmatpush.bf16.xpose.msra.mxu0 0
        %912 = vmatpush.bf16.xpose.msra.mxu0 0
        %913 = vmatpush.bf16.xpose.msra.mxu0 0
        %914 = vmatpush.bf16.xpose.msra.mxu0 0
        %915 = vmatpush.bf16.xpose.msra.mxu0 0
        %916 = vmatpush.bf16.xpose.msra.mxu0 %v907
        %917 = vmatmul.bf16.gmra.mxu0 %v904
        %v918 = vpop.f32.mrf.mxu0
        %v919 = vadd.f32 0.0, %v918
        %v920 = vpop.f32.mrf.mxu0
        %921 = vdwg.mxu0
        %v923 = vsel %vm864, %v855, 0
        %v926 = vsel %vm864, %v859, 0
        %928 = vmatpush.bf16.xpose.msra.mxu0 0
        %929 = vmatpush.bf16.xpose.msra.mxu0 0
        %930 = vmatpush.bf16.xpose.msra.mxu0 0
        %931 = vmatpush.bf16.xpose.msra.mxu0 0
        %932 = vmatpush.bf16.xpose.msra.mxu0 0
        %933 = vmatpush.bf16.xpose.msra.mxu0 0
        %934 = vmatpush.bf16.xpose.msra.mxu0 0
        %935 = vmatpush.bf16.xpose.msra.mxu0 %v926
        %936 = vmatmul.bf16.gmra.mxu0 %v923
        %v937 = vpop.f32.mrf.mxu0
        %v938 = vadd.f32 0.0, %v937
        %v939 = vpop.f32.mrf.mxu0
        %940 = vdwg.mxu0
        %v941 = vsel %vm864, %v881, -inf
        %942 = vmax.xlane.f32.xlu0 %v941
        %v943 = vpop.xlane.xlu0 %942
        %v944 = vsel %vm864, %v900, -inf
        %945 = vmax.xlane.f32.xlu0 %v944
        %v946 = vpop.xlane.xlu0 %945
        %v947 = vsel %vm864, %v919, -inf
        %948 = vmax.xlane.f32.xlu0 %v947
        %v949 = vpop.xlane.xlu0 %948
        %v950 = vsel %vm864, %v938, -inf
        %951 = vmax.xlane.f32.xlu0 %v950
        %v952 = vpop.xlane.xlu0 %951
        %v953 = vsub.f32 -inf, %v943
        %v954 = vsub.f32 -inf, %v946
        %v955 = vsub.f32 -inf, %v949
        %v956 = vsub.f32 -inf, %v952
        %v957 = vmul.f32 %v953, 1.442695
        %v958 = vpow.pop %v957
        %v959 = vmul.f32 %v954, 1.442695
        %v960 = vpow.pop %v959
        %v961 = vmul.f32 %v955, 1.442695
        %v962 = vpow.pop %v961
        %v963 = vmul.f32 %v956, 1.442695
        %v964 = vpow.pop %v963
        %v965 = vsub.f32 %v881, %v943
        %v966 = vsub.f32 %v900, %v946
        %v967 = vsub.f32 %v919, %v949
        %v968 = vsub.f32 %v938, %v952
        %v969 = vpack.c.bf16 %v965, %v965
        %v970 = vpack.c.bf16 %v966, %v966
        %v971 = vpack.c.bf16 %v967, %v967
        %v972 = vpack.c.bf16 %v968, %v968
        %v973 = vunpack.c.l.bf16 %v969
        %v974 = vunpack.c.l.bf16 %v970
        %v975 = vunpack.c.l.bf16 %v971
        %v976 = vunpack.c.l.bf16 %v972
        %v977 = vmul.f32 %v973, 1.442695
        %v978 = vpow.pop %v977
        %v979 = vmul.f32 %v974, 1.442695
        %v980 = vpow.pop %v979
        %v981 = vmul.f32 %v975, 1.442695
        %v982 = vpow.pop %v981
        %v983 = vmul.f32 %v976, 1.442695
        %v984 = vpow.pop %v983
        %v985 = vpack.c.bf16 %v978, %v978
        %v986 = vpack.c.bf16 %v980, %v980
        %v987 = vpack.c.bf16 %v982, %v982
        %v988 = vpack.c.bf16 %v984, %v984
        %v989 = vunpack.c.l.bf16 %v985
        %v990 = vunpack.c.l.bf16 %v986
        %v991 = vunpack.c.l.bf16 %v987
        %v992 = vunpack.c.l.bf16 %v988
        %v993 = vsel %vm864, %v989, 0.0
        %994 = vadd.xlane.f32.xlu0 %v993
        %v995 = vpop.xlane.xlu0 %994
        %v996 = vsel %vm864, %v990, 0.0
        %997 = vadd.xlane.f32.xlu0 %v996
        %v998 = vpop.xlane.xlu0 %997
        %v999 = vsel %vm864, %v991, 0.0
        %1000 = vadd.xlane.f32.xlu0 %v999
        %v1001 = vpop.xlane.xlu0 %1000
        %v1002 = vsel %vm864, %v992, 0.0
        %1003 = vadd.xlane.f32.xlu0 %v1002
        %v1004 = vpop.xlane.xlu0 %1003
        %v1005 = vmul.f32 %v958, 0.0
        %v1006 = vmul.f32 %v960, 0.0
        %v1007 = vmul.f32 %v962, 0.0
        %v1008 = vmul.f32 %v964, 0.0
        %v1009 = vadd.f32 %v1005, %v995
        %v1010 = vadd.f32 %v1006, %v998
        %v1011 = vadd.f32 %v1007, %v1001
        %v1012 = vadd.f32 %v1008, %v1004
        %v1014 = vsel %vm864, %v985, 0
        %vm1016 = vcmask 1043456
        %v1018 = vsel %vm1016, %v860, 0
        %1020 = vmatpush.bf16.msra.mxu0 0
        %1021 = vmatpush.bf16.msra.mxu0 0
        %1022 = vmatpush.bf16.msra.mxu0 0
        %1023 = vmatpush.bf16.msra.mxu0 0
        %1024 = vmatpush.bf16.msra.mxu0 0
        %1025 = vmatpush.bf16.msra.mxu0 0
        %1026 = vmatpush.bf16.msra.mxu0 0
        %1027 = vmatpush.bf16.msra.mxu0 %v1018
        %1028 = vmatmul.bf16.gmra.mxu0 %v1014
        %v1029 = vpop.f32.mrf.mxu0
        %v1030 = vadd.f32 0.0, %v1029
        %v1031 = vpop.f32.mrf.mxu0
        %1032 = vdwg.mxu0
        %v1034 = vsel %vm864, %v986, 0
        %v1037 = vsel %vm1016, %v861, 0
        %1039 = vmatpush.bf16.msra.mxu0 0
        %1040 = vmatpush.bf16.msra.mxu0 0
        %1041 = vmatpush.bf16.msra.mxu0 0
        %1042 = vmatpush.bf16.msra.mxu0 0
        %1043 = vmatpush.bf16.msra.mxu0 0
        %1044 = vmatpush.bf16.msra.mxu0 0
        %1045 = vmatpush.bf16.msra.mxu0 0
        %1046 = vmatpush.bf16.msra.mxu0 %v1037
        %1047 = vmatmul.bf16.gmra.mxu0 %v1034
        %v1048 = vpop.f32.mrf.mxu0
        %v1049 = vadd.f32 0.0, %v1048
        %v1050 = vpop.f32.mrf.mxu0
        %1051 = vdwg.mxu0
        %v1053 = vsel %vm864, %v987, 0
        %v1056 = vsel %vm1016, %v862, 0
        %1058 = vmatpush.bf16.msra.mxu0 0
        %1059 = vmatpush.bf16.msra.mxu0 0
        %1060 = vmatpush.bf16.msra.mxu0 0
        %1061 = vmatpush.bf16.msra.mxu0 0
        %1062 = vmatpush.bf16.msra.mxu0 0
        %1063 = vmatpush.bf16.msra.mxu0 0
        %1064 = vmatpush.bf16.msra.mxu0 0
        %1065 = vmatpush.bf16.msra.mxu0 %v1056
        %1066 = vmatmul.bf16.gmra.mxu0 %v1053
        %v1067 = vpop.f32.mrf.mxu0
        %v1068 = vadd.f32 0.0, %v1067
        %v1069 = vpop.f32.mrf.mxu0
        %1070 = vdwg.mxu0
        %v1072 = vsel %vm864, %v988, 0
        %v1075 = vsel %vm1016, %v863, 0
        %1077 = vmatpush.bf16.msra.mxu0 0
        %1078 = vmatpush.bf16.msra.mxu0 0
        %1079 = vmatpush.bf16.msra.mxu0 0
        %1080 = vmatpush.bf16.msra.mxu0 0
        %1081 = vmatpush.bf16.msra.mxu0 0
        %1082 = vmatpush.bf16.msra.mxu0 0
        %1083 = vmatpush.bf16.msra.mxu0 0
        %1084 = vmatpush.bf16.msra.mxu0 %v1075
        %1085 = vmatmul.bf16.gmra.mxu0 %v1072
        %v1086 = vpop.f32.mrf.mxu0
        %v1087 = vadd.f32 0.0, %v1086
        %v1088 = vpop.f32.mrf.mxu0
        %1089 = vdwg.mxu0
        %v1090 = vadd.f32 %v1005, %v1030
        %v1091 = vadd.f32 %v1006, %v1049
        %v1092 = vadd.f32 %v1007, %v1068
        %v1093 = vadd.f32 %v1008, %v1087
        %s1094 = scalar_lea.vmem [#allocation3], 16
        %v1095 = vld [vmem:[%s1094] sm:$0xf]
        %v1096 = vld [vmem:[%s1094 + $0x4] sm:$0xf]
        %v1097 = vld [vmem:[%s1094 + $0x8] sm:$0xf]
        %v1098 = vld [vmem:[%s1094 + $0xc] sm:$0xf]
        %s1099 = scalar_lea.vmem [#allocation4], 16
        %v1100 = vld [vmem:[%s1099] sm:$0xf]
        %v1101 = vld [vmem:[%s1099 + $0x4] sm:$0xf]
        %v1102 = vld [vmem:[%s1099 + $0x8] sm:$0xf]
        %v1103 = vld [vmem:[%s1099 + $0xc] sm:$0xf]
        %v1105 = vsel %vm864, %v1095, 0
        %1107 = vmatpush.bf16.xpose.msra.mxu0 0
        %1108 = vmatpush.bf16.xpose.msra.mxu0 0
        %1109 = vmatpush.bf16.xpose.msra.mxu0 0
        %1110 = vmatpush.bf16.xpose.msra.mxu0 0
        %1111 = vmatpush.bf16.xpose.msra.mxu0 0
        %1112 = vmatpush.bf16.xpose.msra.mxu0 0
        %1113 = vmatpush.bf16.xpose.msra.mxu0 0
        %1114 = vmatpush.bf16.xpose.msra.mxu0 %v1105
        %1115 = vmatmul.bf16.gmra.mxu0 %v866
        %v1116 = vpop.f32.mrf.mxu0
        %v1117 = vadd.f32 0.0, %v1116
        %v1118 = vpop.f32.mrf.mxu0
        %1119 = vdwg.mxu0
        %v1121 = vsel %vm864, %v1096, 0
        %1123 = vmatpush.bf16.xpose.msra.mxu0 0
        %1124 = vmatpush.bf16.xpose.msra.mxu0 0
        %1125 = vmatpush.bf16.xpose.msra.mxu0 0
        %1126 = vmatpush.bf16.xpose.msra.mxu0 0
        %1127 = vmatpush.bf16.xpose.msra.mxu0 0
        %1128 = vmatpush.bf16.xpose.msra.mxu0 0
        %1129 = vmatpush.bf16.xpose.msra.mxu0 0
        %1130 = vmatpush.bf16.xpose.msra.mxu0 %v1121
        %1131 = vmatmul.bf16.gmra.mxu0 %v885
        %v1132 = vpop.f32.mrf.mxu0
        %v1133 = vadd.f32 0.0, %v1132
        %v1134 = vpop.f32.mrf.mxu0
        %1135 = vdwg.mxu0
        %v1137 = vsel %vm864, %v1097, 0
        %1139 = vmatpush.bf16.xpose.msra.mxu0 0
        %1140 = vmatpush.bf16.xpose.msra.mxu0 0
        %1141 = vmatpush.bf16.xpose.msra.mxu0 0
        %1142 = vmatpush.bf16.xpose.msra.mxu0 0
        %1143 = vmatpush.bf16.xpose.msra.mxu0 0
        %1144 = vmatpush.bf16.xpose.msra.mxu0 0
        %1145 = vmatpush.bf16.xpose.msra.mxu0 0
        %1146 = vmatpush.bf16.xpose.msra.mxu0 %v1137
        %1147 = vmatmul.bf16.gmra.mxu0 %v904
        %v1148 = vpop.f32.mrf.mxu0
        %v1149 = vadd.f32 0.0, %v1148
        %v1150 = vpop.f32.mrf.mxu0
        %1151 = vdwg.mxu0
        %v1153 = vsel %vm864, %v1098, 0
        %1155 = vmatpush.bf16.xpose.msra.mxu0 0
        %1156 = vmatpush.bf16.xpose.msra.mxu0 0
        %1157 = vmatpush.bf16.xpose.msra.mxu0 0
        %1158 = vmatpush.bf16.xpose.msra.mxu0 0
        %1159 = vmatpush.bf16.xpose.msra.mxu0 0
        %1160 = vmatpush.bf16.xpose.msra.mxu0 0
        %1161 = vmatpush.bf16.xpose.msra.mxu0 0
        %1162 = vmatpush.bf16.xpose.msra.mxu0 %v1153
        %1163 = vmatmul.bf16.gmra.mxu0 %v923
        %v1164 = vpop.f32.mrf.mxu0
        %v1165 = vadd.f32 0.0, %v1164
        %v1166 = vpop.f32.mrf.mxu0
        %1167 = vdwg.mxu0
        %v1168 = vsel %vm864, %v1117, -inf
        %1169 = vmax.xlane.f32.xlu0 %v1168
        %v1170 = vpop.xlane.xlu0 %1169
        %v1171 = vsel %vm864, %v1133, -inf
        %1172 = vmax.xlane.f32.xlu0 %v1171
        %v1173 = vpop.xlane.xlu0 %1172
        %v1174 = vsel %vm864, %v1149, -inf
        %1175 = vmax.xlane.f32.xlu0 %v1174
        %v1176 = vpop.xlane.xlu0 %1175
        %v1177 = vsel %vm864, %v1165, -inf
        %1178 = vmax.xlane.f32.xlu0 %v1177
        %v1179 = vpop.xlane.xlu0 %1178
        %v1180 = vmax.f32 %v943, %v1170
        %v1181 = vmax.f32 %v946, %v1173
        %v1182 = vmax.f32 %v949, %v1176
        %v1183 = vmax.f32 %v952, %v1179
        %v1184 = vsub.f32 %v943, %v1180
        %v1185 = vsub.f32 %v946, %v1181
        %v1186 = vsub.f32 %v949, %v1182
        %v1187 = vsub.f32 %v952, %v1183
        %v1188 = vmul.f32 %v1184, 1.442695
        %v1189 = vpow.pop %v1188
        %v1190 = vmul.f32 %v1185, 1.442695
        %v1191 = vpow.pop %v1190
        %v1192 = vmul.f32 %v1186, 1.442695
        %v1193 = vpow.pop %v1192
        %v1194 = vmul.f32 %v1187, 1.442695
        %v1195 = vpow.pop %v1194
        %v1196 = vsub.f32 %v1117, %v1180
        %v1197 = vsub.f32 %v1133, %v1181
        %v1198 = vsub.f32 %v1149, %v1182
        %v1199 = vsub.f32 %v1165, %v1183
        %v1200 = vpack.c.bf16 %v1196, %v1196
        %v1201 = vpack.c.bf16 %v1197, %v1197
        %v1202 = vpack.c.bf16 %v1198, %v1198
        %v1203 = vpack.c.bf16 %v1199, %v1199
        %v1204 = vunpack.c.l.bf16 %v1200
        %v1205 = vunpack.c.l.bf16 %v1201
        %v1206 = vunpack.c.l.bf16 %v1202
        %v1207 = vunpack.c.l.bf16 %v1203
        %v1208 = vmul.f32 %v1204, 1.442695
        %v1209 = vpow.pop %v1208
        %v1210 = vmul.f32 %v1205, 1.442695
        %v1211 = vpow.pop %v1210
        %v1212 = vmul.f32 %v1206, 1.442695
        %v1213 = vpow.pop %v1212
        %v1214 = vmul.f32 %v1207, 1.442695
        %v1215 = vpow.pop %v1214
        %v1216 = vpack.c.bf16 %v1209, %v1209
        %v1217 = vpack.c.bf16 %v1211, %v1211
        %v1218 = vpack.c.bf16 %v1213, %v1213
        %v1219 = vpack.c.bf16 %v1215, %v1215
        %v1220 = vunpack.c.l.bf16 %v1216
        %v1221 = vunpack.c.l.bf16 %v1217
        %v1222 = vunpack.c.l.bf16 %v1218
        %v1223 = vunpack.c.l.bf16 %v1219
        %v1224 = vsel %vm864, %v1220, 0.0
        %1225 = vadd.xlane.f32.xlu0 %v1224
        %v1226 = vpop.xlane.xlu0 %1225
        %v1227 = vsel %vm864, %v1221, 0.0
        %1228 = vadd.xlane.f32.xlu0 %v1227
        %v1229 = vpop.xlane.xlu0 %1228
        %v1230 = vsel %vm864, %v1222, 0.0
        %1231 = vadd.xlane.f32.xlu0 %v1230
        %v1232 = vpop.xlane.xlu0 %1231
        %v1233 = vsel %vm864, %v1223, 0.0
        %1234 = vadd.xlane.f32.xlu0 %v1233
        %v1235 = vpop.xlane.xlu0 %1234
        %v1236 = vmul.f32 %v1189, %v1009
        %v1237 = vmul.f32 %v1191, %v1010
        %v1238 = vmul.f32 %v1193, %v1011
        %v1239 = vmul.f32 %v1195, %v1012
        %v1240 = vadd.f32 %v1236, %v1226
        %v1241 = vadd.f32 %v1237, %v1229
        %v1242 = vadd.f32 %v1238, %v1232
        %v1243 = vadd.f32 %v1239, %v1235
        %v1244 = vmul.f32 %v1189, %v1090
        %v1245 = vmul.f32 %v1191, %v1091
        %v1246 = vmul.f32 %v1193, %v1092
        %v1247 = vmul.f32 %v1195, %v1093
        %v1249 = vsel %vm864, %v1216, 0
        %v1252 = vsel %vm1016, %v1100, 0
        %1254 = vmatpush.bf16.msra.mxu0 0
        %1255 = vmatpush.bf16.msra.mxu0 0
        %1256 = vmatpush.bf16.msra.mxu0 0
        %1257 = vmatpush.bf16.msra.mxu0 0
        %1258 = vmatpush.bf16.msra.mxu0 0
        %1259 = vmatpush.bf16.msra.mxu0 0
        %1260 = vmatpush.bf16.msra.mxu0 0
        %1261 = vmatpush.bf16.msra.mxu0 %v1252
        %1262 = vmatmul.bf16.gmra.mxu0 %v1249
        %v1263 = vpop.f32.mrf.mxu0
        %v1264 = vadd.f32 0.0, %v1263
        %v1265 = vpop.f32.mrf.mxu0
        %1266 = vdwg.mxu0
        %v1268 = vsel %vm864, %v1217, 0
        %v1271 = vsel %vm1016, %v1101, 0
        %1273 = vmatpush.bf16.msra.mxu0 0
        %1274 = vmatpush.bf16.msra.mxu0 0
        %1275 = vmatpush.bf16.msra.mxu0 0
        %1276 = vmatpush.bf16.msra.mxu0 0
        %1277 = vmatpush.bf16.msra.mxu0 0
        %1278 = vmatpush.bf16.msra.mxu0 0
        %1279 = vmatpush.bf16.msra.mxu0 0
        %1280 = vmatpush.bf16.msra.mxu0 %v1271
        %1281 = vmatmul.bf16.gmra.mxu0 %v1268
        %v1282 = vpop.f32.mrf.mxu0
        %v1283 = vadd.f32 0.0, %v1282
        %v1284 = vpop.f32.mrf.mxu0
        %1285 = vdwg.mxu0
        %v1287 = vsel %vm864, %v1218, 0
        %v1290 = vsel %vm1016, %v1102, 0
        %1292 = vmatpush.bf16.msra.mxu0 0
        %1293 = vmatpush.bf16.msra.mxu0 0
        %1294 = vmatpush.bf16.msra.mxu0 0
        %1295 = vmatpush.bf16.msra.mxu0 0
        %1296 = vmatpush.bf16.msra.mxu0 0
        %1297 = vmatpush.bf16.msra.mxu0 0
        %1298 = vmatpush.bf16.msra.mxu0 0
        %1299 = vmatpush.bf16.msra.mxu0 %v1290
        %1300 = vmatmul.bf16.gmra.mxu0 %v1287
        %v1301 = vpop.f32.mrf.mxu0
        %v1302 = vadd.f32 0.0, %v1301
        %v1303 = vpop.f32.mrf.mxu0
        %1304 = vdwg.mxu0
        %v1306 = vsel %vm864, %v1219, 0
        %v1309 = vsel %vm1016, %v1103, 0
        %1311 = vmatpush.bf16.msra.mxu0 0
        %1312 = vmatpush.bf16.msra.mxu0 0
        %1313 = vmatpush.bf16.msra.mxu0 0
        %1314 = vmatpush.bf16.msra.mxu0 0
        %1315 = vmatpush.bf16.msra.mxu0 0
        %1316 = vmatpush.bf16.msra.mxu0 0
        %1317 = vmatpush.bf16.msra.mxu0 0
        %1318 = vmatpush.bf16.msra.mxu0 %v1309
        %1319 = vmatmul.bf16.gmra.mxu0 %v1306
        %v1320 = vpop.f32.mrf.mxu0
        %v1321 = vadd.f32 0.0, %v1320
        %v1322 = vpop.f32.mrf.mxu0
        %1323 = vdwg.mxu0
        %v1324 = vadd.f32 %v1244, %v1264
        %v1325 = vadd.f32 %v1245, %v1283
        %v1326 = vadd.f32 %v1246, %v1302
        %v1327 = vadd.f32 %v1247, %v1321
        %v1328 = vrcp.pop %v1240
        %v1329 = vrcp.pop %v1241
        %v1330 = vrcp.pop %v1242
        %v1331 = vrcp.pop %v1243
        %v1332 = vmul.f32 %v1324, %v1328
        %v1333 = vmul.f32 %v1325, %v1329
        %v1334 = vmul.f32 %v1326, %v1330
        %v1335 = vmul.f32 %v1327, %v1331
        %v1336 = vpack.c.bf16 %v1332, %v1332
        %v1337 = vpack.c.bf16 %v1333, %v1333
        %v1338 = vpack.c.bf16 %v1334, %v1334
        %v1339 = vpack.c.bf16 %v1335, %v1335
        %v1342 = vpack.i.b16 %v1337, %v1336
        %v1343 = vshrl.u32 %v1336, 16
        %v1344 = vshrl.u32 %v1337, 16
        %v1345 = vpack.i.b16 %v1344, %v1343
        %v1348 = vpack.i.b16 %v1339, %v1338
        %v1349 = vshrl.u32 %v1338, 16
        %v1350 = vshrl.u32 %v1339, 16
        %v1351 = vpack.i.b16 %v1350, %v1349
        %v1354 = vunpack.c.l.s4 1983009808
        %v1355 = vunpack.c.0.s8 %v1354
        %v1356 = vperm.slane %v1342, %v1355
        %v1359 = vunpack.c.l.s4 1983009808
        %v1360 = vunpack.c.0.s8 %v1359
        %v1361 = vperm.slane %v1348, %v1360
        %v1362 = vrot.slane %v1361, 4
        %v1363 = vsel %vm764, %v1362, %v1356
        %v1364 = vrot.slane %v1356, 4
        %v1365 = vsel %vm764, %v1361, %v1364
        %v1367 = vunpack.c.l.s4 1934713408
        %v1368 = vunpack.c.0.s8 %v1367
        %v1369 = vperm.slane %v1363, %v1368
        %v1371 = vunpack.c.l.s4 1934713408
        %v1372 = vunpack.c.0.s8 %v1371
        %v1373 = vperm.slane %v1365, %v1372
        %v1374 = vrot.slane %v1369, 4
        %v1375 = vsel %vm764, 0, %v1374
        %v1376 = vrot.slane %v1373, 4
        %v1377 = vsel %vm764, 0, %v1376
        %v1380 = vunpack.c.l.s4 1983009808
        %v1381 = vunpack.c.0.s8 %v1380
        %v1382 = vperm.slane %v1345, %v1381
        %v1385 = vunpack.c.l.s4 1983009808
        %v1386 = vunpack.c.0.s8 %v1385
        %v1387 = vperm.slane %v1351, %v1386
        %v1388 = vrot.slane %v1387, 4
        %v1389 = vsel %vm764, %v1388, %v1382
        %v1390 = vrot.slane %v1382, 4
        %v1391 = vsel %vm764, %v1387, %v1390
        %v1393 = vunpack.c.l.s4 1934713408
        %v1394 = vunpack.c.0.s8 %v1393
        %v1395 = vperm.slane %v1389, %v1394
        %v1397 = vunpack.c.l.s4 1934713408
        %v1398 = vunpack.c.0.s8 %v1397
        %v1399 = vperm.slane %v1391, %v1398
        %v1400 = vrot.slane %v1395, 4
        %v1401 = vsel %vm764, 0, %v1400
        %v1402 = vrot.slane %v1399, 4
        %v1403 = vsel %vm764, 0, %v1402
        %v1404 = vsel %vm764, %v1376, %v1369
        %v1406 = vunpack.c.l.s4 1983009808
        %v1407 = vunpack.c.0.s8 %v1406
        %v1408 = vperm.slane %v1404, %v1407
        %v1409 = vrot.slane %v1377, 4
        %v1410 = vsel %vm764, %v1409, %v1375
        %v1412 = vunpack.c.l.s4 1983009808
        %v1413 = vunpack.c.0.s8 %v1412
        %v1414 = vperm.slane %v1410, %v1413
        %v1415 = vrot.slane %v1414, 4
        %v1416 = vsel %vm764, %v1415, %v1408
        %v1418 = vunpack.c.l.s4 1934713408
        %v1419 = vunpack.c.0.s8 %v1418
        %v1420 = vperm.slane %v1416, %v1419
        %v1421 = vrot.slane %v1420, 4
        %v1422 = vsel %vm764, 0, %v1421
        %v1423 = vsel %vm764, %v1402, %v1395
        %v1425 = vunpack.c.l.s4 1983009808
        %v1426 = vunpack.c.0.s8 %v1425
        %v1427 = vperm.slane %v1423, %v1426
        %v1428 = vrot.slane %v1403, 4
        %v1429 = vsel %vm764, %v1428, %v1401
        %v1431 = vunpack.c.l.s4 1983009808
        %v1432 = vunpack.c.0.s8 %v1431
        %v1433 = vperm.slane %v1429, %v1432
        %v1434 = vrot.slane %v1433, 4
        %v1435 = vsel %vm764, %v1434, %v1427
        %v1437 = vunpack.c.l.s4 1934713408
        %v1438 = vunpack.c.0.s8 %v1437
        %v1439 = vperm.slane %v1435, %v1438
        %v1440 = vrot.slane %v1439, 4
        %v1441 = vsel %vm764, 0, %v1440
        %v1444 = vpack.i.b16 %v1439, %v1420
        %v1445 = vshrl.u32 %v1420, 16
        %v1446 = vshrl.u32 %v1439, 16
        %v1447 = vpack.i.b16 %v1446, %v1445
        %v1450 = vpack.i.b16 %v1441, %v1422
        %v1451 = vshrl.u32 %v1422, 16
        %v1452 = vshrl.u32 %v1441, 16
        %v1453 = vpack.i.b16 %v1452, %v1451
        %v1454 = vunpack.c.l.b16 %v1447
        %v1455 = vpack.c.b16 %v1454, %v1454
        %1456 = vrot.lane.b32.xlu0 %v1455, 8
        %v1457 = vpop.permute.xlu0 %1456
        %v1458 = vunpack.c.l.b16 %v1450
        %v1459 = vpack.c.b16 %v1458, %v1458
        %1460 = vrot.lane.b32.xlu0 %v1459, 16
        %v1461 = vpop.permute.xlu0 %1460
        %v1462 = vunpack.c.l.b16 %v1453
        %v1463 = vpack.c.b16 %v1462, %v1462
        %1464 = vrot.lane.b32.xlu0 %v1463, 24
        %v1465 = vpop.permute.xlu0 %1464
        %v1468 = vsel %vm864, %v1444, %v1457
        %vm1469 = vcmask 130048
        %v1471 = vsel %vm1469, %v1468, %v1461
        %vm1472 = vcmask 195584
        %v1474 = vsel %vm1472, %v1471, %v1465
        %v1475 = vld [vmem:[%s5] sm:$0xf]
        %v1476 = vld [vmem:[%s5 + $0x4] sm:$0xf]
        %v1477 = vld [vmem:[%s5 + $0x8] sm:$0xf]
        %v1478 = vld [vmem:[%s5 + $0xc] sm:$0xf]
        %v1479 = vld [vmem:[%s6] sm:$0x1]
        %v1481 = vperm.slane %v1479, 0
        %v1487 = vunpack.c.l.b16 %v1475
        %v1488 = vunpack.c.l.b16 %v1476
        %v1489 = vunpack.c.l.b16 %v1477
        %v1490 = vunpack.c.l.b16 %v1478
        %v1491 = vpack.c.b16 %v1488, %v1487
        %v1492 = vpack.c.b16 %v1490, %v1489
        %v1495 = vsel %vm715, %v1474, 0
        %1497 = vmatpush.bf16.msra.mxu0 0
        %1498 = vmatpush.bf16.msra.mxu0 0
        %1499 = vmatpush.bf16.msra.mxu0 0
        %1500 = vmatpush.bf16.msra.mxu0 0
        %1501 = vmatpush.bf16.msra.mxu0 0
        %1502 = vmatpush.bf16.msra.mxu0 0
        %1503 = vmatpush.bf16.msra.mxu0 %v1492
        %1504 = vmatpush.bf16.msra.mxu0 %v1491
        %1505 = vmatmul.bf16.gmra.mxu0 %v1495
        %v1506 = vpop.f32.mrf.mxu0
        %v1507 = vadd.f32 %v1481, %v1506
        %v1508 = vpop.f32.mrf.mxu0
        %1509 = vdwg.mxu0
        %v1510 = vadd.f32 %v695, %v1507
        %v1511 = vld [vmem:[%s7] sm:$0x1]
        %v1512 = vld [vmem:[%s8] sm:$0x1]
        %v1513 = vsel %vm715, %v1510, 0.0
        %1514 = vadd.xlane.f32.xlu0 %v1513
        %v1515 = vpop.xlane.xlu0 %1514
        %v1516 = vrcp.pop 32.0
        %v1517 = vmul.f32 32.0, %v1516
        %v1518 = vsub.f32 1.0, %v1517
        %v1519 = vmul.f32 %v1516, %v1518
        %v1520 = vadd.f32 %v1516, %v1519
        %vm1521 = vweird.f32 %v1516
        %v1522 = vsel %vm1521, %v1516, %v1520
        %v1523 = vmul.f32 %v1515, %v1522
        %v1524 = vsub.f32 %v1510, %v1523
        %v1525 = vmul.f32 %v1524, %v1524
        %v1526 = vsel %vm715, %v1525, 0.0
        %1527 = vadd.xlane.f32.xlu0 %v1526
        %v1528 = vpop.xlane.xlu0 %1527
        %v1529 = vmul.f32 %v1528, %v1522
        %v1530 = vadd.f32 %v1529, 1e-05
        %v1531 = vrsqrt.pop %v1530
        %v1532 = vmul.f32 %v1531, %v1530
        %v1533 = vmul.f32 %v1532, %v1531
        %v1534 = vmul.f32 0.5, %v1533
        %v1535 = vsub.f32 1.5, %v1534
        %v1536 = vmul.f32 %v1531, %v1535
        %vm1537 = vweird.f32 %v1530
        %vm1538 = vweird.f32 %v1531
        %vm1539 = vmor %vm1537, %vm1538
        %v1540 = vsel %vm1539, %v1531, %v1536
        %v1541 = vmul.f32 %v1524, %v1540
        %v1543 = vperm.slane %v1511, 0
        %v1545 = vmul.f32 %v1541, %v1543
        %v1547 = vperm.slane %v1512, 0
        %v1549 = vadd.f32 %v1545, %v1547
        %v1550 = vpack.c.bf16 %v1549, %v1549
        %v1551 = vld [vmem:[%s9] sm:$0xf]
        %v1552 = vld [vmem:[%s9 + $0x4] sm:$0xf]
        %v1553 = vld [vmem:[%s9 + $0x8] sm:$0xf]
        %v1554 = vld [vmem:[%s9 + $0xc] sm:$0xf]
        %v1555 = vld [vmem:[%s10] sm:$0x1]
        %v1557 = vperm.slane %v1555, 0
        %v1563 = vunpack.c.l.b16 %v1551
        %v1564 = vunpack.c.l.b16 %v1552
        %v1565 = vunpack.c.l.b16 %v1553
        %v1566 = vunpack.c.l.b16 %v1554
        %v1567 = vpack.c.b16 %v1564, %v1563
        %v1568 = vpack.c.b16 %v1566, %v1565
        %v1572 = vsel %vm715, %v1550, 0
        %1574 = vmatpush.bf16.msra.mxu0 0
        %1575 = vmatpush.bf16.msra.mxu0 0
        %1576 = vmatpush.bf16.msra.mxu0 0
        %1577 = vmatpush.bf16.msra.mxu0 0
        %1578 = vmatpush.bf16.msra.mxu0 0
        %1579 = vmatpush.bf16.msra.mxu0 0
        %1580 = vmatpush.bf16.msra.mxu0 %v1568
        %1581 = vmatpush.bf16.msra.mxu0 %v1567
        %1582 = vmatmul.bf16.gmra.mxu0 %v1572
        %v1583 = vpop.f32.mrf.mxu0
        %v1584 = vadd.f32 %v1557, %v1583
        %v1585 = vpop.f32.mrf.mxu0
        %1586 = vdwg.mxu0
        %v1587 = vmax.f32 %v1584, 0.0
        %v1588 = vpack.c.bf16 %v1587, %v1587
        %v1589 = vld [vmem:[%s11] sm:$0xf]
        %v1590 = vld [vmem:[%s11 + $0x4] sm:$0xf]
        %v1591 = vld [vmem:[%s11 + $0x8] sm:$0xf]
        %v1592 = vld [vmem:[%s11 + $0xc] sm:$0xf]
        %v1593 = vld [vmem:[%s11 + $0x10] sm:$0xf]
        %v1594 = vld [vmem:[%s11 + $0x14] sm:$0xf]
        %v1595 = vld [vmem:[%s11 + $0x18] sm:$0xf]
        %v1596 = vld [vmem:[%s11 + $0x1c] sm:$0xf]
        %v1597 = vld [vmem:[%s11 + $0x20] sm:$0xf]
        %v1598 = vld [vmem:[%s11 + $0x24] sm:$0xf]
        %v1599 = vld [vmem:[%s11 + $0x28] sm:$0xf]
        %v1600 = vld [vmem:[%s11 + $0x2c] sm:$0xf]
        %v1601 = vld [vmem:[%s11 + $0x30] sm:$0xf]
        %v1602 = vld [vmem:[%s11 + $0x34] sm:$0xf]
        %v1603 = vld [vmem:[%s11 + $0x38] sm:$0xf]
        %v1604 = vld [vmem:[%s11 + $0x3c] sm:$0xf]
        %v1605 = vld [vmem:[%s12] sm:$0x1]
        %v1607 = vperm.slane %v1605, 0
        %v1625 = vunpack.c.l.b16 %v1589
        %v1626 = vunpack.c.l.b16 %v1590
        %v1627 = vunpack.c.l.b16 %v1591
        %v1628 = vunpack.c.l.b16 %v1592
        %v1629 = vunpack.c.l.b16 %v1593
        %v1630 = vunpack.c.l.b16 %v1594
        %v1631 = vunpack.c.l.b16 %v1595
        %v1632 = vunpack.c.l.b16 %v1596
        %v1633 = vunpack.c.l.b16 %v1597
        %v1634 = vunpack.c.l.b16 %v1598
        %v1635 = vunpack.c.l.b16 %v1599
        %v1636 = vunpack.c.l.b16 %v1600
        %v1637 = vunpack.c.l.b16 %v1601
        %v1638 = vunpack.c.l.b16 %v1602
        %v1639 = vunpack.c.l.b16 %v1603
        %v1640 = vunpack.c.l.b16 %v1604
        %v1641 = vpack.c.b16 %v1626, %v1625
        %v1642 = vpack.c.b16 %v1628, %v1627
        %v1643 = vpack.c.b16 %v1630, %v1629
        %v1644 = vpack.c.b16 %v1632, %v1631
        %v1645 = vpack.c.b16 %v1634, %v1633
        %v1646 = vpack.c.b16 %v1636, %v1635
        %v1647 = vpack.c.b16 %v1638, %v1637
        %v1648 = vpack.c.b16 %v1640, %v1639
        %1657 = vmatpush.bf16.msra.mxu0 %v1648
        %1658 = vmatpush.bf16.msra.mxu0 %v1647
        %1659 = vmatpush.bf16.msra.mxu0 %v1646
        %1660 = vmatpush.bf16.msra.mxu0 %v1645
        %1661 = vmatpush.bf16.msra.mxu0 %v1644
        %1662 = vmatpush.bf16.msra.mxu0 %v1643
        %1663 = vmatpush.bf16.msra.mxu0 %v1642
        %1664 = vmatpush.bf16.msra.mxu0 %v1641
        %1665 = vmatmul.bf16.gmra.mxu0 %v1588
        %v1666 = vpop.f32.mrf.mxu0
        %v1667 = vadd.f32 %v1607, %v1666
        %v1668 = vpop.f32.mrf.mxu0
        %1669 = vdwg.mxu0
        %v1670 = vadd.f32 %v1510, %v1667
        %1671 = vst.msk [vmem:[%s462] sm:$0xff] %vm715, %v1670
        %s1672 = sand.u32 %s328, 1
        %s1673 = scalar_lea.sflag [#allocation7], %s1672
        %s1674 = sand.u32 %s328, 1
        %s1675 = smul.addr %s1674, 8
        %s1676 = scalar_lea.vmem [#allocation8], %s1675
        // Predicated region
        $region81: #{tpu_custom_call.1} parent=71 // pred_check
          %p1677 = pneg %p338
        $region82: #{tpu_custom_call.1} parent=71 // pred_check_branch
          %1679 = sbr.rel (%p1677) target = $region84
        $region83: #{tpu_custom_call.1} parent=71 // pred_region
          %1681 = vsyncadd %s1673, 0
          %s1682 = smul.addr %s32, 2
          %s1683 = sadd.s32 %s33, %s1682
          %s1684 = smul.addr %s1683, 8
          %s1685 = scalar_lea.hbm %s13, %s1684
          %s1687 = sshll.u32 %s1676, 4
          %s1688 = int_to_ptr.vmem [resolvable:$true] %s1687
          %s1689 = sshll.u32 %s1685, 4
          %s1690 = int_to_ptr.hbm [resolvable:$true] %s1689
          %1692 = dma.vmem_to_hbm [thread:$0]  %s1688, 128, %s1690, %s1673
        $region84: #{tpu_custom_call.1} parent=71 // pred_fallthru
          _
      $region72: #{tpu_custom_call.1} parent=5 // pred_fallthru
        _
      %p1693 = scmp.le.s32.totalorder 2, %s23
      // Predicated region
      $region85: #{tpu_custom_call.1} parent=5 // pred_check
        %p1694 = pneg %p1693
      $region86: #{tpu_custom_call.1} parent=5 // pred_check_branch
        %1696 = sbr.rel (%p1694) target = $region88
      $region87: #{tpu_custom_call.1} parent=5 // pred_region
        %s1697 = ssub.s32 %s23, 2
        // Predicated region
        $region89: #{tpu_custom_call.1} parent=87 // pred_check
          %p1698 = pneg %p344
        $region90: #{tpu_custom_call.1} parent=87 // pred_check_branch
          %1700 = sbr.rel (%p1698) target = $region92
        $region91: #{tpu_custom_call.1} parent=87 // pred_region
          %s1701 = sand.u32 %s329, 1
          %s1702 = scalar_lea.sflag [#allocation7], %s1701
          %s1703 = sand.u32 %s329, 1
          %s1704 = smul.addr %s1703, 8
          %s1705 = scalar_lea.vmem [#allocation8], %s1704
          %1707 = dma.done %s1702, 128
        $region92: #{tpu_custom_call.1} parent=87 // pred_fallthru
          _
      $region88: #{tpu_custom_call.1} parent=5 // pred_fallthru
        _
    $region6: #{tpu_custom_call.1} parent=1 // loop_footer
      %s27 = sadd.s32 1, %s23
    $region7: #{tpu_custom_call.1} parent=1 // loop_footer_branch
      %22 = sbr.rel target = $region3
    $region8: #{tpu_custom_call.1} parent=1 // loop_exit
      _
    %1708 = vsyncpa [#allocation6], 1
    %s1709 = scalar_lea.sflag [#allocation6], 1
    %1710 = vsyncpa %s1709, 1
    %1711 = vsyncpa [#allocation7], 1
    %s1712 = scalar_lea.sflag [#allocation7], 1
    %1713 = vsyncpa %s1712, 1

// kernel: tpu_custom_call.1
$region0: #{tpu_custom_call.1}
  #allocation0 [shape = 'u32[]', space=smem, size = 0x4, offset = 0x4, fixed_abs, tag = 'smem constant byte address 0x4 - core index']
  #allocation1 [shape = 'u32[72,128]{1,0:T(1,128)}', space=vmem, size = 0x9000, scoped, tag = 'internal scratch']
  #allocation2 [shape = 'bf16[16,32]{1,0:T(8,128)(2,1)}', space=vmem, size = 0x1000, scoped, tag = 'scratch operand']
  #allocation3 [shape = 'bf16[2,4,8,8]{3,2,1,0:T(8,128)(2,1)}', space=vmem, size = 0x4000, scoped, tag = 'scratch operand']
  #allocation4 [shape = 'bf16[2,4,8,8]{3,2,1,0:T(8,128)(2,1)}', space=vmem, size = 0x4000, scoped, tag = 'scratch operand']
  %s0 = inlined_call_operand.vmem [shape: bf16[2,16,32], index: 0, kind: input, shape index: {}]
  %s1 = inlined_call_operand.hbm [shape: f32[1,32], index: 1, kind: input, shape index: {}]
  %s2 = inlined_call_operand.vmem [shape: f32[1,32], index: 2, kind: input, shape index: {}]
  %s3 = inlined_call_operand.vmem [shape: bf16[32,32], index: 3, kind: input, shape index: {}]
  %s4 = inlined_call_operand.vmem [shape: bf16[32,64], index: 4, kind: input, shape index: {}]
  %s5 = inlined_call_operand.vmem [shape: bf16[4,8,32], index: 5, kind: input, shape index: {}]
  %s6 = inlined_call_operand.vmem [shape: f32[1,32], index: 6, kind: input, shape index: {}]
  %s7 = inlined_call_operand.vmem [shape: f32[1,32], index: 7, kind: input, shape index: {}]
  %s8 = inlined_call_operand.vmem [shape: f32[1,32], index: 8, kind: input, shape index: {}]
  %s9 = inlined_call_operand.vmem [shape: bf16[32,128], index: 9, kind: input, shape index: {}]
  %s10 = inlined_call_operand.vmem [shape: f32[1,128], index: 10, kind: input, shape index: {}]
  %s11 = inlined_call_operand.vmem [shape: bf16[128,32], index: 11, kind: input, shape index: {}]
  %s12 = inlined_call_operand.vmem [shape: f32[1,32], index: 12, kind: input, shape index: {}]
  %s13 = inlined_call_operand.hbm [shape: f32[2,16,32], index: 13, kind: output, shape index: {}]
  %s14 = sld [smem:[#allocation0]]
  $region93: #{tpu_custom_call.1} parent=0
    _
  %s16 = ssub.s32 1, %s14
  %s17 = scalar_select 0, %s16, %s14
  $region1: #{tpu_custom_call.1} parent=0
    #allocation5 [shape = 'u8[512]{0}', space=vmem, size = 0x400, scoped, tag = 'input window, operand 1, single buffered']
    #allocation6 [shape = 's32[2]{0}', space=sflag, size = 0x8, scoped, tag = 'scoped memory for tpu_custom_call.1']
    #allocation7 [shape = 's32[2]{0}', space=sflag, size = 0x8, scoped, tag = 'scoped memory for tpu_custom_call.1']
    #allocation8 [shape = 'u8[8192]{0}', space=vmem, size = 0x2000, scoped, tag = 'output window, operand 0']
    %18 = vsyncpa [#allocation6], 0
    %19 = vsyncpa [#allocation7], 0
    %s20 = scalar_lea.sflag [#allocation7], 1
    %21 = vsyncpa %s20, 0
    loop: start=0, step=1, limit=6
    $region2: #{tpu_custom_call.1} parent=1 // loop_pre_header
      _
    $region3: #{tpu_custom_call.1} parent=1 // loop_header
      %s23 = sphi 0, %s27
      %p24 = scmp.ge.s32.totalorder %s23, 6
      %s30 = sphi 0, %s42
      %s31 = sphi 0, %s38
      %s32 = sphi 0, %s30
      %s33 = sphi 0, %s31
      %s34 = sphi 0, %s32
      %s35 = sphi 0, %s33
      %s45 = sphi 0, %s47
      %s48 = sphi 0, %s45
      %s49 = sphi 0, %s48
      %s65 = sphi 0, %s49
      %s69 = sphi 0, %s69
      %s71 = sphi 0, %s69
      %s72 = sphi 0, %s71
      %s86 = sphi 0, %s72
      %s90 = sphi 0, %s90
      %s92 = sphi 0, %s90
      %s93 = sphi 0, %s92
      %s107 = sphi 0, %s93
      %s111 = sphi 0, %s111
      %s113 = sphi 0, %s111
      %s114 = sphi 0, %s113
      %s128 = sphi 0, %s114
      %s132 = sphi 0, %s132
      %s134 = sphi 0, %s132
      %s135 = sphi 0, %s134
      %s149 = sphi 0, %s135
      %s153 = sphi 0, %s153
      %s155 = sphi 0, %s153
      %s156 = sphi 0, %s155
      %s170 = sphi 0, %s156
      %s174 = sphi 0, %s174
      %s176 = sphi 0, %s174
      %s177 = sphi 0, %s176
      %s191 = sphi 0, %s177
      %s195 = sphi 0, %s195
      %s197 = sphi 0, %s195
      %s198 = sphi 0, %s197
      %s212 = sphi 0, %s198
      %s216 = sphi 0, %s216
      %s218 = sphi 0, %s216
      %s219 = sphi 0, %s218
      %s233 = sphi 0, %s219
      %s237 = sphi 0, %s237
      %s239 = sphi 0, %s237
      %s240 = sphi 0, %s239
      %s254 = sphi 0, %s240
      %s258 = sphi 0, %s258
      %s260 = sphi 0, %s258
      %s261 = sphi 0, %s260
      %s275 = sphi 0, %s261
      %s279 = sphi 0, %s279
      %s281 = sphi 0, %s279
      %s282 = sphi 0, %s281
      %s296 = sphi 0, %s282
      %s300 = sphi 0, %s300
      %s302 = sphi 0, %s300
      %s303 = sphi 0, %s302
      %s317 = sphi 0, %s303
      %s325 = sphi 0, %s327
      %s328 = sphi 0, %s325
      %s329 = sphi 0, %s328
      %s345 = sphi 0, %s329
    $region4: #{tpu_custom_call.1} parent=1 // loop_header_branch
      %26 = sbr.rel (%p24) target = $region8
    $region5: #{tpu_custom_call.1} parent=1 // loop_body
      %s28 = ssub.s32 %s23, 1
      %s29 = ssub.s32 %s23, 2
      %s36 = sadd.s32 1, %s31
      %p37 = scmp.ge.s32.totalorder %s36, 2
      %s38 = scalar_select %p37, 0, %s36
      %s39 = sadd.s32 1, %s30
      %s40 = scalar_select %p37, %s39, %s30
      %p41 = scmp.ge.s32.totalorder %s40, 2
      %s42 = scalar_select %p41, 0, %s40
      %s43 = ssub.s32 %s30, %s42
      %p44 = scmp.eq.s32.totalorder %s43, 0
      %s46 = sadd.s32 %s45, 1
      %s47 = scalar_select %p44, %s45, %s46
      %p50 = pneg %p44
      %p51 = scmp.eq.s32.totalorder %s23, 3
      %p52 = por %p50, %p51
      %p53 = scmp.ne.s32.totalorder %s45, %s48
      %p54 = scmp.eq.s32.totalorder %s23, 0
      %p55 = por %p53, %p54
      %p56 = scmp.ne.s32.totalorder %s45, %s48
      %p57 = scmp.eq.s32.totalorder %s28, 3
      %p58 = por %p56, %p57
      %p59 = scmp.ne.s32.totalorder %s48, %s49
      %p60 = scmp.eq.s32.totalorder %s28, 0
      %p61 = por %p59, %p60
      %p62 = scmp.ne.s32.totalorder %s48, %s49
      %p63 = scmp.eq.s32.totalorder %s29, 3
      %p64 = por %p62, %p63
      %p66 = scmp.ne.s32.totalorder %s49, %s65
      %p67 = scmp.eq.s32.totalorder %s29, 0
      %p68 = por %p66, %p67
      %s70 = sadd.s32 %s69, 1
      %p73 = scmp.eq.s32.totalorder %s23, 3
      %p74 = scmp.ne.s32.totalorder %s69, %s71
      %p75 = scmp.eq.s32.totalorder %s23, 0
      %p76 = por %p74, %p75
      %p77 = scmp.ne.s32.totalorder %s69, %s71
      %p78 = scmp.eq.s32.totalorder %s28, 3
      %p79 = por %p77, %p78
      %p80 = scmp.ne.s32.totalorder %s71, %s72
      %p81 = scmp.eq.s32.totalorder %s28, 0
      %p82 = por %p80, %p81
      %p83 = scmp.ne.s32.totalorder %s71, %s72
      %p84 = scmp.eq.s32.totalorder %s29, 3
      %p85 = por %p83, %p84
      %p87 = scmp.ne.s32.totalorder %s72, %s86
      %p88 = scmp.eq.s32.totalorder %s29, 0
      %p89 = por %p87, %p88
      %s91 = sadd.s32 %s90, 1
      %p94 = scmp.eq.s32.totalorder %s23, 3
      %p95 = scmp.ne.s32.totalorder %s90, %s92
      %p96 = scmp.eq.s32.totalorder %s23, 0
      %p97 = por %p95, %p96
      %p98 = scmp.ne.s32.totalorder %s90, %s92
      %p99 = scmp.eq.s32.totalorder %s28, 3
      %p100 = por %p98, %p99
      %p101 = scmp.ne.s32.totalorder %s92, %s93
      %p102 = scmp.eq.s32.totalorder %s28, 0
      %p103 = por %p101, %p102
      %p104 = scmp.ne.s32.totalorder %s92, %s93
      %p105 = scmp.eq.s32.totalorder %s29, 3
      %p106 = por %p104, %p105
      %p108 = scmp.ne.s32.totalorder %s93, %s107
      %p109 = scmp.eq.s32.totalorder %s29, 0
      %p110 = por %p108, %p109
      %s112 = sadd.s32 %s111, 1
      %p115 = scmp.eq.s32.totalorder %s23, 3
      %p116 = scmp.ne.s32.totalorder %s111, %s113
      %p117 = scmp.eq.s32.totalorder %s23, 0
      %p118 = por %p116, %p117
      %p119 = scmp.ne.s32.totalorder %s111, %s113
      %p120 = scmp.eq.s32.totalorder %s28, 3
      %p121 = por %p119, %p120
      %p122 = scmp.ne.s32.totalorder %s113, %s114
      %p123 = scmp.eq.s32.totalorder %s28, 0
      %p124 = por %p122, %p123
      %p125 = scmp.ne.s32.totalorder %s113, %s114
      %p126 = scmp.eq.s32.totalorder %s29, 3
      %p127 = por %p125, %p126
      %p129 = scmp.ne.s32.totalorder %s114, %s128
      %p130 = scmp.eq.s32.totalorder %s29, 0
      %p131 = por %p129, %p130
      %s133 = sadd.s32 %s132, 1
      %p136 = scmp.eq.s32.totalorder %s23, 3
      %p137 = scmp.ne.s32.totalorder %s132, %s134
      %p138 = scmp.eq.s32.totalorder %s23, 0
      %p139 = por %p137, %p138
      %p140 = scmp.ne.s32.totalorder %s132, %s134
      %p141 = scmp.eq.s32.totalorder %s28, 3
      %p142 = por %p140, %p141
      %p143 = scmp.ne.s32.totalorder %s134, %s135
      %p144 = scmp.eq.s32.totalorder %s28, 0
      %p145 = por %p143, %p144
      %p146 = scmp.ne.s32.totalorder %s134, %s135
      %p147 = scmp.eq.s32.totalorder %s29, 3
      %p148 = por %p146, %p147
      %p150 = scmp.ne.s32.totalorder %s135, %s149
      %p151 = scmp.eq.s32.totalorder %s29, 0
      %p152 = por %p150, %p151
      %s154 = sadd.s32 %s153, 1
      %p157 = scmp.eq.s32.totalorder %s23, 3
      %p158 = scmp.ne.s32.totalorder %s153, %s155
      %p159 = scmp.eq.s32.totalorder %s23, 0
      %p160 = por %p158, %p159
      %p161 = scmp.ne.s32.totalorder %s153, %s155
      %p162 = scmp.eq.s32.totalorder %s28, 3
      %p163 = por %p161, %p162
      %p164 = scmp.ne.s32.totalorder %s155, %s156
      %p165 = scmp.eq.s32.totalorder %s28, 0
      %p166 = por %p164, %p165
      %p167 = scmp.ne.s32.totalorder %s155, %s156
      %p168 = scmp.eq.s32.totalorder %s29, 3
      %p169 = por %p167, %p168
      %p171 = scmp.ne.s32.totalorder %s156, %s170
      %p172 = scmp.eq.s32.totalorder %s29, 0
      %p173 = por %p171, %p172
      %s175 = sadd.s32 %s174, 1
      %p178 = scmp.eq.s32.totalorder %s23, 3
      %p179 = scmp.ne.s32.totalorder %s174, %s176
      %p180 = scmp.eq.s32.totalorder %s23, 0
      %p181 = por %p179, %p180
      %p182 = scmp.ne.s32.totalorder %s174, %s176
      %p183 = scmp.eq.s32.totalorder %s28, 3
      %p184 = por %p182, %p183
      %p185 = scmp.ne.s32.totalorder %s176, %s177
      %p186 = scmp.eq.s32.totalorder %s28, 0
      %p187 = por %p185, %p186
      %p188 = scmp.ne.s32.totalorder %s176, %s177
      %p189 = scmp.eq.s32.totalorder %s29, 3
      %p190 = por %p188, %p189
      %p192 = scmp.ne.s32.totalorder %s177, %s191
      %p193 = scmp.eq.s32.totalorder %s29, 0
      %p194 = por %p192, %p193
      %s196 = sadd.s32 %s195, 1
      %p199 = scmp.eq.s32.totalorder %s23, 3
      %p200 = scmp.ne.s32.totalorder %s195, %s197
      %p201 = scmp.eq.s32.totalorder %s23, 0
      %p202 = por %p200, %p201
      %p203 = scmp.ne.s32.totalorder %s195, %s197
      %p204 = scmp.eq.s32.totalorder %s28, 3
      %p205 = por %p203, %p204
      %p206 = scmp.ne.s32.totalorder %s197, %s198
      %p207 = scmp.eq.s32.totalorder %s28, 0
      %p208 = por %p206, %p207
      %p209 = scmp.ne.s32.totalorder %s197, %s198
      %p210 = scmp.eq.s32.totalorder %s29, 3
      %p211 = por %p209, %p210
      %p213 = scmp.ne.s32.totalorder %s198, %s212
      %p214 = scmp.eq.s32.totalorder %s29, 0
      %p215 = por %p213, %p214
      %s217 = sadd.s32 %s216, 1
      %p220 = scmp.eq.s32.totalorder %s23, 3
      %p221 = scmp.ne.s32.totalorder %s216, %s218
      %p222 = scmp.eq.s32.totalorder %s23, 0
      %p223 = por %p221, %p222
      %p224 = scmp.ne.s32.totalorder %s216, %s218
      %p225 = scmp.eq.s32.totalorder %s28, 3
      %p226 = por %p224, %p225
      %p227 = scmp.ne.s32.totalorder %s218, %s219
      %p228 = scmp.eq.s32.totalorder %s28, 0
      %p229 = por %p227, %p228
      %p230 = scmp.ne.s32.totalorder %s218, %s219
      %p231 = scmp.eq.s32.totalorder %s29, 3
      %p232 = por %p230, %p231
      %p234 = scmp.ne.s32.totalorder %s219, %s233
      %p235 = scmp.eq.s32.totalorder %s29, 0
      %p236 = por %p234, %p235
      %s238 = sadd.s32 %s237, 1
      %p241 = scmp.eq.s32.totalorder %s23, 3
      %p242 = scmp.ne.s32.totalorder %s237, %s239
      %p243 = scmp.eq.s32.totalorder %s23, 0
      %p244 = por %p242, %p243
      %p245 = scmp.ne.s32.totalorder %s237, %s239
      %p246 = scmp.eq.s32.totalorder %s28, 3
      %p247 = por %p245, %p246
      %p248 = scmp.ne.s32.totalorder %s239, %s240
      %p249 = scmp.eq.s32.totalorder %s28, 0
      %p250 = por %p248, %p249
      %p251 = scmp.ne.s32.totalorder %s239, %s240
      %p252 = scmp.eq.s32.totalorder %s29, 3
      %p253 = por %p251, %p252
      %p255 = scmp.ne.s32.totalorder %s240, %s254
      %p256 = scmp.eq.s32.totalorder %s29, 0
      %p257 = por %p255, %p256
      %s259 = sadd.s32 %s258, 1
      %p262 = scmp.eq.s32.totalorder %s23, 3
      %p263 = scmp.ne.s32.totalorder %s258, %s260
      %p264 = scmp.eq.s32.totalorder %s23, 0
      %p265 = por %p263, %p264
      %p266 = scmp.ne.s32.totalorder %s258, %s260
      %p267 = scmp.eq.s32.totalorder %s28, 3
      %p268 = por %p266, %p267
      %p269 = scmp.ne.s32.totalorder %s260, %s261
      %p270 = scmp.eq.s32.totalorder %s28, 0
      %p271 = por %p269, %p270
      %p272 = scmp.ne.s32.totalorder %s260, %s261
      %p273 = scmp.eq.s32.totalorder %s29, 3
      %p274 = por %p272, %p273
      %p276 = scmp.ne.s32.totalorder %s261, %s275
      %p277 = scmp.eq.s32.totalorder %s29, 0
      %p278 = por %p276, %p277
      %s280 = sadd.s32 %s279, 1
      %p283 = scmp.eq.s32.totalorder %s23, 3
      %p284 = scmp.ne.s32.totalorder %s279, %s281
      %p285 = scmp.eq.s32.totalorder %s23, 0
      %p286 = por %p284, %p285
      %p287 = scmp.ne.s32.totalorder %s279, %s281
      %p288 = scmp.eq.s32.totalorder %s28, 3
      %p289 = por %p287, %p288
      %p290 = scmp.ne.s32.totalorder %s281, %s282
      %p291 = scmp.eq.s32.totalorder %s28, 0
      %p292 = por %p290, %p291
      %p293 = scmp.ne.s32.totalorder %s281, %s282
      %p294 = scmp.eq.s32.totalorder %s29, 3
      %p295 = por %p293, %p294
      %p297 = scmp.ne.s32.totalorder %s282, %s296
      %p298 = scmp.eq.s32.totalorder %s29, 0
      %p299 = por %p297, %p298
      %s301 = sadd.s32 %s300, 1
      %p304 = scmp.eq.s32.totalorder %s23, 3
      %p305 = scmp.ne.s32.totalorder %s300, %s302
      %p306 = scmp.eq.s32.totalorder %s23, 0
      %p307 = por %p305, %p306
      %p308 = scmp.ne.s32.totalorder %s300, %s302
      %p309 = scmp.eq.s32.totalorder %s28, 3
      %p310 = por %p308, %p309
      %p311 = scmp.ne.s32.totalorder %s302, %s303
      %p312 = scmp.eq.s32.totalorder %s28, 0
      %p313 = por %p311, %p312
      %p314 = scmp.ne.s32.totalorder %s302, %s303
      %p315 = scmp.eq.s32.totalorder %s29, 3
      %p316 = por %p314, %p315
      %p318 = scmp.ne.s32.totalorder %s303, %s317
      %p319 = scmp.eq.s32.totalorder %s29, 0
      %p320 = por %p318, %p319
      %s321 = ssub.s32 %s30, %s42
      %s322 = ssub.s32 %s31, %s38
      %s323 = sor.u32 %s321, %s322
      %p324 = scmp.eq.s32.totalorder %s323, 0
      %s326 = sadd.s32 %s325, 1
      %s327 = scalar_select %p324, %s325, %s326
      %p330 = pneg %p324
      %p331 = scmp.eq.s32.totalorder %s23, 3
      %p332 = por %p330, %p331
      %p333 = scmp.ne.s32.totalorder %s325, %s328
      %p334 = scmp.eq.s32.totalorder %s23, 0
      %p335 = por %p333, %p334
      %p336 = scmp.ne.s32.totalorder %s325, %s328
      %p337 = scmp.eq.s32.totalorder %s28, 3
      %p338 = por %p336, %p337
      %p339 = scmp.ne.s32.totalorder %s328, %s329
      %p340 = scmp.eq.s32.totalorder %s28, 0
      %p341 = por %p339, %p340
      %p342 = scmp.ne.s32.totalorder %s328, %s329
      %p343 = scmp.eq.s32.totalorder %s29, 3
      %p344 = por %p342, %p343
      %p346 = scmp.ne.s32.totalorder %s329, %s345
      %p347 = scmp.eq.s32.totalorder %s29, 0
      %p348 = por %p346, %p347
      %p349 = scmp.le.s32.totalorder 1, %s23
      %p350 = scmp.lt.s32.totalorder %s23, 5
      %p351 = pnand %p349, %p350
      %p352 = pneg %p351
      // Predicated region
      $region9: #{tpu_custom_call.1} parent=5 // pred_check
        _
      $region10: #{tpu_custom_call.1} parent=5 // pred_check_branch
        %354 = sbr.rel (%p351) target = $region12
      $region11: #{tpu_custom_call.1} parent=5 // pred_region
        %s355 = ssub.s32 %s23, 1
        // Predicated region
        $region13: #{tpu_custom_call.1} parent=11 // pred_check
          %p356 = pneg %p82
        $region14: #{tpu_custom_call.1} parent=11 // pred_check_branch
          %358 = sbr.rel (%p356) target = $region16
        $region15: #{tpu_custom_call.1} parent=11 // pred_region
          %360 = vsyncadd [#allocation6], 0
          %s362 = sshll.u32 %s1, 4
          %s363 = int_to_ptr.hbm [resolvable:$true] %s362
          %s364 = sshll.u32 [#allocation5], 4
          %s365 = int_to_ptr.vmem [resolvable:$true] %s364
          %367 = dma.hbm_to_vmem [thread:$0]  %s363, 16, %s365, [#allocation6]
        $region16: #{tpu_custom_call.1} parent=11 // pred_fallthru
          _
        // Predicated region
        $region17: #{tpu_custom_call.1} parent=11 // pred_check
          %p368 = pneg %p103
        $region18: #{tpu_custom_call.1} parent=11 // pred_check_branch
          %370 = sbr.rel (%p368) target = $region20
        $region19: #{tpu_custom_call.1} parent=11 // pred_region
          _
        $region20: #{tpu_custom_call.1} parent=11 // pred_fallthru
          _
        // Predicated region
        $region21: #{tpu_custom_call.1} parent=11 // pred_check
          %p371 = pneg %p124
        $region22: #{tpu_custom_call.1} parent=11 // pred_check_branch
          %373 = sbr.rel (%p371) target = $region24
        $region23: #{tpu_custom_call.1} parent=11 // pred_region
          _
        $region24: #{tpu_custom_call.1} parent=11 // pred_fallthru
          _
        // Predicated region
        $region25: #{tpu_custom_call.1} parent=11 // pred_check
          %p374 = pneg %p145
        $region26: #{tpu_custom_call.1} parent=11 // pred_check_branch
          %376 = sbr.rel (%p374) target = $region28
        $region27: #{tpu_custom_call.1} parent=11 // pred_region
          _
        $region28: #{tpu_custom_call.1} parent=11 // pred_fallthru
          _
        // Predicated region
        $region29: #{tpu_custom_call.1} parent=11 // pred_check
          %p377 = pneg %p166
        $region30: #{tpu_custom_call.1} parent=11 // pred_check_branch
          %379 = sbr.rel (%p377) target = $region32
        $region31: #{tpu_custom_call.1} parent=11 // pred_region
          _
        $region32: #{tpu_custom_call.1} parent=11 // pred_fallthru
          _
        // Predicated region
        $region33: #{tpu_custom_call.1} parent=11 // pred_check
          %p380 = pneg %p187
        $region34: #{tpu_custom_call.1} parent=11 // pred_check_branch
          %382 = sbr.rel (%p380) target = $region36
        $region35: #{tpu_custom_call.1} parent=11 // pred_region
          _
        $region36: #{tpu_custom_call.1} parent=11 // pred_fallthru
          _
        // Predicated region
        $region37: #{tpu_custom_call.1} parent=11 // pred_check
          %p383 = pneg %p208
        $region38: #{tpu_custom_call.1} parent=11 // pred_check_branch
          %385 = sbr.rel (%p383) target = $region40
        $region39: #{tpu_custom_call.1} parent=11 // pred_region
          _
        $region40: #{tpu_custom_call.1} parent=11 // pred_fallthru
          _
        // Predicated region
        $region41: #{tpu_custom_call.1} parent=11 // pred_check
          %p386 = pneg %p229
        $region42: #{tpu_custom_call.1} parent=11 // pred_check_branch
          %388 = sbr.rel (%p386) target = $region44
        $region43: #{tpu_custom_call.1} parent=11 // pred_region
          _
        $region44: #{tpu_custom_call.1} parent=11 // pred_fallthru
          _
        // Predicated region
        $region45: #{tpu_custom_call.1} parent=11 // pred_check
          %p389 = pneg %p250
        $region46: #{tpu_custom_call.1} parent=11 // pred_check_branch
          %391 = sbr.rel (%p389) target = $region48
        $region47: #{tpu_custom_call.1} parent=11 // pred_region
          _
        $region48: #{tpu_custom_call.1} parent=11 // pred_fallthru
          _
        // Predicated region
        $region49: #{tpu_custom_call.1} parent=11 // pred_check
          %p392 = pneg %p271
        $region50: #{tpu_custom_call.1} parent=11 // pred_check_branch
          %394 = sbr.rel (%p392) target = $region52
        $region51: #{tpu_custom_call.1} parent=11 // pred_region
          _
        $region52: #{tpu_custom_call.1} parent=11 // pred_fallthru
          _
        // Predicated region
        $region53: #{tpu_custom_call.1} parent=11 // pred_check
          %p395 = pneg %p292
        $region54: #{tpu_custom_call.1} parent=11 // pred_check_branch
          %397 = sbr.rel (%p395) target = $region56
        $region55: #{tpu_custom_call.1} parent=11 // pred_region
          _
        $region56: #{tpu_custom_call.1} parent=11 // pred_fallthru
          _
        // Predicated region
        $region57: #{tpu_custom_call.1} parent=11 // pred_check
          %p398 = pneg %p313
        $region58: #{tpu_custom_call.1} parent=11 // pred_check_branch
          %400 = sbr.rel (%p398) target = $region60
        $region59: #{tpu_custom_call.1} parent=11 // pred_region
          _
        $region60: #{tpu_custom_call.1} parent=11 // pred_fallthru
          _
      $region12: #{tpu_custom_call.1} parent=5 // pred_fallthru
        _
      %p401 = scmp.lt.s32.totalorder %s23, 4
      // Predicated region
      $region61: #{tpu_custom_call.1} parent=5 // pred_check
        %p402 = pneg %p401
      $region62: #{tpu_custom_call.1} parent=5 // pred_check_branch
        %404 = sbr.rel (%p402) target = $region64
      $region63: #{tpu_custom_call.1} parent=5 // pred_region
        // Predicated region
        $region65: #{tpu_custom_call.1} parent=63 // pred_check
          %p405 = pneg %p55
        $region66: #{tpu_custom_call.1} parent=63 // pred_check_branch
          %407 = sbr.rel (%p405) target = $region68
        $region67: #{tpu_custom_call.1} parent=63 // pred_region
          %p408 = scmp.lt.s32.totalorder %s30, 1
          %s409 = scalar_select %p408, %s30, 1
          %s410 = smul.addr %s409, 2
          %s411 = smul.addr %s410, 4
          %s412 = scalar_lea.vmem %s0, %s411
        $region68: #{tpu_custom_call.1} parent=63 // pred_fallthru
          _
      $region64: #{tpu_custom_call.1} parent=5 // pred_fallthru
        _
      %p413 = scmp.le.s32.totalorder 1, %s23
      %p414 = scmp.lt.s32.totalorder %s23, 5
      %p415 = pnand %p413, %p414
      %p416 = pneg %p415
      // Predicated region
      $region69: #{tpu_custom_call.1} parent=5 // pred_check
        _
      $region70: #{tpu_custom_call.1} parent=5 // pred_check_branch
        %418 = sbr.rel (%p415) target = $region72
      $region71: #{tpu_custom_call.1} parent=5 // pred_region
        %s419 = ssub.s32 %s23, 1
        // Predicated region
        $region73: #{tpu_custom_call.1} parent=71 // pred_check
          %p420 = pneg %p82
        $region74: #{tpu_custom_call.1} parent=71 // pred_check_branch
          %422 = sbr.rel (%p420) target = $region76
        $region75: #{tpu_custom_call.1} parent=71 // pred_region
          %424 = dma.done [#allocation6], 16
        $region76: #{tpu_custom_call.1} parent=71 // pred_fallthru
          _
        %p425 = scmp.lt.s32.totalorder %s32, 1
        %s426 = scalar_select %p425, %s32, 1
        %s427 = smul.addr %s426, 2
        %s428 = smul.addr %s427, 4
        %s429 = scalar_lea.vmem %s0, %s428
        %p430 = pneg %p61
        %p431 = pneg %p58
        %p432 = pneg %p82
        %p433 = pneg %p79
        %p434 = pneg %p103
        %p435 = pneg %p100
        %p436 = pneg %p124
        %p437 = pneg %p121
        %p438 = pneg %p145
        %p439 = pneg %p142
        %p440 = pneg %p166
        %p441 = pneg %p163
        %p442 = pneg %p187
        %p443 = pneg %p184
        %p444 = pneg %p208
        %p445 = pneg %p205
        %p446 = pneg %p229
        %p447 = pneg %p226
        %p448 = pneg %p250
        %p449 = pneg %p247
        %p450 = pneg %p271
        %p451 = pneg %p268
        %p452 = pneg %p292
        %p453 = pneg %p289
        %p454 = pneg %p313
        %p455 = pneg %p310
        %p456 = pneg %p341
        %p457 = pneg %p338
        %s458 = sand.u32 %s328, 1
        %s459 = scalar_lea.sflag [#allocation7], %s458
        %s460 = sand.u32 %s328, 1
        %s461 = smul.addr %s460, 8
        %s462 = scalar_lea.vmem [#allocation8], %s461
        %p463 = scmp.lt.s32.totalorder %s32, 1
        %s464 = scalar_select %p463, %s32, 1
        %s465 = smul.addr %s464, 2
        %s466 = smul.addr %s465, 4
        %s467 = scalar_lea.vmem %s0, %s466
        %v469 = vld [vmem:[#allocation5] sm:$0x1]
        %v470 = vld [vmem:[%s2] sm:$0x1]
        %p471 = scmp.eq.s32.totalorder %s33, 0
        // Predicated region
        $region77: #{tpu_custom_call.1} parent=71 // pred_check
          %p472 = pneg %p471
        $region78: #{tpu_custom_call.1} parent=71 // pred_check_branch
          %474 = sbr.rel (%p472) target = $region80
        $region79: #{tpu_custom_call.1} parent=71 // pred_region
          %v475 = vld [vmem:[%s467] sm:$0xf]
          %v476 = vunpack.c.l.bf16 %v475
          %vm477 = vcmask 261120
          %v478 = vsel %vm477, %v476, 0.0
          %479 = vadd.xlane.f32.xlu0 %v478
          %v480 = vpop.xlane.xlu0 %479
          %v481 = vrcp.pop 32.0
          %v482 = vmul.f32 32.0, %v481
          %v483 = vsub.f32 1.0, %v482
          %v484 = vmul.f32 %v481, %v483
          %v485 = vadd.f32 %v481, %v484
          %vm486 = vweird.f32 %v481
          %v487 = vsel %vm486, %v481, %v485
          %v488 = vmul.f32 %v480, %v487
          %v489 = vsub.f32 %v476, %v488
          %v490 = vmul.f32 %v489, %v489
          %v491 = vsel %vm477, %v490, 0.0
          %492 = vadd.xlane.f32.xlu0 %v491
          %v493 = vpop.xlane.xlu0 %492
          %v494 = vmul.f32 %v493, %v487
          %v495 = vadd.f32 %v494, 1e-05
          %v496 = vrsqrt.pop %v495
          %v497 = vmul.f32 %v496, %v495
          %v498 = vmul.f32 %v497, %v496
          %v499 = vmul.f32 0.5, %v498
          %v500 = vsub.f32 1.5, %v499
          %v501 = vmul.f32 %v496, %v500
          %vm502 = vweird.f32 %v495
          %vm503 = vweird.f32 %v496
          %vm504 = vmor %vm502, %vm503
          %v505 = vsel %vm504, %v496, %v501
          %v506 = vmul.f32 %v489, %v505
          %v508 = vperm.slane %v469, 0
          %v510 = vmul.f32 %v506, %v508
          %v512 = vperm.slane %v470, 0
          %v514 = vadd.f32 %v510, %v512
          %v515 = vpack.c.bf16 %v514, %v514
          %vm516 = vcmask 257024
          %517 = vst.msk [vmem:[#allocation2] sm:$0xf] %vm516, %v515
          %v518 = vld [vmem:[%s4] sm:$0xf]
          %v519 = vld [vmem:[%s4 + $0x4] sm:$0xf]
          %v520 = vld [vmem:[%s4 + $0x8] sm:$0xf]
          %v521 = vld [vmem:[%s4 + $0xc] sm:$0xf]
          %v526 = vunpack.c.l.b16 %v518
          %v527 = vunpack.c.l.b16 %v519
          %v528 = vunpack.c.l.b16 %v520
          %v529 = vunpack.c.l.b16 %v521
          %v530 = vpack.c.b16 %v527, %v526
          %v531 = vpack.c.b16 %v529, %v528
          %v535 = vsel %vm477, %v515, 0
          %537 = vmatpush.bf16.msra.mxu0 0
          %538 = vmatpush.bf16.msra.mxu0 0
          %539 = vmatpush.bf16.msra.mxu0 0
          %540 = vmatpush.bf16.msra.mxu0 0
          %541 = vmatpush.bf16.msra.mxu0 0
          %542 = vmatpush.bf16.msra.mxu0 0
          %543 = vmatpush.bf16.msra.mxu0 %v531
          %544 = vmatpush.bf16.msra.mxu0 %v530
          %545 = vmatmul.bf16.gmra.mxu0 %v535
          %v546 = vpop.f32.mrf.mxu0
          %v547 = vadd.f32 0.0, %v546
          %v548 = vpop.f32.mrf.mxu0
          %549 = vdwg.mxu0
          %v550 = vpack.c.bf16 %v547, %v547
          %vm551 = vcmask 60416
          %552 = vst.msk [vmem:[#allocation3] sm:$0xf] %vm551, %v550
          %554 = vrot.lane.b32.xlu0 %v550, 96
          %v555 = vpop.permute.xlu0 %554
          %557 = vst.msk [vmem:[#allocation4] sm:$0xf] %vm551, %v555
          %558 = vrot.lane.b32.xlu0 %v550, 120
          %v559 = vpop.permute.xlu0 %558
          %s561 = scalar_lea.vmem [#allocation3], 4
          %562 = vst.msk [vmem:[%s561] sm:$0xf] %vm551, %v559
          %563 = vrot.lane.b32.xlu0 %v550, 88
          %v564 = vpop.permute.xlu0 %563
          %s566 = scalar_lea.vmem [#allocation4], 4
          %567 = vst.msk [vmem:[%s566] sm:$0xf] %vm551, %v564
          %568 = vrot.lane.b32.xlu0 %v550, 112
          %v569 = vpop.permute.xlu0 %568
          %s571 = scalar_lea.vmem [#allocation3], 8
          %572 = vst.msk [vmem:[%s571] sm:$0xf] %vm551, %v569
          %573 = vrot.lane.b32.xlu0 %v550, 80
          %v574 = vpop.permute.xlu0 %573
          %s576 = scalar_lea.vmem [#allocation4], 8
          %577 = vst.msk [vmem:[%s576] sm:$0xf] %vm551, %v574
          %578 = vrot.lane.b32.xlu0 %v550, 104
          %v579 = vpop.permute.xlu0 %578
          %s581 = scalar_lea.vmem [#allocation3], 12
          %582 = vst.msk [vmem:[%s581] sm:$0xf] %vm551, %v579
          %583 = vrot.lane.b32.xlu0 %v550, 72
          %v584 = vpop.permute.xlu0 %583
          %s586 = scalar_lea.vmem [#allocation4], 12
          %587 = vst.msk [vmem:[%s586] sm:$0xf] %vm551, %v584
          %s588 = scalar_lea.vmem %s467, 4
          %v589 = vld [vmem:[%s588] sm:$0xf]
          %v590 = vunpack.c.l.bf16 %v589
          %v591 = vsel %vm477, %v590, 0.0
          %592 = vadd.xlane.f32.xlu0 %v591
          %v593 = vpop.xlane.xlu0 %592
          %v594 = vmul.f32 %v593, %v487
          %v595 = vsub.f32 %v590, %v594
          %v596 = vmul.f32 %v595, %v595
          %v597 = vsel %vm477, %v596, 0.0
          %598 = vadd.xlane.f32.xlu0 %v597
          %v599 = vpop.xlane.xlu0 %598
          %v600 = vmul.f32 %v599, %v487
          %v601 = vadd.f32 %v600, 1e-05
          %v602 = vrsqrt.pop %v601
          %v603 = vmul.f32 %v602, %v601
          %v604 = vmul.f32 %v603, %v602
          %v605 = vmul.f32 0.5, %v604
          %v606 = vsub.f32 1.5, %v605
          %v607 = vmul.f32 %v602, %v606
          %vm608 = vweird.f32 %v601
          %vm609 = vweird.f32 %v602
          %vm610 = vmor %vm608, %vm609
          %v611 = vsel %vm610, %v602, %v607
          %v612 = vmul.f32 %v595, %v611
          %v613 = vmul.f32 %v612, %v508
          %v614 = vadd.f32 %v613, %v512
          %v615 = vpack.c.bf16 %v614, %v614
          %s616 = scalar_lea.vmem [#allocation2], 4
          %617 = vst.msk [vmem:[%s616] sm:$0xf] %vm516, %v615
          %v618 = vld [vmem:[%s4] sm:$0xf]
          %v619 = vld [vmem:[%s4 + $0x4] sm:$0xf]
          %v620 = vld [vmem:[%s4 + $0x8] sm:$0xf]
          %v621 = vld [vmem:[%s4 + $0xc] sm:$0xf]
          %v626 = vunpack.c.l.b16 %v618
          %v627 = vunpack.c.l.b16 %v619
          %v628 = vunpack.c.l.b16 %v620
          %v629 = vunpack.c.l.b16 %v621
          %v630 = vpack.c.b16 %v627, %v626
          %v631 = vpack.c.b16 %v629, %v628
          %v635 = vsel %vm477, %v615, 0
          %637 = vmatpush.bf16.msra.mxu0 0
          %638 = vmatpush.bf16.msra.mxu0 0
          %639 = vmatpush.bf16.msra.mxu0 0
          %640 = vmatpush.bf16.msra.mxu0 0
          %641 = vmatpush.bf16.msra.mxu0 0
          %642 = vmatpush.bf16.msra.mxu0 0
          %643 = vmatpush.bf16.msra.mxu0 %v631
          %644 = vmatpush.bf16.msra.mxu0 %v630
          %645 = vmatmul.bf16.gmra.mxu0 %v635
          %v646 = vpop.f32.mrf.mxu0
          %v647 = vadd.f32 0.0, %v646
          %v648 = vpop.f32.mrf.mxu0
          %649 = vdwg.mxu0
          %v650 = vpack.c.bf16 %v647, %v647
          %s651 = scalar_lea.vmem [#allocation3], 16
          %652 = vst.msk [vmem:[%s651] sm:$0xf] %vm551, %v650
          %654 = vrot.lane.b32.xlu0 %v650, 96
          %v655 = vpop.permute.xlu0 %654
          %s657 = scalar_lea.vmem [#allocation4], 16
          %658 = vst.msk [vmem:[%s657] sm:$0xf] %vm551, %v655
          %659 = vrot.lane.b32.xlu0 %v650, 120
          %v660 = vpop.permute.xlu0 %659
          %s662 = scalar_lea.vmem [#allocation3], 20
          %663 = vst.msk [vmem:[%s662] sm:$0xf] %vm551, %v660
          %664 = vrot.lane.b32.xlu0 %v650, 88
          %v665 = vpop.permute.xlu0 %664
          %s667 = scalar_lea.vmem [#allocation4], 20
          %668 = vst.msk [vmem:[%s667] sm:$0xf] %vm551, %v665
          %669 = vrot.lane.b32.xlu0 %v650, 112
          %v670 = vpop.permute.xlu0 %669
          %s672 = scalar_lea.vmem [#allocation3], 24
          %673 = vst.msk [vmem:[%s672] sm:$0xf] %vm551, %v670
          %674 = vrot.lane.b32.xlu0 %v650, 80
          %v675 = vpop.permute.xlu0 %674
          %s677 = scalar_lea.vmem [#allocation4], 24
          %678 = vst.msk [vmem:[%s677] sm:$0xf] %vm551, %v675
          %679 = vrot.lane.b32.xlu0 %v650, 104
          %v680 = vpop.permute.xlu0 %679
          %s682 = scalar_lea.vmem [#allocation3], 28
          %683 = vst.msk [vmem:[%s682] sm:$0xf] %vm551, %v680
          %684 = vrot.lane.b32.xlu0 %v650, 72
          %v685 = vpop.permute.xlu0 %684
          %s687 = scalar_lea.vmem [#allocation4], 28
          %688 = vst.msk [vmem:[%s687] sm:$0xf] %vm551, %v685
        $region80: #{tpu_custom_call.1} parent=71 // pred_fallthru
          _
        %s689 = smul.u32 %s33, 8
        %s690 = sshra.s32 %s689, 3
        %s691 = sand.u32 %s689, 7
        %s692 = smul.addr %s690, 4
        %s693 = scalar_lea.vmem %s467, %s692
        %v694 = vld [vmem:[%s693] sm:$0xf]
        %v695 = vunpack.c.l.bf16 %v694
        %s696 = smul.addr %s690, 4
        %s697 = scalar_lea.vmem [#allocation2], %s696
        %v698 = vld [vmem:[%s697] sm:$0xf]
        %v699 = vld [vmem:[%s3] sm:$0xf]
        %v700 = vld [vmem:[%s3 + $0x4] sm:$0xf]
        %v701 = vld [vmem:[%s3 + $0x8] sm:$0xf]
        %v702 = vld [vmem:[%s3 + $0xc] sm:$0xf]
        %v707 = vunpack.c.l.b16 %v699
        %v708 = vunpack.c.l.b16 %v700
        %v709 = vunpack.c.l.b16 %v701
        %v710 = vunpack.c.l.b16 %v702
        %v711 = vpack.c.b16 %v708, %v707
        %v712 = vpack.c.b16 %v710, %v709
        %vm715 = vcmask 261120
        %v717 = vsel %vm715, %v698, 0
        %719 = vmatpush.bf16.msra.mxu0 0
        %720 = vmatpush.bf16.msra.mxu0 0
        %721 = vmatpush.bf16.msra.mxu0 0
        %722 = vmatpush.bf16.msra.mxu0 0
        %723 = vmatpush.bf16.msra.mxu0 0
        %724 = vmatpush.bf16.msra.mxu0 0
        %725 = vmatpush.bf16.msra.mxu0 %v712
        %726 = vmatpush.bf16.msra.mxu0 %v711
        %727 = vmatmul.bf16.gmra.mxu0 %v717
        %v728 = vpop.f32.mrf.mxu0
        %v729 = vadd.f32 0.0, %v728
        %v730 = vpop.f32.mrf.mxu0
        %731 = vdwg.mxu0
        %v732 = vmul.f32 %v729, 0.35355338
        %v733 = vpack.c.bf16 %v732, %v732
        %735 = vrot.lane.b32.xlu0 %v733, 120
        %v736 = vpop.permute.xlu0 %735
        %737 = vrot.lane.b32.xlu0 %v733, 112
        %v738 = vpop.permute.xlu0 %737
        %739 = vrot.lane.b32.xlu0 %v733, 104
        %v740 = vpop.permute.xlu0 %739
        %v741 = vld [vmem:[#allocation3] sm:$0xf]
        %v742 = vld [vmem:[#allocation3 + $0x4] sm:$0xf]
        %v743 = vld [vmem:[#allocation3 + $0x8] sm:$0xf]
        %v744 = vld [vmem:[#allocation3 + $0xc] sm:$0xf]
        %v745 = vld [vmem:[#allocation4] sm:$0xf]
        %v746 = vld [vmem:[#allocation4 + $0x4] sm:$0xf]
        %v747 = vld [vmem:[#allocation4 + $0x8] sm:$0xf]
        %v748 = vld [vmem:[#allocation4 + $0xc] sm:$0xf]
        %vm749 = vcmask 64512
        %v751 = vsel %vm749, %v733, 0
        %v754 = vsel %vm749, %v741, 0
        %756 = vmatpush.bf16.xpose.msra.mxu0 0
        %757 = vmatpush.bf16.xpose.msra.mxu0 0
        %758 = vmatpush.bf16.xpose.msra.mxu0 0
        %759 = vmatpush.bf16.xpose.msra.mxu0 0
        %760 = vmatpush.bf16.xpose.msra.mxu0 0
        %761 = vmatpush.bf16.xpose.msra.mxu0 0
        %762 = vmatpush.bf16.xpose.msra.mxu0 0
        %763 = vmatpush.bf16.xpose.msra.mxu0 %v754
        %764 = vmatmul.bf16.gmra.mxu0 %v751
        %v765 = vpop.f32.mrf.mxu0
        %v766 = vadd.f32 0.0, %v765
        %v767 = vpop.f32.mrf.mxu0
        %768 = vdwg.mxu0
        %v770 = vsel %vm749, %v736, 0
        %v773 = vsel %vm749, %v742, 0
        %775 = vmatpush.bf16.xpose.msra.mxu0 0
        %776 = vmatpush.bf16.xpose.msra.mxu0 0
        %777 = vmatpush.bf16.xpose.msra.mxu0 0
        %778 = vmatpush.bf16.xpose.msra.mxu0 0
        %779 = vmatpush.bf16.xpose.msra.mxu0 0
        %780 = vmatpush.bf16.xpose.msra.mxu0 0
        %781 = vmatpush.bf16.xpose.msra.mxu0 0
        %782 = vmatpush.bf16.xpose.msra.mxu0 %v773
        %783 = vmatmul.bf16.gmra.mxu0 %v770
        %v784 = vpop.f32.mrf.mxu0
        %v785 = vadd.f32 0.0, %v784
        %v786 = vpop.f32.mrf.mxu0
        %787 = vdwg.mxu0
        %v789 = vsel %vm749, %v738, 0
        %v792 = vsel %vm749, %v743, 0
        %794 = vmatpush.bf16.xpose.msra.mxu0 0
        %795 = vmatpush.bf16.xpose.msra.mxu0 0
        %796 = vmatpush.bf16.xpose.msra.mxu0 0
        %797 = vmatpush.bf16.xpose.msra.mxu0 0
        %798 = vmatpush.bf16.xpose.msra.mxu0 0
        %799 = vmatpush.bf16.xpose.msra.mxu0 0
        %800 = vmatpush.bf16.xpose.msra.mxu0 0
        %801 = vmatpush.bf16.xpose.msra.mxu0 %v792
        %802 = vmatmul.bf16.gmra.mxu0 %v789
        %v803 = vpop.f32.mrf.mxu0
        %v804 = vadd.f32 0.0, %v803
        %v805 = vpop.f32.mrf.mxu0
        %806 = vdwg.mxu0
        %v808 = vsel %vm749, %v740, 0
        %v811 = vsel %vm749, %v744, 0
        %813 = vmatpush.bf16.xpose.msra.mxu0 0
        %814 = vmatpush.bf16.xpose.msra.mxu0 0
        %815 = vmatpush.bf16.xpose.msra.mxu0 0
        %816 = vmatpush.bf16.xpose.msra.mxu0 0
        %817 = vmatpush.bf16.xpose.msra.mxu0 0
        %818 = vmatpush.bf16.xpose.msra.mxu0 0
        %819 = vmatpush.bf16.xpose.msra.mxu0 0
        %820 = vmatpush.bf16.xpose.msra.mxu0 %v811
        %821 = vmatmul.bf16.gmra.mxu0 %v808
        %v822 = vpop.f32.mrf.mxu0
        %v823 = vadd.f32 0.0, %v822
        %v824 = vpop.f32.mrf.mxu0
        %825 = vdwg.mxu0
        %v826 = vsel %vm749, %v766, -inf
        %827 = vmax.xlane.f32.xlu0 %v826
        %v828 = vpop.xlane.xlu0 %827
        %v829 = vsel %vm749, %v785, -inf
        %830 = vmax.xlane.f32.xlu0 %v829
        %v831 = vpop.xlane.xlu0 %830
        %v832 = vsel %vm749, %v804, -inf
        %833 = vmax.xlane.f32.xlu0 %v832
        %v834 = vpop.xlane.xlu0 %833
        %v835 = vsel %vm749, %v823, -inf
        %836 = vmax.xlane.f32.xlu0 %v835
        %v837 = vpop.xlane.xlu0 %836
        %v838 = vsub.f32 -inf, %v828
        %v839 = vsub.f32 -inf, %v831
        %v840 = vsub.f32 -inf, %v834
        %v841 = vsub.f32 -inf, %v837
        %v842 = vmul.f32 %v838, 1.442695
        %v843 = vpow.pop %v842
        %v844 = vmul.f32 %v839, 1.442695
        %v845 = vpow.pop %v844
        %v846 = vmul.f32 %v840, 1.442695
        %v847 = vpow.pop %v846
        %v848 = vmul.f32 %v841, 1.442695
        %v849 = vpow.pop %v848
        %v850 = vsub.f32 %v766, %v828
        %v851 = vsub.f32 %v785, %v831
        %v852 = vsub.f32 %v804, %v834
        %v853 = vsub.f32 %v823, %v837
        %v854 = vmul.f32 %v850, 1.442695
        %v855 = vpow.pop %v854
        %v856 = vmul.f32 %v851, 1.442695
        %v857 = vpow.pop %v856
        %v858 = vmul.f32 %v852, 1.442695
        %v859 = vpow.pop %v858
        %v860 = vmul.f32 %v853, 1.442695
        %v861 = vpow.pop %v860
        %v862 = vsel %vm749, %v855, 0.0
        %863 = vadd.xlane.f32.xlu0 %v862
        %v864 = vpop.xlane.xlu0 %863
        %v865 = vsel %vm749, %v857, 0.0
        %866 = vadd.xlane.f32.xlu0 %v865
        %v867 = vpop.xlane.xlu0 %866
        %v868 = vsel %vm749, %v859, 0.0
        %869 = vadd.xlane.f32.xlu0 %v868
        %v870 = vpop.xlane.xlu0 %869
        %v871 = vsel %vm749, %v861, 0.0
        %872 = vadd.xlane.f32.xlu0 %v871
        %v873 = vpop.xlane.xlu0 %872
        %v874 = vpack.c.bf16 %v855, %v855
        %v875 = vpack.c.bf16 %v857, %v857
        %v876 = vpack.c.bf16 %v859, %v859
        %v877 = vpack.c.bf16 %v861, %v861
        %v878 = vmul.f32 %v843, 0.0
        %v879 = vmul.f32 %v845, 0.0
        %v880 = vmul.f32 %v847, 0.0
        %v881 = vmul.f32 %v849, 0.0
        %v882 = vadd.f32 %v878, %v864
        %v883 = vadd.f32 %v879, %v867
        %v884 = vadd.f32 %v880, %v870
        %v885 = vadd.f32 %v881, %v873
        %v887 = vsel %vm749, %v874, 0
        %vm889 = vcmask 1043456
        %v891 = vsel %vm889, %v745, 0
        %893 = vmatpush.bf16.msra.mxu0 0
        %894 = vmatpush.bf16.msra.mxu0 0
        %895 = vmatpush.bf16.msra.mxu0 0
        %896 = vmatpush.bf16.msra.mxu0 0
        %897 = vmatpush.bf16.msra.mxu0 0
        %898 = vmatpush.bf16.msra.mxu0 0
        %899 = vmatpush.bf16.msra.mxu0 0
        %900 = vmatpush.bf16.msra.mxu0 %v891
        %901 = vmatmul.bf16.gmra.mxu0 %v887
        %v902 = vpop.f32.mrf.mxu0
        %v903 = vadd.f32 0.0, %v902
        %v904 = vpop.f32.mrf.mxu0
        %905 = vdwg.mxu0
        %v907 = vsel %vm749, %v875, 0
        %v910 = vsel %vm889, %v746, 0
        %912 = vmatpush.bf16.msra.mxu0 0
        %913 = vmatpush.bf16.msra.mxu0 0
        %914 = vmatpush.bf16.msra.mxu0 0
        %915 = vmatpush.bf16.msra.mxu0 0
        %916 = vmatpush.bf16.msra.mxu0 0
        %917 = vmatpush.bf16.msra.mxu0 0
        %918 = vmatpush.bf16.msra.mxu0 0
        %919 = vmatpush.bf16.msra.mxu0 %v910
        %920 = vmatmul.bf16.gmra.mxu0 %v907
        %v921 = vpop.f32.mrf.mxu0
        %v922 = vadd.f32 0.0, %v921
        %v923 = vpop.f32.mrf.mxu0
        %924 = vdwg.mxu0
        %v926 = vsel %vm749, %v876, 0
        %v929 = vsel %vm889, %v747, 0
        %931 = vmatpush.bf16.msra.mxu0 0
        %932 = vmatpush.bf16.msra.mxu0 0
        %933 = vmatpush.bf16.msra.mxu0 0
        %934 = vmatpush.bf16.msra.mxu0 0
        %935 = vmatpush.bf16.msra.mxu0 0
        %936 = vmatpush.bf16.msra.mxu0 0
        %937 = vmatpush.bf16.msra.mxu0 0
        %938 = vmatpush.bf16.msra.mxu0 %v929
        %939 = vmatmul.bf16.gmra.mxu0 %v926
        %v940 = vpop.f32.mrf.mxu0
        %v941 = vadd.f32 0.0, %v940
        %v942 = vpop.f32.mrf.mxu0
        %943 = vdwg.mxu0
        %v945 = vsel %vm749, %v877, 0
        %v948 = vsel %vm889, %v748, 0
        %950 = vmatpush.bf16.msra.mxu0 0
        %951 = vmatpush.bf16.msra.mxu0 0
        %952 = vmatpush.bf16.msra.mxu0 0
        %953 = vmatpush.bf16.msra.mxu0 0
        %954 = vmatpush.bf16.msra.mxu0 0
        %955 = vmatpush.bf16.msra.mxu0 0
        %956 = vmatpush.bf16.msra.mxu0 0
        %957 = vmatpush.bf16.msra.mxu0 %v948
        %958 = vmatmul.bf16.gmra.mxu0 %v945
        %v959 = vpop.f32.mrf.mxu0
        %v960 = vadd.f32 0.0, %v959
        %v961 = vpop.f32.mrf.mxu0
        %962 = vdwg.mxu0
        %v963 = vadd.f32 %v878, %v903
        %v964 = vadd.f32 %v879, %v922
        %v965 = vadd.f32 %v880, %v941
        %v966 = vadd.f32 %v881, %v960
        %s967 = scalar_lea.vmem [#allocation3], 16
        %v968 = vld [vmem:[%s967] sm:$0xf]
        %v969 = vld [vmem:[%s967 + $0x4] sm:$0xf]
        %v970 = vld [vmem:[%s967 + $0x8] sm:$0xf]
        %v971 = vld [vmem:[%s967 + $0xc] sm:$0xf]
        %s972 = scalar_lea.vmem [#allocation4], 16
        %v973 = vld [vmem:[%s972] sm:$0xf]
        %v974 = vld [vmem:[%s972 + $0x4] sm:$0xf]
        %v975 = vld [vmem:[%s972 + $0x8] sm:$0xf]
        %v976 = vld [vmem:[%s972 + $0xc] sm:$0xf]
        %v978 = vsel %vm749, %v968, 0
        %980 = vmatpush.bf16.xpose.msra.mxu0 0
        %981 = vmatpush.bf16.xpose.msra.mxu0 0
        %982 = vmatpush.bf16.xpose.msra.mxu0 0
        %983 = vmatpush.bf16.xpose.msra.mxu0 0
        %984 = vmatpush.bf16.xpose.msra.mxu0 0
        %985 = vmatpush.bf16.xpose.msra.mxu0 0
        %986 = vmatpush.bf16.xpose.msra.mxu0 0
        %987 = vmatpush.bf16.xpose.msra.mxu0 %v978
        %988 = vmatmul.bf16.gmra.mxu0 %v751
        %v989 = vpop.f32.mrf.mxu0
        %v990 = vadd.f32 0.0, %v989
        %v991 = vpop.f32.mrf.mxu0
        %992 = vdwg.mxu0
        %v994 = vsel %vm749, %v969, 0
        %996 = vmatpush.bf16.xpose.msra.mxu0 0
        %997 = vmatpush.bf16.xpose.msra.mxu0 0
        %998 = vmatpush.bf16.xpose.msra.mxu0 0
        %999 = vmatpush.bf16.xpose.msra.mxu0 0
        %1000 = vmatpush.bf16.xpose.msra.mxu0 0
        %1001 = vmatpush.bf16.xpose.msra.mxu0 0
        %1002 = vmatpush.bf16.xpose.msra.mxu0 0
        %1003 = vmatpush.bf16.xpose.msra.mxu0 %v994
        %1004 = vmatmul.bf16.gmra.mxu0 %v770
        %v1005 = vpop.f32.mrf.mxu0
        %v1006 = vadd.f32 0.0, %v1005
        %v1007 = vpop.f32.mrf.mxu0
        %1008 = vdwg.mxu0
        %v1010 = vsel %vm749, %v970, 0
        %1012 = vmatpush.bf16.xpose.msra.mxu0 0
        %1013 = vmatpush.bf16.xpose.msra.mxu0 0
        %1014 = vmatpush.bf16.xpose.msra.mxu0 0
        %1015 = vmatpush.bf16.xpose.msra.mxu0 0
        %1016 = vmatpush.bf16.xpose.msra.mxu0 0
        %1017 = vmatpush.bf16.xpose.msra.mxu0 0
        %1018 = vmatpush.bf16.xpose.msra.mxu0 0
        %1019 = vmatpush.bf16.xpose.msra.mxu0 %v1010
        %1020 = vmatmul.bf16.gmra.mxu0 %v789
        %v1021 = vpop.f32.mrf.mxu0
        %v1022 = vadd.f32 0.0, %v1021
        %v1023 = vpop.f32.mrf.mxu0
        %1024 = vdwg.mxu0
        %v1026 = vsel %vm749, %v971, 0
        %1028 = vmatpush.bf16.xpose.msra.mxu0 0
        %1029 = vmatpush.bf16.xpose.msra.mxu0 0
        %1030 = vmatpush.bf16.xpose.msra.mxu0 0
        %1031 = vmatpush.bf16.xpose.msra.mxu0 0
        %1032 = vmatpush.bf16.xpose.msra.mxu0 0
        %1033 = vmatpush.bf16.xpose.msra.mxu0 0
        %1034 = vmatpush.bf16.xpose.msra.mxu0 0
        %1035 = vmatpush.bf16.xpose.msra.mxu0 %v1026
        %1036 = vmatmul.bf16.gmra.mxu0 %v808
        %v1037 = vpop.f32.mrf.mxu0
        %v1038 = vadd.f32 0.0, %v1037
        %v1039 = vpop.f32.mrf.mxu0
        %1040 = vdwg.mxu0
        %v1041 = vsel %vm749, %v990, -inf
        %1042 = vmax.xlane.f32.xlu0 %v1041
        %v1043 = vpop.xlane.xlu0 %1042
        %v1044 = vsel %vm749, %v1006, -inf
        %1045 = vmax.xlane.f32.xlu0 %v1044
        %v1046 = vpop.xlane.xlu0 %1045
        %v1047 = vsel %vm749, %v1022, -inf
        %1048 = vmax.xlane.f32.xlu0 %v1047
        %v1049 = vpop.xlane.xlu0 %1048
        %v1050 = vsel %vm749, %v1038, -inf
        %1051 = vmax.xlane.f32.xlu0 %v1050
        %v1052 = vpop.xlane.xlu0 %1051
        %v1053 = vmax.f32 %v828, %v1043
        %v1054 = vmax.f32 %v831, %v1046
        %v1055 = vmax.f32 %v834, %v1049
        %v1056 = vmax.f32 %v837, %v1052
        %v1057 = vsub.f32 %v828, %v1053
        %v1058 = vsub.f32 %v831, %v1054
        %v1059 = vsub.f32 %v834, %v1055
        %v1060 = vsub.f32 %v837, %v1056
        %v1061 = vmul.f32 %v1057, 1.442695
        %v1062 = vpow.pop %v1061
        %v1063 = vmul.f32 %v1058, 1.442695
        %v1064 = vpow.pop %v1063
        %v1065 = vmul.f32 %v1059, 1.442695
        %v1066 = vpow.pop %v1065
        %v1067 = vmul.f32 %v1060, 1.442695
        %v1068 = vpow.pop %v1067
        %v1069 = vsub.f32 %v990, %v1053
        %v1070 = vsub.f32 %v1006, %v1054
        %v1071 = vsub.f32 %v1022, %v1055
        %v1072 = vsub.f32 %v1038, %v1056
        %v1073 = vmul.f32 %v1069, 1.442695
        %v1074 = vpow.pop %v1073
        %v1075 = vmul.f32 %v1070, 1.442695
        %v1076 = vpow.pop %v1075
        %v1077 = vmul.f32 %v1071, 1.442695
        %v1078 = vpow.pop %v1077
        %v1079 = vmul.f32 %v1072, 1.442695
        %v1080 = vpow.pop %v1079
        %v1081 = vsel %vm749, %v1074, 0.0
        %1082 = vadd.xlane.f32.xlu0 %v1081
        %v1083 = vpop.xlane.xlu0 %1082
        %v1084 = vsel %vm749, %v1076, 0.0
        %1085 = vadd.xlane.f32.xlu0 %v1084
        %v1086 = vpop.xlane.xlu0 %1085
        %v1087 = vsel %vm749, %v1078, 0.0
        %1088 = vadd.xlane.f32.xlu0 %v1087
        %v1089 = vpop.xlane.xlu0 %1088
        %v1090 = vsel %vm749, %v1080, 0.0
        %1091 = vadd.xlane.f32.xlu0 %v1090
        %v1092 = vpop.xlane.xlu0 %1091
        %v1093 = vpack.c.bf16 %v1074, %v1074
        %v1094 = vpack.c.bf16 %v1076, %v1076
        %v1095 = vpack.c.bf16 %v1078, %v1078
        %v1096 = vpack.c.bf16 %v1080, %v1080
        %v1097 = vmul.f32 %v1062, %v882
        %v1098 = vmul.f32 %v1064, %v883
        %v1099 = vmul.f32 %v1066, %v884
        %v1100 = vmul.f32 %v1068, %v885
        %v1101 = vadd.f32 %v1097, %v1083
        %v1102 = vadd.f32 %v1098, %v1086
        %v1103 = vadd.f32 %v1099, %v1089
        %v1104 = vadd.f32 %v1100, %v1092
        %v1105 = vmul.f32 %v1062, %v963
        %v1106 = vmul.f32 %v1064, %v964
        %v1107 = vmul.f32 %v1066, %v965
        %v1108 = vmul.f32 %v1068, %v966
        %v1110 = vsel %vm749, %v1093, 0
        %v1113 = vsel %vm889, %v973, 0
        %1115 = vmatpush.bf16.msra.mxu0 0
        %1116 = vmatpush.bf16.msra.mxu0 0
        %1117 = vmatpush.bf16.msra.mxu0 0
        %1118 = vmatpush.bf16.msra.mxu0 0
        %1119 = vmatpush.bf16.msra.mxu0 0
        %1120 = vmatpush.bf16.msra.mxu0 0
        %1121 = vmatpush.bf16.msra.mxu0 0
        %1122 = vmatpush.bf16.msra.mxu0 %v1113
        %1123 = vmatmul.bf16.gmra.mxu0 %v1110
        %v1124 = vpop.f32.mrf.mxu0
        %v1125 = vadd.f32 0.0, %v1124
        %v1126 = vpop.f32.mrf.mxu0
        %1127 = vdwg.mxu0
        %v1129 = vsel %vm749, %v1094, 0
        %v1132 = vsel %vm889, %v974, 0
        %1134 = vmatpush.bf16.msra.mxu0 0
        %1135 = vmatpush.bf16.msra.mxu0 0
        %1136 = vmatpush.bf16.msra.mxu0 0
        %1137 = vmatpush.bf16.msra.mxu0 0
        %1138 = vmatpush.bf16.msra.mxu0 0
        %1139 = vmatpush.bf16.msra.mxu0 0
        %1140 = vmatpush.bf16.msra.mxu0 0
        %1141 = vmatpush.bf16.msra.mxu0 %v1132
        %1142 = vmatmul.bf16.gmra.mxu0 %v1129
        %v1143 = vpop.f32.mrf.mxu0
        %v1144 = vadd.f32 0.0, %v1143
        %v1145 = vpop.f32.mrf.mxu0
        %1146 = vdwg.mxu0
        %v1148 = vsel %vm749, %v1095, 0
        %v1151 = vsel %vm889, %v975, 0
        %1153 = vmatpush.bf16.msra.mxu0 0
        %1154 = vmatpush.bf16.msra.mxu0 0
        %1155 = vmatpush.bf16.msra.mxu0 0
        %1156 = vmatpush.bf16.msra.mxu0 0
        %1157 = vmatpush.bf16.msra.mxu0 0
        %1158 = vmatpush.bf16.msra.mxu0 0
        %1159 = vmatpush.bf16.msra.mxu0 0
        %1160 = vmatpush.bf16.msra.mxu0 %v1151
        %1161 = vmatmul.bf16.gmra.mxu0 %v1148
        %v1162 = vpop.f32.mrf.mxu0
        %v1163 = vadd.f32 0.0, %v1162
        %v1164 = vpop.f32.mrf.mxu0
        %1165 = vdwg.mxu0
        %v1167 = vsel %vm749, %v1096, 0
        %v1170 = vsel %vm889, %v976, 0
        %1172 = vmatpush.bf16.msra.mxu0 0
        %1173 = vmatpush.bf16.msra.mxu0 0
        %1174 = vmatpush.bf16.msra.mxu0 0
        %1175 = vmatpush.bf16.msra.mxu0 0
        %1176 = vmatpush.bf16.msra.mxu0 0
        %1177 = vmatpush.bf16.msra.mxu0 0
        %1178 = vmatpush.bf16.msra.mxu0 0
        %1179 = vmatpush.bf16.msra.mxu0 %v1170
        %1180 = vmatmul.bf16.gmra.mxu0 %v1167
        %v1181 = vpop.f32.mrf.mxu0
        %v1182 = vadd.f32 0.0, %v1181
        %v1183 = vpop.f32.mrf.mxu0
        %1184 = vdwg.mxu0
        %v1185 = vadd.f32 %v1105, %v1125
        %v1186 = vadd.f32 %v1106, %v1144
        %v1187 = vadd.f32 %v1107, %v1163
        %v1188 = vadd.f32 %v1108, %v1182
        %v1189 = vrcp.pop %v1101
        %v1190 = vrcp.pop %v1102
        %v1191 = vrcp.pop %v1103
        %v1192 = vrcp.pop %v1104
        %v1193 = vmul.f32 %v1185, %v1189
        %v1194 = vmul.f32 %v1186, %v1190
        %v1195 = vmul.f32 %v1187, %v1191
        %v1196 = vmul.f32 %v1188, %v1192
        %v1197 = vpack.c.bf16 %v1193, %v1193
        %v1198 = vpack.c.bf16 %v1194, %v1194
        %v1199 = vpack.c.bf16 %v1195, %v1195
        %v1200 = vpack.c.bf16 %v1196, %v1196
        %v1201 = vld [vmem:[%s5] sm:$0xf]
        %v1202 = vld [vmem:[%s5 + $0x4] sm:$0xf]
        %v1203 = vld [vmem:[%s5 + $0x8] sm:$0xf]
        %v1204 = vld [vmem:[%s5 + $0xc] sm:$0xf]
        %v1206 = vsel %vm749, %v1197, 0
        %v1209 = vsel %vm889, %v1201, 0
        %1211 = vmatpush.bf16.msra.mxu0 0
        %1212 = vmatpush.bf16.msra.mxu0 0
        %1213 = vmatpush.bf16.msra.mxu0 0
        %1214 = vmatpush.bf16.msra.mxu0 0
        %1215 = vmatpush.bf16.msra.mxu0 0
        %1216 = vmatpush.bf16.msra.mxu0 0
        %1217 = vmatpush.bf16.msra.mxu0 0
        %1218 = vmatpush.bf16.msra.mxu0 %v1209
        %1219 = vmatmul.bf16.gmra.mxu0 %v1206
        %v1220 = vpop.f32.mrf.mxu0
        %v1221 = vadd.f32 0.0, %v1220
        %v1222 = vpop.f32.mrf.mxu0
        %1223 = vdwg.mxu0
        %v1225 = vsel %vm749, %v1198, 0
        %v1228 = vsel %vm889, %v1202, 0
        %1230 = vmatpush.bf16.msra.mxu0 0
        %1231 = vmatpush.bf16.msra.mxu0 0
        %1232 = vmatpush.bf16.msra.mxu0 0
        %1233 = vmatpush.bf16.msra.mxu0 0
        %1234 = vmatpush.bf16.msra.mxu0 0
        %1235 = vmatpush.bf16.msra.mxu0 0
        %1236 = vmatpush.bf16.msra.mxu0 0
        %1237 = vmatpush.bf16.msra.mxu0 %v1228
        %1238 = vmatmul.bf16.gmra.mxu0 %v1225
        %v1239 = vpop.f32.mrf.mxu0
        %v1240 = vadd.f32 0.0, %v1239
        %v1241 = vpop.f32.mrf.mxu0
        %1242 = vdwg.mxu0
        %v1244 = vsel %vm749, %v1199, 0
        %v1247 = vsel %vm889, %v1203, 0
        %1249 = vmatpush.bf16.msra.mxu0 0
        %1250 = vmatpush.bf16.msra.mxu0 0
        %1251 = vmatpush.bf16.msra.mxu0 0
        %1252 = vmatpush.bf16.msra.mxu0 0
        %1253 = vmatpush.bf16.msra.mxu0 0
        %1254 = vmatpush.bf16.msra.mxu0 0
        %1255 = vmatpush.bf16.msra.mxu0 0
        %1256 = vmatpush.bf16.msra.mxu0 %v1247
        %1257 = vmatmul.bf16.gmra.mxu0 %v1244
        %v1258 = vpop.f32.mrf.mxu0
        %v1259 = vadd.f32 0.0, %v1258
        %v1260 = vpop.f32.mrf.mxu0
        %1261 = vdwg.mxu0
        %v1263 = vsel %vm749, %v1200, 0
        %v1266 = vsel %vm889, %v1204, 0
        %1268 = vmatpush.bf16.msra.mxu0 0
        %1269 = vmatpush.bf16.msra.mxu0 0
        %1270 = vmatpush.bf16.msra.mxu0 0
        %1271 = vmatpush.bf16.msra.mxu0 0
        %1272 = vmatpush.bf16.msra.mxu0 0
        %1273 = vmatpush.bf16.msra.mxu0 0
        %1274 = vmatpush.bf16.msra.mxu0 0
        %1275 = vmatpush.bf16.msra.mxu0 %v1266
        %1276 = vmatmul.bf16.gmra.mxu0 %v1263
        %v1277 = vpop.f32.mrf.mxu0
        %v1278 = vadd.f32 0.0, %v1277
        %v1279 = vpop.f32.mrf.mxu0
        %1280 = vdwg.mxu0
        %v1281 = vsel %vm715, %v1221, 0.0
        %v1282 = vsel %vm715, %v1240, 0.0
        %v1283 = vadd.f32 %v1281, %v1282
        %v1284 = vsel %vm715, %v1259, 0.0
        %v1285 = vadd.f32 %v1283, %v1284
        %v1286 = vsel %vm715, %v1278, 0.0
        %v1287 = vadd.f32 %v1285, %v1286
        %v1288 = vld [vmem:[%s6] sm:$0x1]
        %v1290 = vperm.slane %v1288, 0
        %v1292 = vadd.f32 %v1287, %v1290
        %v1293 = vadd.f32 %v695, %v1292
        %v1294 = vld [vmem:[%s7] sm:$0x1]
        %v1295 = vld [vmem:[%s8] sm:$0x1]
        %v1296 = vsel %vm715, %v1293, 0.0
        %1297 = vadd.xlane.f32.xlu0 %v1296
        %v1298 = vpop.xlane.xlu0 %1297
        %v1299 = vrcp.pop 32.0
        %v1300 = vmul.f32 32.0, %v1299
        %v1301 = vsub.f32 1.0, %v1300
        %v1302 = vmul.f32 %v1299, %v1301
        %v1303 = vadd.f32 %v1299, %v1302
        %vm1304 = vweird.f32 %v1299
        %v1305 = vsel %vm1304, %v1299, %v1303
        %v1306 = vmul.f32 %v1298, %v1305
        %v1307 = vsub.f32 %v1293, %v1306
        %v1308 = vmul.f32 %v1307, %v1307
        %v1309 = vsel %vm715, %v1308, 0.0
        %1310 = vadd.xlane.f32.xlu0 %v1309
        %v1311 = vpop.xlane.xlu0 %1310
        %v1312 = vmul.f32 %v1311, %v1305
        %v1313 = vadd.f32 %v1312, 1e-05
        %v1314 = vrsqrt.pop %v1313
        %v1315 = vmul.f32 %v1314, %v1313
        %v1316 = vmul.f32 %v1315, %v1314
        %v1317 = vmul.f32 0.5, %v1316
        %v1318 = vsub.f32 1.5, %v1317
        %v1319 = vmul.f32 %v1314, %v1318
        %vm1320 = vweird.f32 %v1313
        %vm1321 = vweird.f32 %v1314
        %vm1322 = vmor %vm1320, %vm1321
        %v1323 = vsel %vm1322, %v1314, %v1319
        %v1324 = vmul.f32 %v1307, %v1323
        %v1326 = vperm.slane %v1294, 0
        %v1328 = vmul.f32 %v1324, %v1326
        %v1330 = vperm.slane %v1295, 0
        %v1332 = vadd.f32 %v1328, %v1330
        %v1333 = vpack.c.bf16 %v1332, %v1332
        %v1334 = vld [vmem:[%s9] sm:$0xf]
        %v1335 = vld [vmem:[%s9 + $0x4] sm:$0xf]
        %v1336 = vld [vmem:[%s9 + $0x8] sm:$0xf]
        %v1337 = vld [vmem:[%s9 + $0xc] sm:$0xf]
        %v1338 = vld [vmem:[%s10] sm:$0x1]
        %v1340 = vperm.slane %v1338, 0
        %v1346 = vunpack.c.l.b16 %v1334
        %v1347 = vunpack.c.l.b16 %v1335
        %v1348 = vunpack.c.l.b16 %v1336
        %v1349 = vunpack.c.l.b16 %v1337
        %v1350 = vpack.c.b16 %v1347, %v1346
        %v1351 = vpack.c.b16 %v1349, %v1348
        %v1355 = vsel %vm715, %v1333, 0
        %1357 = vmatpush.bf16.msra.mxu0 0
        %1358 = vmatpush.bf16.msra.mxu0 0
        %1359 = vmatpush.bf16.msra.mxu0 0
        %1360 = vmatpush.bf16.msra.mxu0 0
        %1361 = vmatpush.bf16.msra.mxu0 0
        %1362 = vmatpush.bf16.msra.mxu0 0
        %1363 = vmatpush.bf16.msra.mxu0 %v1351
        %1364 = vmatpush.bf16.msra.mxu0 %v1350
        %1365 = vmatmul.bf16.gmra.mxu0 %v1355
        %v1366 = vpop.f32.mrf.mxu0
        %v1367 = vadd.f32 %v1340, %v1366
        %v1368 = vpop.f32.mrf.mxu0
        %1369 = vdwg.mxu0
        %v1370 = vmax.f32 %v1367, 0.0
        %v1371 = vpack.c.bf16 %v1370, %v1370
        %v1372 = vld [vmem:[%s11] sm:$0xf]
        %v1373 = vld [vmem:[%s11 + $0x4] sm:$0xf]
        %v1374 = vld [vmem:[%s11 + $0x8] sm:$0xf]
        %v1375 = vld [vmem:[%s11 + $0xc] sm:$0xf]
        %v1376 = vld [vmem:[%s11 + $0x10] sm:$0xf]
        %v1377 = vld [vmem:[%s11 + $0x14] sm:$0xf]
        %v1378 = vld [vmem:[%s11 + $0x18] sm:$0xf]
        %v1379 = vld [vmem:[%s11 + $0x1c] sm:$0xf]
        %v1380 = vld [vmem:[%s11 + $0x20] sm:$0xf]
        %v1381 = vld [vmem:[%s11 + $0x24] sm:$0xf]
        %v1382 = vld [vmem:[%s11 + $0x28] sm:$0xf]
        %v1383 = vld [vmem:[%s11 + $0x2c] sm:$0xf]
        %v1384 = vld [vmem:[%s11 + $0x30] sm:$0xf]
        %v1385 = vld [vmem:[%s11 + $0x34] sm:$0xf]
        %v1386 = vld [vmem:[%s11 + $0x38] sm:$0xf]
        %v1387 = vld [vmem:[%s11 + $0x3c] sm:$0xf]
        %v1388 = vld [vmem:[%s12] sm:$0x1]
        %v1390 = vperm.slane %v1388, 0
        %v1408 = vunpack.c.l.b16 %v1372
        %v1409 = vunpack.c.l.b16 %v1373
        %v1410 = vunpack.c.l.b16 %v1374
        %v1411 = vunpack.c.l.b16 %v1375
        %v1412 = vunpack.c.l.b16 %v1376
        %v1413 = vunpack.c.l.b16 %v1377
        %v1414 = vunpack.c.l.b16 %v1378
        %v1415 = vunpack.c.l.b16 %v1379
        %v1416 = vunpack.c.l.b16 %v1380
        %v1417 = vunpack.c.l.b16 %v1381
        %v1418 = vunpack.c.l.b16 %v1382
        %v1419 = vunpack.c.l.b16 %v1383
        %v1420 = vunpack.c.l.b16 %v1384
        %v1421 = vunpack.c.l.b16 %v1385
        %v1422 = vunpack.c.l.b16 %v1386
        %v1423 = vunpack.c.l.b16 %v1387
        %v1424 = vpack.c.b16 %v1409, %v1408
        %v1425 = vpack.c.b16 %v1411, %v1410
        %v1426 = vpack.c.b16 %v1413, %v1412
        %v1427 = vpack.c.b16 %v1415, %v1414
        %v1428 = vpack.c.b16 %v1417, %v1416
        %v1429 = vpack.c.b16 %v1419, %v1418
        %v1430 = vpack.c.b16 %v1421, %v1420
        %v1431 = vpack.c.b16 %v1423, %v1422
        %1440 = vmatpush.bf16.msra.mxu0 %v1431
        %1441 = vmatpush.bf16.msra.mxu0 %v1430
        %1442 = vmatpush.bf16.msra.mxu0 %v1429
        %1443 = vmatpush.bf16.msra.mxu0 %v1428
        %1444 = vmatpush.bf16.msra.mxu0 %v1427
        %1445 = vmatpush.bf16.msra.mxu0 %v1426
        %1446 = vmatpush.bf16.msra.mxu0 %v1425
        %1447 = vmatpush.bf16.msra.mxu0 %v1424
        %1448 = vmatmul.bf16.gmra.mxu0 %v1371
        %v1449 = vpop.f32.mrf.mxu0
        %v1450 = vadd.f32 %v1390, %v1449
        %v1451 = vpop.f32.mrf.mxu0
        %1452 = vdwg.mxu0
        %v1453 = vadd.f32 %v1293, %v1450
        %1454 = vst.msk [vmem:[%s462] sm:$0xff] %vm715, %v1453
        %s1455 = sand.u32 %s328, 1
        %s1456 = scalar_lea.sflag [#allocation7], %s1455
        %s1457 = sand.u32 %s328, 1
        %s1458 = smul.addr %s1457, 8
        %s1459 = scalar_lea.vmem [#allocation8], %s1458
        // Predicated region
        $region81: #{tpu_custom_call.1} parent=71 // pred_check
          %p1460 = pneg %p338
        $region82: #{tpu_custom_call.1} parent=71 // pred_check_branch
          %1462 = sbr.rel (%p1460) target = $region84
        $region83: #{tpu_custom_call.1} parent=71 // pred_region
          %1464 = vsyncadd %s1456, 0
          %s1465 = smul.addr %s32, 2
          %s1466 = sadd.s32 %s33, %s1465
          %s1467 = smul.addr %s1466, 8
          %s1468 = scalar_lea.hbm %s13, %s1467
          %s1470 = sshll.u32 %s1459, 4
          %s1471 = int_to_ptr.vmem [resolvable:$true] %s1470
          %s1472 = sshll.u32 %s1468, 4
          %s1473 = int_to_ptr.hbm [resolvable:$true] %s1472
          %1475 = dma.vmem_to_hbm [thread:$0]  %s1471, 128, %s1473, %s1456
        $region84: #{tpu_custom_call.1} parent=71 // pred_fallthru
          _
      $region72: #{tpu_custom_call.1} parent=5 // pred_fallthru
        _
      %p1476 = scmp.le.s32.totalorder 2, %s23
      // Predicated region
      $region85: #{tpu_custom_call.1} parent=5 // pred_check
        %p1477 = pneg %p1476
      $region86: #{tpu_custom_call.1} parent=5 // pred_check_branch
        %1479 = sbr.rel (%p1477) target = $region88
      $region87: #{tpu_custom_call.1} parent=5 // pred_region
        %s1480 = ssub.s32 %s23, 2
        // Predicated region
        $region89: #{tpu_custom_call.1} parent=87 // pred_check
          %p1481 = pneg %p344
        $region90: #{tpu_custom_call.1} parent=87 // pred_check_branch
          %1483 = sbr.rel (%p1481) target = $region92
        $region91: #{tpu_custom_call.1} parent=87 // pred_region
          %s1484 = sand.u32 %s329, 1
          %s1485 = scalar_lea.sflag [#allocation7], %s1484
          %s1486 = sand.u32 %s329, 1
          %s1487 = smul.addr %s1486, 8
          %s1488 = scalar_lea.vmem [#allocation8], %s1487
          %1490 = dma.done %s1485, 128
        $region92: #{tpu_custom_call.1} parent=87 // pred_fallthru
          _
      $region88: #{tpu_custom_call.1} parent=5 // pred_fallthru
        _
    $region6: #{tpu_custom_call.1} parent=1 // loop_footer
      %s27 = sadd.s32 1, %s23
    $region7: #{tpu_custom_call.1} parent=1 // loop_footer_branch
      %22 = sbr.rel target = $region3
    $region8: #{tpu_custom_call.1} parent=1 // loop_exit
      _
    %1491 = vsyncpa [#allocation6], 1
    %s1492 = scalar_lea.sflag [#allocation6], 1
    %1493 = vsyncpa %s1492, 1
    %1494 = vsyncpa [#allocation7], 1
    %s1495 = scalar_lea.sflag [#allocation7], 1
    %1496 = vsyncpa %s1495, 1

</llo_original>
